<compile_context>
chip_gen: v7x
topology: tpu7x:2x2x1
jax: 0.10.0
libtpu: 0.0.40
codegen_flags: <defaults>
</compile_context>

<pallas_src>
import functools

import jax
import jax.numpy as jnp
from jax.experimental import pallas as pl
from jax.experimental.pallas import tpu as pltpu


# ---------------------------------------------------------------------------
# Fused kernel: 3x3 conv (bias-free) + GroupNorm + ReLU, one batch item per step
# ---------------------------------------------------------------------------
def _conv3x3_gn_relu_kernel(x_ref, w_ref, gsel_ref, g_ref, b_ref, o_ref, pad_ref,
                            *, num_groups, eps):
    # x_ref:    (1, H, W, Cin)   activation dtype (f32 or bf16) NHWC tile
    # w_ref:    (9*Cin, Cout)    activation dtype, row = t*Cin + ci, tap t = ky*3 + kx
    # gsel_ref: (Cout, Cout) f32 group-selection matrix (1 where channels share a group)
    # g_ref:    (1, Cout) f32    GroupNorm gamma
    # b_ref:    (1, Cout) f32    GroupNorm beta
    # o_ref:    (1, H, W, Cout)
    # pad_ref:  (H+2, W+16, Cin) activation-dtype halo scratch; x lives at rows 1..H,
    #           cols 8..W+7 so the interior store is sublane-aligned.
    _, H, W, Cin = x_ref.shape
    Cout = w_ref.shape[1]
    Cg = Cout // num_groups
    dt = pad_ref.dtype
    Wp = W + 16

    # ---- zero ONLY the halo border that the tap reads can touch (reads cover rows
    #      0..H+1 and cols 7..W+9).  No full-scratch memset; interior is overwritten.
    pad_ref[0:1, :, :] = jnp.zeros((1, Wp, Cin), dt)
    pad_ref[H + 1:H + 2, :, :] = jnp.zeros((1, Wp, Cin), dt)
    pad_ref[1:H + 1, 0:8, :] = jnp.zeros((H, 8, Cin), dt)            # covers col 7
    pad_ref[1:H + 1, W + 8:W + 16, :] = jnp.zeros((H, 8, Cin), dt)   # covers cols W+8, W+9

    # ---- interior: store x in its native dtype (no f32 cast, no im2col patch).
    pad_ref[1:H + 1, 8:W + 8, :] = x_ref[0]

    # ---- 3x3 conv as 9 accumulated matmuls straight from the halo scratch.
    #      Each tap: (H*W, Cin) @ (Cin, Cout), native-dtype operands, f32 accumulate.
    y = jnp.zeros((H * W, Cout), jnp.float32)
    for ky in range(3):
        for kx in range(3):
            t = ky * 3 + kx
            slab = pad_ref[ky:ky + H, 7 + kx:7 + kx + W, :]          # (H, W, Cin)
            y = y + jnp.dot(slab.reshape(H * W, Cin),
                            w_ref[t * Cin:(t + 1) * Cin, :],
                            preferred_element_type=jnp.float32)

    # ---- GroupNorm(G, Cout): per-channel sums -> per-group stats broadcast back to
    #      channels via one tiny constant matmul (gsel built once in the wrapper).
    n = float(H * W * Cg)
    csum = jnp.sum(y, axis=0, keepdims=True)                                  # (1, Cout)
    mean_c = jnp.dot(csum, gsel_ref[...], preferred_element_type=jnp.float32) / n
    d = y - mean_c
    csq = jnp.sum(d * d, axis=0, keepdims=True)                               # (1, Cout)
    var_c = jnp.dot(csq, gsel_ref[...], preferred_element_type=jnp.float32) / n
    inv_c = jax.lax.rsqrt(var_c + eps)                                        # (1, Cout)

    # ---- affine + ReLU, lane-dense store.
    out = jnp.maximum(d * inv_c * g_ref[...] + b_ref[...], 0.0)
    o_ref[...] = out.reshape(1, H, W, Cout).astype(o_ref.dtype)


# ---------------------------------------------------------------------------
# Small constant helpers (built once per call in the wrapper)
# ---------------------------------------------------------------------------
def _group_select_matrix(cout, num_groups):
    cg = cout // num_groups
    g = jnp.arange(cout) // cg
    return (g[:, None] == g[None, :]).astype(jnp.float32)        # (Cout, Cout)


def _interp_matrix(out_size, in_size):
    # Bilinear, align_corners=True, 1-D interpolation matrix.
    if in_size == 1:
        return jnp.ones((out_size, 1), jnp.float32)
    src = jnp.arange(out_size, dtype=jnp.float32) * (in_size - 1) / (out_size - 1)
    i0 = jnp.clip(jnp.floor(src).astype(jnp.int32), 0, in_size - 2)
    w1 = src - i0.astype(jnp.float32)
    w0 = 1.0 - w1
    rows = jnp.arange(in_size)
    u = (w0[:, None] * (rows[None, :] == i0[:, None]) +
         w1[:, None] * (rows[None, :] == (i0 + 1)[:, None]))
    return u.astype(jnp.float32)


# ---------------------------------------------------------------------------
# Public wrapper: NCHW in / NCHW out (matches the PyTorch module)
# ---------------------------------------------------------------------------
def conv3x3_gn_relu(x_nchw, w_oihw, gamma, beta, *, num_groups=32, upsample=False):
    B, Cin, H, W = x_nchw.shape
    Cout, Cin_w, KH, KW = w_oihw.shape
    assert (Cin_w, KH, KW) == (Cin, 3, 3)
    assert Cout % num_groups == 0, "GroupNorm requires Cout % num_groups == 0"
    assert W % 8 == 0, "kernel assumes W % 8 == 0 (sublane-aligned rows / cheap reshape)"
    # Cin/Cout as multiples of 128 keep every load/store lane-dense (not required).

    x = jnp.transpose(x_nchw, (0, 2, 3, 1))                                    # NHWC
    w_flat = (jnp.transpose(w_oihw, (2, 3, 1, 0))
              .reshape(9 * Cin, Cout).astype(x.dtype))                         # (ky,kx,ci) x Cout
    gsel = _group_select_matrix(Cout, num_groups)

    # Explicit VMEM budget: halo scratch + double-buffered blocks + f32 temps headroom.
    act = jnp.dtype(x.dtype).itemsize
    est = ((H + 2) * (W + 16) * Cin * act          # halo scratch
           + 2 * H * W * Cin * act                 # double-buffered x block
           + 2 * 9 * Cin * Cout * act              # double-buffered weight block
           + 2 * Cout * Cout * 4                   # gsel
           + 2 * H * W * Cout * act                # double-buffered output block
           + 4 * H * W * Cout * 4)                 # f32 accumulator / temporaries
    vmem_limit = min(max(2 * est + (8 << 20), 32 << 20), 64 << 20)

    kernel = functools.partial(_conv3x3_gn_relu_kernel,
                               num_groups=num_groups, eps=1e-5)
    y = pl.pallas_call(
        kernel,
        out_shape=jax.ShapeDtypeStruct((B, H, W, Cout), x.dtype),
        grid_spec=pltpu.PrefetchScalarGridSpec(
            num_scalar_prefetch=0,
            grid=(B,),
            in_specs=[
                pl.BlockSpec((1, H, W, Cin), lambda b: (b, 0, 0, 0)),
                pl.BlockSpec((9 * Cin, Cout), lambda b: (0, 0)),
                pl.BlockSpec((Cout, Cout), lambda b: (0, 0)),
                pl.BlockSpec((1, Cout), lambda b: (0, 0)),
                pl.BlockSpec((1, Cout), lambda b: (0, 0)),
            ],
            out_specs=pl.BlockSpec((1, H, W, Cout), lambda b: (b, 0, 0, 0)),
            scratch_shapes=[
                pltpu.VMEM((H + 2, W + 16, Cin), x.dtype),     # halo scratch (act dtype)
            ],
        ),
        compiler_params=pltpu.CompilerParams(
            dimension_semantics=("parallel",),
            vmem_limit_bytes=int(vmem_limit)),
    )(x, w_flat, gsel,
      gamma.reshape(1, Cout).astype(jnp.float32),
      beta.reshape(1, Cout).astype(jnp.float32))

    if upsample:
        # F.interpolate(scale_factor=2, mode='bilinear', align_corners=True) as two
        # separable interpolation matmuls (JAX glue).
        # TODO(synk): fold this into the kernel epilogue as two small constant matmuls
        #             on the VMEM-resident normalized output.
        uh = _interp_matrix(2 * H, H)
        uw = _interp_matrix(2 * W, W)
        y = jnp.einsum("ph,bhwc->bpwc", uh, y.astype(jnp.float32))
        y = jnp.einsum("qw,bpwc->bpqc", uw, y)
        y = y.astype(x_nchw.dtype)

    return jnp.transpose(y, (0, 3, 1, 2))                 # back to NCHW


# ---------------------------------------------------------------------------
# Plain-JAX reference (mirrors the PyTorch forward) for correctness checking
# ---------------------------------------------------------------------------
def _bilinear_upsample_ref(x_nchw, scale=2):
    B, C, H, W = x_nchw.shape
    OH, OW = H * scale, W * scale

    def coords(O, I):
        src = jnp.arange(O, dtype=jnp.float32) * (I - 1) / (O - 1)
        i0 = jnp.clip(jnp.floor(src).astype(jnp.int32), 0, I - 2)
        return i0, src - i0.astype(jnp.float32)

    hi0, hw1 = coords(OH, H)
    wi0, ww1 = coords(OW, W)
    x00 = x_nchw[:, :, hi0][:, :, :, wi0]
    x01 = x_nchw[:, :, hi0][:, :, :, wi0 + 1]
    x10 = x_nchw[:, :, hi0 + 1][:, :, :, wi0]
    x11 = x_nchw[:, :, hi0 + 1][:, :, :, wi0 + 1]
    hw1 = hw1[None, None, :, None]
    ww1 = ww1[None, None, None, :]
    top = x00 * (1.0 - ww1) + x01 * ww1
    bot = x10 * (1.0 - ww1) + x11 * ww1
    return top * (1.0 - hw1) + bot * hw1


def _ref_forward(x_nchw, w_oihw, gamma, beta, *, num_groups=32, upsample=False, eps=1e-5):
    x32 = x_nchw.astype(jnp.float32)
    w32 = w_oihw.astype(jnp.float32)
    y = jax.lax.conv_general_dilated(
        x32, w32, window_strides=(1, 1), padding="SAME",
        dimension_numbers=("NCHW", "OIHW", "NCHW"))
    B, C, H, W = y.shape
    G = num_groups
    yg = y.reshape(B, G, C // G, H, W)
    mean = jnp.mean(yg, axis=(2, 3, 4), keepdims=True)
    var = jnp.mean((yg - mean) ** 2, axis=(2, 3, 4), keepdims=True)
    yn = ((yg - mean) * jax.lax.rsqrt(var + eps)).reshape(B, C, H, W)
    y = jnp.maximum(yn * gamma[None, :, None, None] + beta[None, :, None, None], 0.0)
    if upsample:
        y = _bilinear_upsample_ref(y)
    return y


# ---------------------------------------------------------------------------
if __name__ == "__main__":
    key = jax.random.PRNGKey(0)
    # GroupNorm(32, Cout) requires Cout to be a multiple of 32; 128 keeps the output
    # lane-dense and every tap matmul MXU-shaped. Still small overall.
    B, Cin, Cout, H, W = 2, 128, 128, 16, 16
    k1, k2, k3, k4 = jax.random.split(key, 4)

    x = jax.random.normal(k1, (B, Cin, H, W), dtype=jnp.float32)
    w = 0.05 * jax.random.normal(k2, (Cout, Cin, 3, 3), dtype=jnp.float32)   # OIHW, bias=False
    gamma = 1.0 + 0.1 * jax.random.normal(k3, (Cout,), dtype=jnp.float32)
    beta = 0.1 * jax.random.normal(k4, (Cout,), dtype=jnp.float32)

    # ---- upsample=False (module default) ----
    out = jax.block_until_ready(conv3x3_gn_relu(x, w, gamma, beta, upsample=False))
    ref = jax.block_until_ready(_ref_forward(x, w, gamma, beta, upsample=False))
    assert out.shape == ref.shape == (B, Cout, H, W), out.shape
    assert jnp.allclose(out, ref, rtol=2e-3, atol=2e-3), (
        float(jnp.max(jnp.abs(out - ref))))

    # ---- upsample=True (bilinear, align_corners=True) ----
    out_u = jax.block_until_ready(conv3x3_gn_relu(x, w, gamma, beta, upsample=True))
    ref_u = jax.block_until_ready(_ref_forward(x, w, gamma, beta, upsample=True))
    assert out_u.shape == ref_u.shape == (B, Cout, 2 * H, 2 * W), out_u.shape
    assert jnp.allclose(out_u, ref_u, rtol=2e-3, atol=2e-3), (
        float(jnp.max(jnp.abs(out_u - ref_u))))

    # ---- bf16 storage path (halved HBM/VMEM bytes, f32 accumulate in-kernel) ----
    out_bf = jax.block_until_ready(
        conv3x3_gn_relu(x.astype(jnp.bfloat16), w.astype(jnp.bfloat16), gamma, beta))
    assert out_bf.dtype == jnp.bfloat16 and out_bf.shape == (B, Cout, H, W)
    assert float(jnp.max(jnp.abs(out_bf.astype(jnp.float32) - ref))) < 0.2

    print("KERNEL_OK")
</pallas_src>

<mosaic_0001>
module attributes {stable_mosaic.version = 11 : i64} {
  func.func @_conv3x3_gn_relu_kernel(%arg0: i32, %arg1: memref<1x16x16x128xf32, #tpu.memory_space<vmem>>, %arg2: memref<1152x128xf32, #tpu.memory_space<vmem>>, %arg3: memref<128x128xf32, #tpu.memory_space<vmem>>, %arg4: memref<1x128xf32, #tpu.memory_space<vmem>>, %arg5: memref<1x128xf32, #tpu.memory_space<vmem>>, %arg6: memref<1x16x16x128xf32, #tpu.memory_space<vmem>>, %arg7: memref<18x32x128xf32, #tpu.memory_space<vmem>>) attributes {dimension_semantics = [#tpu.dimension_semantics<parallel>], iteration_bounds = array<i64: 2>, scalar_prefetch = 0 : i64, scratch_operands = 1 : i64, tpu.core_type = #tpu.core_type<tc>, window_params = [{transform_indices = @transform_0, window_bounds = array<i64: 1, 16, 16, 128>}, {pipeline_mode = #tpu.pipeline_mode<synchronous>, transform_indices = @transform_1, window_bounds = array<i64: 1152, 128>}, {pipeline_mode = #tpu.pipeline_mode<synchronous>, transform_indices = @transform_2, window_bounds = array<i64: 128, 128>}, {pipeline_mode = #tpu.pipeline_mode<synchronous>, transform_indices = @transform_3, window_bounds = array<i64: 1, 128>}, {pipeline_mode = #tpu.pipeline_mode<synchronous>, transform_indices = @transform_4, window_bounds = array<i64: 1, 128>}, {transform_indices = @transform_5, window_bounds = array<i64: 1, 16, 16, 128>}]} {
    %cst = arith.constant 0.000000e+00 : f32
    %0 = vector.broadcast %cst : f32 to vector<1x32x128xf32>
    %c0 = arith.constant 0 : index
    %c0_0 = arith.constant 0 : index
    %c0_1 = arith.constant 0 : index
    %1 = vector.load %arg7[%c0, %c0_0, %c0_1] : memref<18x32x128xf32, #tpu.memory_space<vmem>>, vector<1x32x128xf32>
    tpu.vector_store %arg7[%c0, %c0_0, %c0_1], %0 {strides = array<i32>} : memref<18x32x128xf32, #tpu.memory_space<vmem>>, vector<1x32x128xf32>,
    %cst_2 = arith.constant 0.000000e+00 : f32
    %2 = vector.broadcast %cst_2 : f32 to vector<1x32x128xf32>
    %c17 = arith.constant 17 : index
    %c0_3 = arith.constant 0 : index
    %c0_4 = arith.constant 0 : index
    %3 = vector.load %arg7[%c17, %c0_3, %c0_4] : memref<18x32x128xf32, #tpu.memory_space<vmem>>, vector<1x32x128xf32>
    tpu.vector_store %arg7[%c17, %c0_3, %c0_4], %2 {strides = array<i32>} : memref<18x32x128xf32, #tpu.memory_space<vmem>>, vector<1x32x128xf32>,
    %cst_5 = arith.constant 0.000000e+00 : f32
    %4 = vector.broadcast %cst_5 : f32 to vector<16x8x128xf32>
    %c1 = arith.constant 1 : index
    %c0_6 = arith.constant 0 : index
    %c0_7 = arith.constant 0 : index
    %5 = vector.load %arg7[%c1, %c0_6, %c0_7] : memref<18x32x128xf32, #tpu.memory_space<vmem>>, vector<16x8x128xf32>
    tpu.vector_store %arg7[%c1, %c0_6, %c0_7], %4 {strides = array<i32>} : memref<18x32x128xf32, #tpu.memory_space<vmem>>, vector<16x8x128xf32>,
    %cst_8 = arith.constant 0.000000e+00 : f32
    %6 = vector.broadcast %cst_8 : f32 to vector<16x8x128xf32>
    %c1_9 = arith.constant 1 : index
    %c24 = arith.constant 24 : index
    %c0_10 = arith.constant 0 : index
    %7 = vector.load %arg7[%c1_9, %c24, %c0_10] : memref<18x32x128xf32, #tpu.memory_space<vmem>>, vector<16x8x128xf32>
    tpu.vector_store %arg7[%c1_9, %c24, %c0_10], %6 {strides = array<i32>} : memref<18x32x128xf32, #tpu.memory_space<vmem>>, vector<16x8x128xf32>,
    %c0_11 = arith.constant 0 : index
    %c0_12 = arith.constant 0 : index
    %c0_13 = arith.constant 0 : index
    %c0_14 = arith.constant 0 : index
    %8 = vector.load %arg1[%c0_11, %c0_12, %c0_13, %c0_14] : memref<1x16x16x128xf32, #tpu.memory_space<vmem>>, vector<1x16x16x128xf32>
    %9 = vector.shape_cast %8 : vector<1x16x16x128xf32> to vector<16x16x128xf32>
    %c1_15 = arith.constant 1 : index
    %c8 = arith.constant 8 : index
    %c0_16 = arith.constant 0 : index
    %10 = vector.load %arg7[%c1_15, %c8, %c0_16] : memref<18x32x128xf32, #tpu.memory_space<vmem>>, vector<16x16x128xf32>
    tpu.vector_store %arg7[%c1_15, %c8, %c0_16], %9 {strides = array<i32>} : memref<18x32x128xf32, #tpu.memory_space<vmem>>, vector<16x16x128xf32>,
    %cst_17 = arith.constant 0.000000e+00 : f32
    %11 = vector.broadcast %cst_17 : f32 to vector<256x128xf32>
    %c0_18 = arith.constant 0 : index
    %c7 = arith.constant 7 : index
    %c0_19 = arith.constant 0 : index
    %12 = vector.load %arg7[%c0_18, %c7, %c0_19] : memref<18x32x128xf32, #tpu.memory_space<vmem>>, vector<16x16x128xf32>
    %13 = vector.shape_cast %12 : vector<16x16x128xf32> to vector<256x128xf32>
    %c0_20 = arith.constant 0 : index
    %c0_21 = arith.constant 0 : index
    %14 = vector.load %arg2[%c0_20, %c0_21] : memref<1152x128xf32, #tpu.memory_space<vmem>>, vector<128x128xf32>
    %cst_22 = arith.constant dense<0.000000e+00> : vector<256x128xf32>
    %15 = tpu.matmul %13, %14, %cst_22 {dimension_numbers = #tpu.dot_dimension_numbers<[1], [0], [0], [1], [0, 0, 1, 1], [], []>} : vector<256x128xf32>, vector<128x128xf32>, vector<256x128xf32> -> vector<256x128xf32>
    %16 = arith.addf %11, %15 : vector<256x128xf32>
    %c0_23 = arith.constant 0 : index
    %c8_24 = arith.constant 8 : index
    %c0_25 = arith.constant 0 : index
    %17 = vector.load %arg7[%c0_23, %c8_24, %c0_25] : memref<18x32x128xf32, #tpu.memory_space<vmem>>, vector<16x16x128xf32>
    %18 = vector.shape_cast %17 : vector<16x16x128xf32> to vector<256x128xf32>
    %c128 = arith.constant 128 : index
    %c0_26 = arith.constant 0 : index
    %19 = vector.load %arg2[%c128, %c0_26] : memref<1152x128xf32, #tpu.memory_space<vmem>>, vector<128x128xf32>
    %cst_27 = arith.constant dense<0.000000e+00> : vector<256x128xf32>
    %20 = tpu.matmul %18, %19, %cst_27 {dimension_numbers = #tpu.dot_dimension_numbers<[1], [0], [0], [1], [0, 0, 1, 1], [], []>} : vector<256x128xf32>, vector<128x128xf32>, vector<256x128xf32> -> vector<256x128xf32>
    %21 = arith.addf %16, %20 : vector<256x128xf32>
    %c0_28 = arith.constant 0 : index
    %c9 = arith.constant 9 : index
    %c0_29 = arith.constant 0 : index
    %22 = vector.load %arg7[%c0_28, %c9, %c0_29] : memref<18x32x128xf32, #tpu.memory_space<vmem>>, vector<16x16x128xf32>
    %23 = vector.shape_cast %22 : vector<16x16x128xf32> to vector<256x128xf32>
    %c256 = arith.constant 256 : index
    %c0_30 = arith.constant 0 : index
    %24 = vector.load %arg2[%c256, %c0_30] : memref<1152x128xf32, #tpu.memory_space<vmem>>, vector<128x128xf32>
    %cst_31 = arith.constant dense<0.000000e+00> : vector<256x128xf32>
    %25 = tpu.matmul %23, %24, %cst_31 {dimension_numbers = #tpu.dot_dimension_numbers<[1], [0], [0], [1], [0, 0, 1, 1], [], []>} : vector<256x128xf32>, vector<128x128xf32>, vector<256x128xf32> -> vector<256x128xf32>
    %26 = arith.addf %21, %25 : vector<256x128xf32>
    %c1_32 = arith.constant 1 : index
    %c7_33 = arith.constant 7 : index
    %c0_34 = arith.constant 0 : index
    %27 = vector.load %arg7[%c1_32, %c7_33, %c0_34] : memref<18x32x128xf32, #tpu.memory_space<vmem>>, vector<16x16x128xf32>
    %28 = vector.shape_cast %27 : vector<16x16x128xf32> to vector<256x128xf32>
    %c384 = arith.constant 384 : index
    %c0_35 = arith.constant 0 : index
    %29 = vector.load %arg2[%c384, %c0_35] : memref<1152x128xf32, #tpu.memory_space<vmem>>, vector<128x128xf32>
    %cst_36 = arith.constant dense<0.000000e+00> : vector<256x128xf32>
    %30 = tpu.matmul %28, %29, %cst_36 {dimension_numbers = #tpu.dot_dimension_numbers<[1], [0], [0], [1], [0, 0, 1, 1], [], []>} : vector<256x128xf32>, vector<128x128xf32>, vector<256x128xf32> -> vector<256x128xf32>
    %31 = arith.addf %26, %30 : vector<256x128xf32>
    %c1_37 = arith.constant 1 : index
    %c8_38 = arith.constant 8 : index
    %c0_39 = arith.constant 0 : index
    %32 = vector.load %arg7[%c1_37, %c8_38, %c0_39] : memref<18x32x128xf32, #tpu.memory_space<vmem>>, vector<16x16x128xf32>
    %33 = vector.shape_cast %32 : vector<16x16x128xf32> to vector<256x128xf32>
    %c512 = arith.constant 512 : index
    %c0_40 = arith.constant 0 : index
    %34 = vector.load %arg2[%c512, %c0_40] : memref<1152x128xf32, #tpu.memory_space<vmem>>, vector<128x128xf32>
    %cst_41 = arith.constant dense<0.000000e+00> : vector<256x128xf32>
    %35 = tpu.matmul %33, %34, %cst_41 {dimension_numbers = #tpu.dot_dimension_numbers<[1], [0], [0], [1], [0, 0, 1, 1], [], []>} : vector<256x128xf32>, vector<128x128xf32>, vector<256x128xf32> -> vector<256x128xf32>
    %36 = arith.addf %31, %35 : vector<256x128xf32>
    %c1_42 = arith.constant 1 : index
    %c9_43 = arith.constant 9 : index
    %c0_44 = arith.constant 0 : index
    %37 = vector.load %arg7[%c1_42, %c9_43, %c0_44] : memref<18x32x128xf32, #tpu.memory_space<vmem>>, vector<16x16x128xf32>
    %38 = vector.shape_cast %37 : vector<16x16x128xf32> to vector<256x128xf32>
    %c640 = arith.constant 640 : index
    %c0_45 = arith.constant 0 : index
    %39 = vector.load %arg2[%c640, %c0_45] : memref<1152x128xf32, #tpu.memory_space<vmem>>, vector<128x128xf32>
    %cst_46 = arith.constant dense<0.000000e+00> : vector<256x128xf32>
    %40 = tpu.matmul %38, %39, %cst_46 {dimension_numbers = #tpu.dot_dimension_numbers<[1], [0], [0], [1], [0, 0, 1, 1], [], []>} : vector<256x128xf32>, vector<128x128xf32>, vector<256x128xf32> -> vector<256x128xf32>
    %41 = arith.addf %36, %40 : vector<256x128xf32>
    %c2 = arith.constant 2 : index
    %c7_47 = arith.constant 7 : index
    %c0_48 = arith.constant 0 : index
    %42 = vector.load %arg7[%c2, %c7_47, %c0_48] : memref<18x32x128xf32, #tpu.memory_space<vmem>>, vector<16x16x128xf32>
    %43 = vector.shape_cast %42 : vector<16x16x128xf32> to vector<256x128xf32>
    %c768 = arith.constant 768 : index
    %c0_49 = arith.constant 0 : index
    %44 = vector.load %arg2[%c768, %c0_49] : memref<1152x128xf32, #tpu.memory_space<vmem>>, vector<128x128xf32>
    %cst_50 = arith.constant dense<0.000000e+00> : vector<256x128xf32>
    %45 = tpu.matmul %43, %44, %cst_50 {dimension_numbers = #tpu.dot_dimension_numbers<[1], [0], [0], [1], [0, 0, 1, 1], [], []>} : vector<256x128xf32>, vector<128x128xf32>, vector<256x128xf32> -> vector<256x128xf32>
    %46 = arith.addf %41, %45 : vector<256x128xf32>
    %c2_51 = arith.constant 2 : index
    %c8_52 = arith.constant 8 : index
    %c0_53 = arith.constant 0 : index
    %47 = vector.load %arg7[%c2_51, %c8_52, %c0_53] : memref<18x32x128xf32, #tpu.memory_space<vmem>>, vector<16x16x128xf32>
    %48 = vector.shape_cast %47 : vector<16x16x128xf32> to vector<256x128xf32>
    %c896 = arith.constant 896 : index
    %c0_54 = arith.constant 0 : index
    %49 = vector.load %arg2[%c896, %c0_54] : memref<1152x128xf32, #tpu.memory_space<vmem>>, vector<128x128xf32>
    %cst_55 = arith.constant dense<0.000000e+00> : vector<256x128xf32>
    %50 = tpu.matmul %48, %49, %cst_55 {dimension_numbers = #tpu.dot_dimension_numbers<[1], [0], [0], [1], [0, 0, 1, 1], [], []>} : vector<256x128xf32>, vector<128x128xf32>, vector<256x128xf32> -> vector<256x128xf32>
    %51 = arith.addf %46, %50 : vector<256x128xf32>
    %c2_56 = arith.constant 2 : index
    %c9_57 = arith.constant 9 : index
    %c0_58 = arith.constant 0 : index
    %52 = vector.load %arg7[%c2_56, %c9_57, %c0_58] : memref<18x32x128xf32, #tpu.memory_space<vmem>>, vector<16x16x128xf32>
    %53 = vector.shape_cast %52 : vector<16x16x128xf32> to vector<256x128xf32>
    %c1024 = arith.constant 1024 : index
    %c0_59 = arith.constant 0 : index
    %54 = vector.load %arg2[%c1024, %c0_59] : memref<1152x128xf32, #tpu.memory_space<vmem>>, vector<128x128xf32>
    %cst_60 = arith.constant dense<0.000000e+00> : vector<256x128xf32>
    %55 = tpu.matmul %53, %54, %cst_60 {dimension_numbers = #tpu.dot_dimension_numbers<[1], [0], [0], [1], [0, 0, 1, 1], [], []>} : vector<256x128xf32>, vector<128x128xf32>, vector<256x128xf32> -> vector<256x128xf32>
    %56 = arith.addf %51, %55 : vector<256x128xf32>
    %cst_61 = arith.constant dense<0.000000e+00> : vector<128xf32>
    %57 = vector.multi_reduction <add>, %56, %cst_61 [0] : vector<256x128xf32> to vector<128xf32>
    %58 = vector.shape_cast %57 : vector<128xf32> to vector<1x128xf32>
    %c0_62 = arith.constant 0 : index
    %c0_63 = arith.constant 0 : index
    %59 = vector.load %arg3[%c0_62, %c0_63] : memref<128x128xf32, #tpu.memory_space<vmem>>, vector<128x128xf32>
    %cst_64 = arith.constant dense<0.000000e+00> : vector<1x128xf32>
    %60 = tpu.matmul %58, %59, %cst_64 {dimension_numbers = #tpu.dot_dimension_numbers<[1], [0], [0], [1], [0, 0, 1, 1], [], []>} : vector<1x128xf32>, vector<128x128xf32>, vector<1x128xf32> -> vector<1x128xf32>
    %cst_65 = arith.constant 1.024000e+03 : f32
    %61 = vector.broadcast %cst_65 : f32 to vector<1x128xf32>
    %62 = arith.divf %60, %61 : vector<1x128xf32>
    %63 = vector.broadcast %62 : vector<1x128xf32> to vector<256x128xf32>
    %64 = arith.subf %56, %63 : vector<256x128xf32>
    %65 = arith.mulf %64, %64 : vector<256x128xf32>
    %cst_66 = arith.constant dense<0.000000e+00> : vector<128xf32>
    %66 = vector.multi_reduction <add>, %65, %cst_66 [0] : vector<256x128xf32> to vector<128xf32>
    %67 = vector.shape_cast %66 : vector<128xf32> to vector<1x128xf32>
    %c0_67 = arith.constant 0 : index
    %c0_68 = arith.constant 0 : index
    %68 = vector.load %arg3[%c0_67, %c0_68] : memref<128x128xf32, #tpu.memory_space<vmem>>, vector<128x128xf32>
    %cst_69 = arith.constant dense<0.000000e+00> : vector<1x128xf32>
    %69 = tpu.matmul %67, %68, %cst_69 {dimension_numbers = #tpu.dot_dimension_numbers<[1], [0], [0], [1], [0, 0, 1, 1], [], []>} : vector<1x128xf32>, vector<128x128xf32>, vector<1x128xf32> -> vector<1x128xf32>
    %cst_70 = arith.constant 1.024000e+03 : f32
    %70 = vector.broadcast %cst_70 : f32 to vector<1x128xf32>
    %71 = arith.divf %69, %70 : vector<1x128xf32>
    %cst_71 = arith.constant 9.99999974E-6 : f32
    %72 = vector.broadcast %cst_71 : f32 to vector<1x128xf32>
    %73 = arith.addf %71, %72 : vector<1x128xf32>
    %74 = math.rsqrt %73 : vector<1x128xf32>
    %75 = vector.broadcast %74 : vector<1x128xf32> to vector<256x128xf32>
    %76 = arith.mulf %64, %75 : vector<256x128xf32>
    %c0_72 = arith.constant 0 : index
    %c0_73 = arith.constant 0 : index
    %77 = vector.load %arg4[%c0_72, %c0_73] : memref<1x128xf32, #tpu.memory_space<vmem>>, vector<1x128xf32>
    %78 = vector.broadcast %77 : vector<1x128xf32> to vector<256x128xf32>
    %79 = arith.mulf %76, %78 : vector<256x128xf32>
    %c0_74 = arith.constant 0 : index
    %c0_75 = arith.constant 0 : index
    %80 = vector.load %arg5[%c0_74, %c0_75] : memref<1x128xf32, #tpu.memory_space<vmem>>, vector<1x128xf32>
    %81 = vector.broadcast %80 : vector<1x128xf32> to vector<256x128xf32>
    %82 = arith.addf %79, %81 : vector<256x128xf32>
    %cst_76 = arith.constant 0.000000e+00 : f32
    %83 = vector.broadcast %cst_76 : f32 to vector<256x128xf32>
    %84 = arith.maximumf %82, %83 : vector<256x128xf32>
    %85 = vector.shape_cast %84 : vector<256x128xf32> to vector<1x16x16x128xf32>
    %c0_77 = arith.constant 0 : index
    %c0_78 = arith.constant 0 : index
    %c0_79 = arith.constant 0 : index
    %c0_80 = arith.constant 0 : index
    %86 = vector.load %arg6[%c0_77, %c0_78, %c0_79, %c0_80] : memref<1x16x16x128xf32, #tpu.memory_space<vmem>>, vector<1x16x16x128xf32>
    tpu.vector_store %arg6[%c0_77, %c0_78, %c0_79, %c0_80], %85 {strides = array<i32>} : memref<1x16x16x128xf32, #tpu.memory_space<vmem>>, vector<1x16x16x128xf32>,
    return
  }
  func.func @transform_0(%arg0: i32) -> (i32, i32, i32, i32) {
    %c0_i32 = arith.constant 0 : i32
    %c0_i32_0 = arith.constant 0 : i32
    %c0_i32_1 = arith.constant 0 : i32
    %c0_i32_2 = arith.constant 0 : i32
    return %arg0, %c0_i32, %c0_i32_0, %c0_i32_1 : i32, i32, i32, i32
  }
  func.func @transform_1(%arg0: i32) -> (i32, i32) {
    %c0_i32 = arith.constant 0 : i32
    %c0_i32_0 = arith.constant 0 : i32
    %c0_i32_1 = arith.constant 0 : i32
    return %c0_i32, %c0_i32_0 : i32, i32
  }
  func.func @transform_2(%arg0: i32) -> (i32, i32) {
    %c0_i32 = arith.constant 0 : i32
    %c0_i32_0 = arith.constant 0 : i32
    %c0_i32_1 = arith.constant 0 : i32
    return %c0_i32, %c0_i32_0 : i32, i32
  }
  func.func @transform_3(%arg0: i32) -> (i32, i32) {
    %c0_i32 = arith.constant 0 : i32
    %c0_i32_0 = arith.constant 0 : i32
    %c0_i32_1 = arith.constant 0 : i32
    return %c0_i32, %c0_i32_0 : i32, i32
  }
  func.func @transform_4(%arg0: i32) -> (i32, i32) {
    %c0_i32 = arith.constant 0 : i32
    %c0_i32_0 = arith.constant 0 : i32
    %c0_i32_1 = arith.constant 0 : i32
    return %c0_i32, %c0_i32_0 : i32, i32
  }
  func.func @transform_5(%arg0: i32) -> (i32, i32, i32, i32) {
    %c0_i32 = arith.constant 0 : i32
    %c0_i32_0 = arith.constant 0 : i32
    %c0_i32_1 = arith.constant 0 : i32
    %c0_i32_2 = arith.constant 0 : i32
    return %arg0, %c0_i32, %c0_i32_0, %c0_i32_1 : i32, i32, i32, i32
  }
}

</mosaic_0001>

<llo_original>
// kernel: tpu_custom_call.1
$region0: #{tpu_custom_call.1}
  #allocation0 [shape = 'u32[]', space=smem, size = 0x4, offset = 0x4, fixed_abs, tag = 'smem constant byte address 0x4 - core index']
  #allocation1 [shape = 'u32[144,128]{1,0:T(1,128)}', space=vmem, size = 0x12000, scoped, tag = 'internal scratch']
  #allocation2 [shape = 'f32[18,32,128]{2,1,0:T(8,128)}', space=vmem, size = 0x48000, scoped, tag = 'scratch operand']
  %s0 = inlined_call_operand.hbm [shape: f32[2,16,16,128], index: 0, kind: input, shape index: {}]
  %s1 = inlined_call_operand.hbm [shape: f32[1152,128], index: 1, kind: input, shape index: {}]
  %s2 = inlined_call_operand.hbm [shape: f32[128,128], index: 2, kind: input, shape index: {}]
  %s3 = inlined_call_operand.vmem [shape: f32[1,128], index: 3, kind: input, shape index: {}]
  %s4 = inlined_call_operand.vmem [shape: f32[1,128], index: 4, kind: input, shape index: {}]
  %s5 = inlined_call_operand.hbm [shape: f32[2,16,16,128], index: 5, kind: output, shape index: {}]
  %s6 = sld [smem:[#allocation0]]
  $region65: #{tpu_custom_call.1} parent=0
    _
  %s8 = ssub.s32 1, %s6
  %s9 = scalar_select 0, %s8, %s6
  $region1: #{tpu_custom_call.1} parent=0
    #allocation3 [shape = 'u8[262144]{0}', space=vmem, size = 0x40000, scoped, tag = 'input window, operand 0']
    #allocation4 [shape = 's32[2]{0}', space=sflag, size = 0x8, scoped, tag = 'scoped memory for tpu_custom_call.1']
    #allocation5 [shape = 's32[2]{0}', space=sflag, size = 0x8, scoped, tag = 'scoped memory for tpu_custom_call.1']
    #allocation6 [shape = 'u8[589824]{0}', space=vmem, size = 0x90000, scoped, tag = 'input window, operand 1, single buffered']
    #allocation7 [shape = 's32[1]{0}', space=sflag, size = 0x4, scoped, tag = 'scoped memory for tpu_custom_call.1']
    #allocation8 [shape = 'u8[65536]{0}', space=vmem, size = 0x10000, scoped, tag = 'input window, operand 2, single buffered']
    #allocation9 [shape = 'u8[262144]{0}', space=vmem, size = 0x40000, scoped, tag = 'output window, operand 0']
    %10 = vsyncpa [#allocation4], 0
    %s11 = scalar_lea.sflag [#allocation4], 1
    %12 = vsyncpa %s11, 0
    %13 = vsyncpa [#allocation7], 0
    %14 = vsyncpa [#allocation5], 0
    %s15 = scalar_lea.sflag [#allocation5], 1
    %16 = vsyncpa %s15, 0
    loop: start=0, step=1, limit=4
    $region2: #{tpu_custom_call.1} parent=1 // loop_pre_header
      _
    $region3: #{tpu_custom_call.1} parent=1 // loop_header
      %s18 = sphi 0, %s22
      %p19 = scmp.ge.s32.totalorder %s18, 4
      %s28 = sphi 0, %s30
      %s31 = sphi 0, %s28
      %s32 = sphi 0, %s31
      %s48 = sphi 0, %s32
      %s52 = sphi 0, %s52
      %s54 = sphi 0, %s52
      %s55 = sphi 0, %s54
      %s69 = sphi 0, %s55
      %s73 = sphi 0, %s73
      %s75 = sphi 0, %s73
      %s76 = sphi 0, %s75
      %s90 = sphi 0, %s76
      %s94 = sphi 0, %s94
      %s96 = sphi 0, %s94
      %s97 = sphi 0, %s96
      %s111 = sphi 0, %s97
      %s115 = sphi 0, %s115
      %s117 = sphi 0, %s115
      %s118 = sphi 0, %s117
      %s132 = sphi 0, %s118
      %s138 = sphi 0, %s140
      %s141 = sphi 0, %s138
      %s142 = sphi 0, %s141
      %s158 = sphi 0, %s142
    $region4: #{tpu_custom_call.1} parent=1 // loop_header_branch
      %21 = sbr.rel (%p19) target = $region8
    $region5: #{tpu_custom_call.1} parent=1 // loop_body
      %s23 = ssub.s32 %s18, 1
      %s24 = ssub.s32 %s18, 2
      %s25 = sadd.s32 %s18, 1
      %s26 = ssub.s32 %s18, %s25
      %p27 = scmp.eq.s32.totalorder %s26, 0
      %s29 = sadd.s32 %s28, 1
      %s30 = scalar_select %p27, %s28, %s29
      %p33 = pneg %p27
      %p34 = scmp.eq.s32.totalorder %s18, 1
      %p35 = por %p33, %p34
      %p36 = scmp.ne.s32.totalorder %s28, %s31
      %p37 = scmp.eq.s32.totalorder %s18, 0
      %p38 = por %p36, %p37
      %p39 = scmp.ne.s32.totalorder %s28, %s31
      %p40 = scmp.eq.s32.totalorder %s23, 1
      %p41 = por %p39, %p40
      %p42 = scmp.ne.s32.totalorder %s31, %s32
      %p43 = scmp.eq.s32.totalorder %s23, 0
      %p44 = por %p42, %p43
      %p45 = scmp.ne.s32.totalorder %s31, %s32
      %p46 = scmp.eq.s32.totalorder %s24, 1
      %p47 = por %p45, %p46
      %p49 = scmp.ne.s32.totalorder %s32, %s48
      %p50 = scmp.eq.s32.totalorder %s24, 0
      %p51 = por %p49, %p50
      %s53 = sadd.s32 %s52, 1
      %p56 = scmp.eq.s32.totalorder %s18, 1
      %p57 = scmp.ne.s32.totalorder %s52, %s54
      %p58 = scmp.eq.s32.totalorder %s18, 0
      %p59 = por %p57, %p58
      %p60 = scmp.ne.s32.totalorder %s52, %s54
      %p61 = scmp.eq.s32.totalorder %s23, 1
      %p62 = por %p60, %p61
      %p63 = scmp.ne.s32.totalorder %s54, %s55
      %p64 = scmp.eq.s32.totalorder %s23, 0
      %p65 = por %p63, %p64
      %p66 = scmp.ne.s32.totalorder %s54, %s55
      %p67 = scmp.eq.s32.totalorder %s24, 1
      %p68 = por %p66, %p67
      %p70 = scmp.ne.s32.totalorder %s55, %s69
      %p71 = scmp.eq.s32.totalorder %s24, 0
      %p72 = por %p70, %p71
      %s74 = sadd.s32 %s73, 1
      %p77 = scmp.eq.s32.totalorder %s18, 1
      %p78 = scmp.ne.s32.totalorder %s73, %s75
      %p79 = scmp.eq.s32.totalorder %s18, 0
      %p80 = por %p78, %p79
      %p81 = scmp.ne.s32.totalorder %s73, %s75
      %p82 = scmp.eq.s32.totalorder %s23, 1
      %p83 = por %p81, %p82
      %p84 = scmp.ne.s32.totalorder %s75, %s76
      %p85 = scmp.eq.s32.totalorder %s23, 0
      %p86 = por %p84, %p85
      %p87 = scmp.ne.s32.totalorder %s75, %s76
      %p88 = scmp.eq.s32.totalorder %s24, 1
      %p89 = por %p87, %p88
      %p91 = scmp.ne.s32.totalorder %s76, %s90
      %p92 = scmp.eq.s32.totalorder %s24, 0
      %p93 = por %p91, %p92
      %s95 = sadd.s32 %s94, 1
      %p98 = scmp.eq.s32.totalorder %s18, 1
      %p99 = scmp.ne.s32.totalorder %s94, %s96
      %p100 = scmp.eq.s32.totalorder %s18, 0
      %p101 = por %p99, %p100
      %p102 = scmp.ne.s32.totalorder %s94, %s96
      %p103 = scmp.eq.s32.totalorder %s23, 1
      %p104 = por %p102, %p103
      %p105 = scmp.ne.s32.totalorder %s96, %s97
      %p106 = scmp.eq.s32.totalorder %s23, 0
      %p107 = por %p105, %p106
      %p108 = scmp.ne.s32.totalorder %s96, %s97
      %p109 = scmp.eq.s32.totalorder %s24, 1
      %p110 = por %p108, %p109
      %p112 = scmp.ne.s32.totalorder %s97, %s111
      %p113 = scmp.eq.s32.totalorder %s24, 0
      %p114 = por %p112, %p113
      %s116 = sadd.s32 %s115, 1
      %p119 = scmp.eq.s32.totalorder %s18, 1
      %p120 = scmp.ne.s32.totalorder %s115, %s117
      %p121 = scmp.eq.s32.totalorder %s18, 0
      %p122 = por %p120, %p121
      %p123 = scmp.ne.s32.totalorder %s115, %s117
      %p124 = scmp.eq.s32.totalorder %s23, 1
      %p125 = por %p123, %p124
      %p126 = scmp.ne.s32.totalorder %s117, %s118
      %p127 = scmp.eq.s32.totalorder %s23, 0
      %p128 = por %p126, %p127
      %p129 = scmp.ne.s32.totalorder %s117, %s118
      %p130 = scmp.eq.s32.totalorder %s24, 1
      %p131 = por %p129, %p130
      %p133 = scmp.ne.s32.totalorder %s118, %s132
      %p134 = scmp.eq.s32.totalorder %s24, 0
      %p135 = por %p133, %p134
      %s136 = ssub.s32 %s18, %s25
      %p137 = scmp.eq.s32.totalorder %s136, 0
      %s139 = sadd.s32 %s138, 1
      %s140 = scalar_select %p137, %s138, %s139
      %p143 = pneg %p137
      %p144 = scmp.eq.s32.totalorder %s18, 1
      %p145 = por %p143, %p144
      %p146 = scmp.ne.s32.totalorder %s138, %s141
      %p147 = scmp.eq.s32.totalorder %s18, 0
      %p148 = por %p146, %p147
      %p149 = scmp.ne.s32.totalorder %s138, %s141
      %p150 = scmp.eq.s32.totalorder %s23, 1
      %p151 = por %p149, %p150
      %p152 = scmp.ne.s32.totalorder %s141, %s142
      %p153 = scmp.eq.s32.totalorder %s23, 0
      %p154 = por %p152, %p153
      %p155 = scmp.ne.s32.totalorder %s141, %s142
      %p156 = scmp.eq.s32.totalorder %s24, 1
      %p157 = por %p155, %p156
      %p159 = scmp.ne.s32.totalorder %s142, %s158
      %p160 = scmp.eq.s32.totalorder %s24, 0
      %p161 = por %p159, %p160
      %p162 = scmp.le.s32.totalorder 1, %s18
      %p163 = scmp.lt.s32.totalorder %s18, 3
      %p164 = pnand %p162, %p163
      %p165 = pneg %p164
      // Predicated region
      $region9: #{tpu_custom_call.1} parent=5 // pred_check
        _
      $region10: #{tpu_custom_call.1} parent=5 // pred_check_branch
        %167 = sbr.rel (%p164) target = $region12
      $region11: #{tpu_custom_call.1} parent=5 // pred_region
        %s168 = ssub.s32 %s18, 1
        // Predicated region
        $region13: #{tpu_custom_call.1} parent=11 // pred_check
          %p169 = pneg %p65
        $region14: #{tpu_custom_call.1} parent=11 // pred_check_branch
          %171 = sbr.rel (%p169) target = $region16
        $region15: #{tpu_custom_call.1} parent=11 // pred_region
          %s173 = ssub.s32 18432, 18432
          %174 = vsyncadd [#allocation7], %s173
          %s175 = sshll.u32 [#allocation6], 4
          %s176 = int_to_ptr.vmem [resolvable:$true] %s175
          %181 = dma.hbm_to_vmem [thread:$0]  %s1, 18432, %s176, [#allocation7], 128, 128, 8
        $region16: #{tpu_custom_call.1} parent=11 // pred_fallthru
          _
        // Predicated region
        $region17: #{tpu_custom_call.1} parent=11 // pred_check
          %p182 = pneg %p86
        $region18: #{tpu_custom_call.1} parent=11 // pred_check_branch
          %184 = sbr.rel (%p182) target = $region20
        $region19: #{tpu_custom_call.1} parent=11 // pred_region
          %s186 = ssub.s32 2048, 2048
          %187 = vsyncadd [#allocation7], %s186
          %s188 = sshll.u32 [#allocation8], 4
          %s189 = int_to_ptr.vmem [resolvable:$true] %s188
          %194 = dma.hbm_to_vmem [thread:$0]  %s2, 2048, %s189, [#allocation7], 128, 128, 8
        $region20: #{tpu_custom_call.1} parent=11 // pred_fallthru
          _
        // Predicated region
        $region21: #{tpu_custom_call.1} parent=11 // pred_check
          %p195 = pneg %p107
        $region22: #{tpu_custom_call.1} parent=11 // pred_check_branch
          %197 = sbr.rel (%p195) target = $region24
        $region23: #{tpu_custom_call.1} parent=11 // pred_region
          _
        $region24: #{tpu_custom_call.1} parent=11 // pred_fallthru
          _
        // Predicated region
        $region25: #{tpu_custom_call.1} parent=11 // pred_check
          %p198 = pneg %p128
        $region26: #{tpu_custom_call.1} parent=11 // pred_check_branch
          %200 = sbr.rel (%p198) target = $region28
        $region27: #{tpu_custom_call.1} parent=11 // pred_region
          _
        $region28: #{tpu_custom_call.1} parent=11 // pred_fallthru
          _
      $region12: #{tpu_custom_call.1} parent=5 // pred_fallthru
        _
      %p201 = scmp.lt.s32.totalorder %s18, 2
      // Predicated region
      $region29: #{tpu_custom_call.1} parent=5 // pred_check
        %p202 = pneg %p201
      $region30: #{tpu_custom_call.1} parent=5 // pred_check_branch
        %204 = sbr.rel (%p202) target = $region32
      $region31: #{tpu_custom_call.1} parent=5 // pred_region
        // Predicated region
        $region33: #{tpu_custom_call.1} parent=31 // pred_check
          %p205 = pneg %p38
        $region34: #{tpu_custom_call.1} parent=31 // pred_check_branch
          %207 = sbr.rel (%p205) target = $region36
        $region35: #{tpu_custom_call.1} parent=31 // pred_region
          %s208 = sand.u32 %s28, 1
          %s209 = scalar_lea.sflag [#allocation4], %s208
          %s210 = sand.u32 %s28, 1
          %s211 = smul.addr %s210, 256
          %s212 = scalar_lea.vmem [#allocation3], %s211
          %s214 = ssub.s32 4096, 4096
          %215 = vsyncadd %s209, %s214
          %s216 = smul.addr %s18, 32
          %s217 = smul.addr %s216, 128
          %s218 = scalar_lea.hbm %s0, %s217
          %s219 = sshll.u32 %s212, 4
          %s220 = int_to_ptr.vmem [resolvable:$true] %s219
          %225 = dma.hbm_to_vmem [thread:$0]  %s218, 4096, %s220, %s209, 128, 128, 8
        $region36: #{tpu_custom_call.1} parent=31 // pred_fallthru
          _
      $region32: #{tpu_custom_call.1} parent=5 // pred_fallthru
        _
      %p226 = scmp.le.s32.totalorder 1, %s18
      %p227 = scmp.lt.s32.totalorder %s18, 3
      %p228 = pnand %p226, %p227
      %p229 = pneg %p228
      // Predicated region
      $region37: #{tpu_custom_call.1} parent=5 // pred_check
        _
      $region38: #{tpu_custom_call.1} parent=5 // pred_check_branch
        %231 = sbr.rel (%p228) target = $region40
      $region39: #{tpu_custom_call.1} parent=5 // pred_region
        %s232 = ssub.s32 %s18, 1
        %s233 = sand.u32 %s31, 1
        %s234 = scalar_lea.sflag [#allocation4], %s233
        %s235 = sand.u32 %s31, 1
        %s236 = smul.addr %s235, 256
        %s237 = scalar_lea.vmem [#allocation3], %s236
        // Predicated region
        $region41: #{tpu_custom_call.1} parent=39 // pred_check
          %p238 = pneg %p44
        $region42: #{tpu_custom_call.1} parent=39 // pred_check_branch
          %240 = sbr.rel (%p238) target = $region44
        $region43: #{tpu_custom_call.1} parent=39 // pred_region
          %241 = dma.done %s234, 4096
        $region44: #{tpu_custom_call.1} parent=39 // pred_fallthru
          _
        // Predicated region
        $region45: #{tpu_custom_call.1} parent=39 // pred_check
          %p242 = pneg %p65
        $region46: #{tpu_custom_call.1} parent=39 // pred_check_branch
          %244 = sbr.rel (%p242) target = $region48
        $region47: #{tpu_custom_call.1} parent=39 // pred_region
          %245 = dma.done [#allocation7], 18432
        $region48: #{tpu_custom_call.1} parent=39 // pred_fallthru
          _
        // Predicated region
        $region49: #{tpu_custom_call.1} parent=39 // pred_check
          %p246 = pneg %p86
        $region50: #{tpu_custom_call.1} parent=39 // pred_check_branch
          %248 = sbr.rel (%p246) target = $region52
        $region51: #{tpu_custom_call.1} parent=39 // pred_region
          %249 = dma.done [#allocation7], 2048
        $region52: #{tpu_custom_call.1} parent=39 // pred_fallthru
          _
        %s250 = sand.u32 %s31, 1
        %s251 = scalar_lea.sflag [#allocation4], %s250
        %s252 = sand.u32 %s31, 1
        %s253 = smul.addr %s252, 256
        %s254 = scalar_lea.vmem [#allocation3], %s253
        %p255 = pneg %p44
        %p256 = pneg %p41
        %p257 = pneg %p65
        %p258 = pneg %p62
        %p259 = pneg %p86
        %p260 = pneg %p83
        %p261 = pneg %p107
        %p262 = pneg %p104
        %p263 = pneg %p128
        %p264 = pneg %p125
        %p265 = pneg %p154
        %p266 = pneg %p151
        %s267 = sand.u32 %s141, 1
        %s268 = scalar_lea.sflag [#allocation5], %s267
        %s269 = sand.u32 %s141, 1
        %s270 = smul.addr %s269, 256
        %s271 = scalar_lea.vmem [#allocation9], %s270
        %272 = vst [vmem:[#allocation2] sm:$0xff] 0.0
        %273 = vst [vmem:[#allocation2 + $0x8] sm:$0xff] 0.0
        %274 = vst [vmem:[#allocation2 + $0x10] sm:$0xff] 0.0
        %275 = vst [vmem:[#allocation2 + $0x18] sm:$0xff] 0.0
        %s276 = scalar_lea.vmem [#allocation2], 544
        %277 = vst [vmem:[%s276] sm:$0xff] 0.0
        %278 = vst [vmem:[%s276 + $0x8] sm:$0xff] 0.0
        %279 = vst [vmem:[%s276 + $0x10] sm:$0xff] 0.0
        %280 = vst [vmem:[%s276 + $0x18] sm:$0xff] 0.0
        %s281 = scalar_lea.vmem [#allocation2], 32
        %282 = vst [vmem:[%s281] sm:$0xff] 0.0
        %283 = vst [vmem:[%s281 + $0x20] sm:$0xff] 0.0
        %284 = vst [vmem:[%s281 + $0x40] sm:$0xff] 0.0
        %285 = vst [vmem:[%s281 + $0x60] sm:$0xff] 0.0
        %286 = vst [vmem:[%s281 + $0x80] sm:$0xff] 0.0
        %287 = vst [vmem:[%s281 + $0xa0] sm:$0xff] 0.0
        %288 = vst [vmem:[%s281 + $0xc0] sm:$0xff] 0.0
        %289 = vst [vmem:[%s281 + $0xe0] sm:$0xff] 0.0
        %290 = vst [vmem:[%s281 + $0x100] sm:$0xff] 0.0
        %291 = vst [vmem:[%s281 + $0x120] sm:$0xff] 0.0
        %292 = vst [vmem:[%s281 + $0x140] sm:$0xff] 0.0
        %293 = vst [vmem:[%s281 + $0x160] sm:$0xff] 0.0
        %294 = vst [vmem:[%s281 + $0x180] sm:$0xff] 0.0
        %295 = vst [vmem:[%s281 + $0x1a0] sm:$0xff] 0.0
        %296 = vst [vmem:[%s281 + $0x1c0] sm:$0xff] 0.0
        %297 = vst [vmem:[%s281 + $0x1e0] sm:$0xff] 0.0
        %298 = vst [vmem:[%s281 + $0x18] sm:$0xff] 0.0
        %299 = vst [vmem:[%s281 + $0x38] sm:$0xff] 0.0
        %300 = vst [vmem:[%s281 + $0x58] sm:$0xff] 0.0
        %301 = vst [vmem:[%s281 + $0x78] sm:$0xff] 0.0
        %302 = vst [vmem:[%s281 + $0x98] sm:$0xff] 0.0
        %303 = vst [vmem:[%s281 + $0xb8] sm:$0xff] 0.0
        %304 = vst [vmem:[%s281 + $0xd8] sm:$0xff] 0.0
        %305 = vst [vmem:[%s281 + $0xf8] sm:$0xff] 0.0
        %306 = vst [vmem:[%s281 + $0x118] sm:$0xff] 0.0
        %307 = vst [vmem:[%s281 + $0x138] sm:$0xff] 0.0
        %308 = vst [vmem:[%s281 + $0x158] sm:$0xff] 0.0
        %309 = vst [vmem:[%s281 + $0x178] sm:$0xff] 0.0
        %310 = vst [vmem:[%s281 + $0x198] sm:$0xff] 0.0
        %311 = vst [vmem:[%s281 + $0x1b8] sm:$0xff] 0.0
        %312 = vst [vmem:[%s281 + $0x1d8] sm:$0xff] 0.0
        %313 = vst [vmem:[%s281 + $0x1f8] sm:$0xff] 0.0
        %v314 = vld [vmem:[%s237] sm:$0xff]
        %v315 = vld [vmem:[%s237 + $0x8] sm:$0xff]
        %v316 = vld [vmem:[%s237 + $0x10] sm:$0xff]
        %v317 = vld [vmem:[%s237 + $0x18] sm:$0xff]
        %v318 = vld [vmem:[%s237 + $0x20] sm:$0xff]
        %v319 = vld [vmem:[%s237 + $0x28] sm:$0xff]
        %v320 = vld [vmem:[%s237 + $0x30] sm:$0xff]
        %v321 = vld [vmem:[%s237 + $0x38] sm:$0xff]
        %v322 = vld [vmem:[%s237 + $0x40] sm:$0xff]
        %v323 = vld [vmem:[%s237 + $0x48] sm:$0xff]
        %v324 = vld [vmem:[%s237 + $0x50] sm:$0xff]
        %v325 = vld [vmem:[%s237 + $0x58] sm:$0xff]
        %v326 = vld [vmem:[%s237 + $0x60] sm:$0xff]
        %v327 = vld [vmem:[%s237 + $0x68] sm:$0xff]
        %v328 = vld [vmem:[%s237 + $0x70] sm:$0xff]
        %v329 = vld [vmem:[%s237 + $0x78] sm:$0xff]
        %v330 = vld [vmem:[%s237 + $0x80] sm:$0xff]
        %v331 = vld [vmem:[%s237 + $0x88] sm:$0xff]
        %v332 = vld [vmem:[%s237 + $0x90] sm:$0xff]
        %v333 = vld [vmem:[%s237 + $0x98] sm:$0xff]
        %v334 = vld [vmem:[%s237 + $0xa0] sm:$0xff]
        %v335 = vld [vmem:[%s237 + $0xa8] sm:$0xff]
        %v336 = vld [vmem:[%s237 + $0xb0] sm:$0xff]
        %v337 = vld [vmem:[%s237 + $0xb8] sm:$0xff]
        %v338 = vld [vmem:[%s237 + $0xc0] sm:$0xff]
        %v339 = vld [vmem:[%s237 + $0xc8] sm:$0xff]
        %v340 = vld [vmem:[%s237 + $0xd0] sm:$0xff]
        %v341 = vld [vmem:[%s237 + $0xd8] sm:$0xff]
        %v342 = vld [vmem:[%s237 + $0xe0] sm:$0xff]
        %v343 = vld [vmem:[%s237 + $0xe8] sm:$0xff]
        %v344 = vld [vmem:[%s237 + $0xf0] sm:$0xff]
        %v345 = vld [vmem:[%s237 + $0xf8] sm:$0xff]
        %346 = vst [vmem:[%s281 + $0x8] sm:$0xff] %v314
        %347 = vst [vmem:[%s281 + $0x10] sm:$0xff] %v315
        %348 = vst [vmem:[%s281 + $0x28] sm:$0xff] %v316
        %349 = vst [vmem:[%s281 + $0x30] sm:$0xff] %v317
        %350 = vst [vmem:[%s281 + $0x48] sm:$0xff] %v318
        %351 = vst [vmem:[%s281 + $0x50] sm:$0xff] %v319
        %352 = vst [vmem:[%s281 + $0x68] sm:$0xff] %v320
        %353 = vst [vmem:[%s281 + $0x70] sm:$0xff] %v321
        %354 = vst [vmem:[%s281 + $0x88] sm:$0xff] %v322
        %355 = vst [vmem:[%s281 + $0x90] sm:$0xff] %v323
        %356 = vst [vmem:[%s281 + $0xa8] sm:$0xff] %v324
        %357 = vst [vmem:[%s281 + $0xb0] sm:$0xff] %v325
        %358 = vst [vmem:[%s281 + $0xc8] sm:$0xff] %v326
        %359 = vst [vmem:[%s281 + $0xd0] sm:$0xff] %v327
        %360 = vst [vmem:[%s281 + $0xe8] sm:$0xff] %v328
        %361 = vst [vmem:[%s281 + $0xf0] sm:$0xff] %v329
        %362 = vst [vmem:[%s281 + $0x108] sm:$0xff] %v330
        %363 = vst [vmem:[%s281 + $0x110] sm:$0xff] %v331
        %364 = vst [vmem:[%s281 + $0x128] sm:$0xff] %v332
        %365 = vst [vmem:[%s281 + $0x130] sm:$0xff] %v333
        %366 = vst [vmem:[%s281 + $0x148] sm:$0xff] %v334
        %367 = vst [vmem:[%s281 + $0x150] sm:$0xff] %v335
        %368 = vst [vmem:[%s281 + $0x168] sm:$0xff] %v336
        %369 = vst [vmem:[%s281 + $0x170] sm:$0xff] %v337
        %370 = vst [vmem:[%s281 + $0x188] sm:$0xff] %v338
        %371 = vst [vmem:[%s281 + $0x190] sm:$0xff] %v339
        %372 = vst [vmem:[%s281 + $0x1a8] sm:$0xff] %v340
        %373 = vst [vmem:[%s281 + $0x1b0] sm:$0xff] %v341
        %374 = vst [vmem:[%s281 + $0x1c8] sm:$0xff] %v342
        %375 = vst [vmem:[%s281 + $0x1d0] sm:$0xff] %v343
        %376 = vst [vmem:[%s281 + $0x1e8] sm:$0xff] %v344
        %377 = vst [vmem:[%s281 + $0x1f0] sm:$0xff] %v345
        %v378 = vld [vmem:[#allocation2 + $0x7] sm:$0xff]
        %v379 = vld [vmem:[#allocation2 + $0xf] sm:$0xff]
        %v380 = vld [vmem:[#allocation2 + $0x27] sm:$0xff]
        %v381 = vld [vmem:[#allocation2 + $0x2f] sm:$0xff]
        %v382 = vld [vmem:[#allocation2 + $0x47] sm:$0xff]
        %v383 = vld [vmem:[#allocation2 + $0x4f] sm:$0xff]
        %v384 = vld [vmem:[#allocation2 + $0x67] sm:$0xff]
        %v385 = vld [vmem:[#allocation2 + $0x6f] sm:$0xff]
        %v386 = vld [vmem:[#allocation2 + $0x87] sm:$0xff]
        %v387 = vld [vmem:[#allocation2 + $0x8f] sm:$0xff]
        %v388 = vld [vmem:[#allocation2 + $0xa7] sm:$0xff]
        %v389 = vld [vmem:[#allocation2 + $0xaf] sm:$0xff]
        %v390 = vld [vmem:[#allocation2 + $0xc7] sm:$0xff]
        %v391 = vld [vmem:[#allocation2 + $0xcf] sm:$0xff]
        %v392 = vld [vmem:[#allocation2 + $0xe7] sm:$0xff]
        %v393 = vld [vmem:[#allocation2 + $0xef] sm:$0xff]
        %v394 = vld [vmem:[#allocation2 + $0x107] sm:$0xff]
        %v395 = vld [vmem:[#allocation2 + $0x10f] sm:$0xff]
        %v396 = vld [vmem:[#allocation2 + $0x127] sm:$0xff]
        %v397 = vld [vmem:[#allocation2 + $0x12f] sm:$0xff]
        %v398 = vld [vmem:[#allocation2 + $0x147] sm:$0xff]
        %v399 = vld [vmem:[#allocation2 + $0x14f] sm:$0xff]
        %v400 = vld [vmem:[#allocation2 + $0x167] sm:$0xff]
        %v401 = vld [vmem:[#allocation2 + $0x16f] sm:$0xff]
        %v402 = vld [vmem:[#allocation2 + $0x187] sm:$0xff]
        %v403 = vld [vmem:[#allocation2 + $0x18f] sm:$0xff]
        %v404 = vld [vmem:[#allocation2 + $0x1a7] sm:$0xff]
        %v405 = vld [vmem:[#allocation2 + $0x1af] sm:$0xff]
        %v406 = vld [vmem:[#allocation2 + $0x1c7] sm:$0xff]
        %v407 = vld [vmem:[#allocation2 + $0x1cf] sm:$0xff]
        %v408 = vld [vmem:[#allocation2 + $0x1e7] sm:$0xff]
        %v409 = vld [vmem:[#allocation2 + $0x1ef] sm:$0xff]
        %v410 = vld [vmem:[#allocation6] sm:$0xff]
        %v411 = vld [vmem:[#allocation6 + $0x8] sm:$0xff]
        %v412 = vld [vmem:[#allocation6 + $0x10] sm:$0xff]
        %v413 = vld [vmem:[#allocation6 + $0x18] sm:$0xff]
        %v414 = vld [vmem:[#allocation6 + $0x20] sm:$0xff]
        %v415 = vld [vmem:[#allocation6 + $0x28] sm:$0xff]
        %v416 = vld [vmem:[#allocation6 + $0x30] sm:$0xff]
        %v417 = vld [vmem:[#allocation6 + $0x38] sm:$0xff]
        %v418 = vld [vmem:[#allocation6 + $0x40] sm:$0xff]
        %v419 = vld [vmem:[#allocation6 + $0x48] sm:$0xff]
        %v420 = vld [vmem:[#allocation6 + $0x50] sm:$0xff]
        %v421 = vld [vmem:[#allocation6 + $0x58] sm:$0xff]
        %v422 = vld [vmem:[#allocation6 + $0x60] sm:$0xff]
        %v423 = vld [vmem:[#allocation6 + $0x68] sm:$0xff]
        %v424 = vld [vmem:[#allocation6 + $0x70] sm:$0xff]
        %v425 = vld [vmem:[#allocation6 + $0x78] sm:$0xff]
        %v426 = vld [vmem:[#allocation2 + $0x8] sm:$0xff]
        %v427 = vld [vmem:[#allocation2 + $0x10] sm:$0xff]
        %v428 = vld [vmem:[#allocation2 + $0x28] sm:$0xff]
        %v429 = vld [vmem:[#allocation2 + $0x30] sm:$0xff]
        %v430 = vld [vmem:[#allocation2 + $0x48] sm:$0xff]
        %v431 = vld [vmem:[#allocation2 + $0x50] sm:$0xff]
        %v432 = vld [vmem:[#allocation2 + $0x68] sm:$0xff]
        %v433 = vld [vmem:[#allocation2 + $0x70] sm:$0xff]
        %v434 = vld [vmem:[#allocation2 + $0x88] sm:$0xff]
        %v435 = vld [vmem:[#allocation2 + $0x90] sm:$0xff]
        %v436 = vld [vmem:[#allocation2 + $0xa8] sm:$0xff]
        %v437 = vld [vmem:[#allocation2 + $0xb0] sm:$0xff]
        %v438 = vld [vmem:[#allocation2 + $0xc8] sm:$0xff]
        %v439 = vld [vmem:[#allocation2 + $0xd0] sm:$0xff]
        %v440 = vld [vmem:[#allocation2 + $0xe8] sm:$0xff]
        %v441 = vld [vmem:[#allocation2 + $0xf0] sm:$0xff]
        %v442 = vld [vmem:[#allocation2 + $0x108] sm:$0xff]
        %v443 = vld [vmem:[#allocation2 + $0x110] sm:$0xff]
        %v444 = vld [vmem:[#allocation2 + $0x128] sm:$0xff]
        %v445 = vld [vmem:[#allocation2 + $0x130] sm:$0xff]
        %v446 = vld [vmem:[#allocation2 + $0x148] sm:$0xff]
        %v447 = vld [vmem:[#allocation2 + $0x150] sm:$0xff]
        %v448 = vld [vmem:[#allocation2 + $0x168] sm:$0xff]
        %v449 = vld [vmem:[#allocation2 + $0x170] sm:$0xff]
        %v450 = vld [vmem:[#allocation2 + $0x188] sm:$0xff]
        %v451 = vld [vmem:[#allocation2 + $0x190] sm:$0xff]
        %v452 = vld [vmem:[#allocation2 + $0x1a8] sm:$0xff]
        %v453 = vld [vmem:[#allocation2 + $0x1b0] sm:$0xff]
        %v454 = vld [vmem:[#allocation2 + $0x1c8] sm:$0xff]
        %v455 = vld [vmem:[#allocation2 + $0x1d0] sm:$0xff]
        %v456 = vld [vmem:[#allocation2 + $0x1e8] sm:$0xff]
        %v457 = vld [vmem:[#allocation2 + $0x1f0] sm:$0xff]
        %v458 = vld [vmem:[#allocation6 + $0x80] sm:$0xff]
        %v459 = vld [vmem:[#allocation6 + $0x88] sm:$0xff]
        %v460 = vld [vmem:[#allocation6 + $0x90] sm:$0xff]
        %v461 = vld [vmem:[#allocation6 + $0x98] sm:$0xff]
        %v462 = vld [vmem:[#allocation6 + $0xa0] sm:$0xff]
        %v463 = vld [vmem:[#allocation6 + $0xa8] sm:$0xff]
        %v464 = vld [vmem:[#allocation6 + $0xb0] sm:$0xff]
        %v465 = vld [vmem:[#allocation6 + $0xb8] sm:$0xff]
        %v466 = vld [vmem:[#allocation6 + $0xc0] sm:$0xff]
        %v467 = vld [vmem:[#allocation6 + $0xc8] sm:$0xff]
        %v468 = vld [vmem:[#allocation6 + $0xd0] sm:$0xff]
        %v469 = vld [vmem:[#allocation6 + $0xd8] sm:$0xff]
        %v470 = vld [vmem:[#allocation6 + $0xe0] sm:$0xff]
        %v471 = vld [vmem:[#allocation6 + $0xe8] sm:$0xff]
        %v472 = vld [vmem:[#allocation6 + $0xf0] sm:$0xff]
        %v473 = vld [vmem:[#allocation6 + $0xf8] sm:$0xff]
        %474 = vmatprep.subr.mxu0 0.0
        %475 = vmatpush1.msra.mxu0 %v458
        %476 = vmatprep.subr.mxu0 0.0
        %477 = vmatpush1.msra.mxu0 %v459
        %478 = vmatprep.subr.mxu0 0.0
        %479 = vmatpush1.msra.mxu0 %v460
        %480 = vmatprep.subr.mxu0 0.0
        %481 = vmatpush1.msra.mxu0 %v461
        %482 = vmatprep.subr.mxu0 0.0
        %483 = vmatpush1.msra.mxu0 %v462
        %484 = vmatprep.subr.mxu0 0.0
        %485 = vmatpush1.msra.mxu0 %v463
        %486 = vmatprep.subr.mxu0 0.0
        %487 = vmatpush1.msra.mxu0 %v464
        %488 = vmatprep.subr.mxu0 0.0
        %489 = vmatpush1.msra.mxu0 %v465
        %490 = vmatprep.subr.mxu0 0.0
        %491 = vmatpush1.msra.mxu0 %v466
        %492 = vmatprep.subr.mxu0 0.0
        %493 = vmatpush1.msra.mxu0 %v467
        %494 = vmatprep.subr.mxu0 0.0
        %495 = vmatpush1.msra.mxu0 %v468
        %496 = vmatprep.subr.mxu0 0.0
        %497 = vmatpush1.msra.mxu0 %v469
        %498 = vmatprep.subr.mxu0 0.0
        %499 = vmatpush1.msra.mxu0 %v470
        %500 = vmatprep.subr.mxu0 0.0
        %501 = vmatpush1.msra.mxu0 %v471
        %502 = vmatprep.subr.mxu0 0.0
        %503 = vmatpush1.msra.mxu0 %v472
        %504 = vmatprep.subr.mxu0 0.0
        %505 = vmatpush1.msra.mxu0 %v473
        %506 = vmatprep.subr.mxu0 0.0
        %507 = vmatpush1.msra.mxu0 0.0
        %508 = vmatprep.subr.mxu0 0.0
        %509 = vmatpush1.msra.mxu0 0.0
        %510 = vmatprep.subr.mxu0 0.0
        %511 = vmatpush1.msra.mxu0 0.0
        %512 = vmatprep.subr.mxu0 0.0
        %513 = vmatpush1.msra.mxu0 0.0
        %514 = vmatprep.subr.mxu0 0.0
        %515 = vmatpush1.msra.mxu0 0.0
        %516 = vmatprep.subr.mxu0 0.0
        %517 = vmatpush1.msra.mxu0 0.0
        %518 = vmatprep.subr.mxu0 0.0
        %519 = vmatpush1.msra.mxu0 0.0
        %520 = vmatprep.subr.mxu0 0.0
        %521 = vmatpush1.msra.mxu0 0.0
        %522 = vmatprep.subr.mxu0 0.0
        %523 = vmatpush1.msra.mxu0 0.0
        %524 = vmatprep.subr.mxu0 0.0
        %525 = vmatpush1.msra.mxu0 0.0
        %526 = vmatprep.subr.mxu0 0.0
        %527 = vmatpush1.msra.mxu0 0.0
        %528 = vmatprep.subr.mxu0 0.0
        %529 = vmatpush1.msra.mxu0 0.0
        %530 = vmatprep.subr.mxu0 0.0
        %531 = vmatpush1.msra.mxu0 0.0
        %532 = vmatprep.subr.mxu0 0.0
        %533 = vmatpush1.msra.mxu0 0.0
        %534 = vmatprep.subr.mxu0 0.0
        %535 = vmatpush1.msra.mxu0 0.0
        %536 = vmatprep.subr.mxu0 0.0
        %537 = vmatpush1.msra.mxu0 0.0
        %538 = vmatprep.mubr.f32.mxu0 0.0
        %539 = vmatmul.mubr.f32.gmra.mrb[0].mxu0 %v426
        %v540 = vpop.f32.mrb[0].mxu0
        %v541 = vadd.f32 0.0, %v540
        %v542 = vpop.f32.mrb[0].mxu0
        %543 = vmatprep.mubr.f32.mxu0 0.0
        %544 = vmatmul.mubr.f32.gmra.mrb[0].mxu0 %v427
        %v545 = vpop.f32.mrb[0].mxu0
        %v546 = vadd.f32 0.0, %v545
        %v547 = vpop.f32.mrb[0].mxu0
        %548 = vmatprep.mubr.f32.mxu0 0.0
        %549 = vmatmul.mubr.f32.gmra.mrb[0].mxu0 %v428
        %v550 = vpop.f32.mrb[0].mxu0
        %v551 = vadd.f32 0.0, %v550
        %v552 = vpop.f32.mrb[0].mxu0
        %553 = vmatprep.mubr.f32.mxu0 0.0
        %554 = vmatmul.mubr.f32.gmra.mrb[0].mxu0 %v429
        %v555 = vpop.f32.mrb[0].mxu0
        %v556 = vadd.f32 0.0, %v555
        %v557 = vpop.f32.mrb[0].mxu0
        %558 = vmatprep.mubr.f32.mxu0 0.0
        %559 = vmatmul.mubr.f32.gmra.mrb[0].mxu0 %v430
        %v560 = vpop.f32.mrb[0].mxu0
        %v561 = vadd.f32 0.0, %v560
        %v562 = vpop.f32.mrb[0].mxu0
        %563 = vmatprep.mubr.f32.mxu0 0.0
        %564 = vmatmul.mubr.f32.gmra.mrb[0].mxu0 %v431
        %v565 = vpop.f32.mrb[0].mxu0
        %v566 = vadd.f32 0.0, %v565
        %v567 = vpop.f32.mrb[0].mxu0
        %568 = vmatprep.mubr.f32.mxu0 0.0
        %569 = vmatmul.mubr.f32.gmra.mrb[0].mxu0 %v432
        %v570 = vpop.f32.mrb[0].mxu0
        %v571 = vadd.f32 0.0, %v570
        %v572 = vpop.f32.mrb[0].mxu0
        %573 = vmatprep.mubr.f32.mxu0 0.0
        %574 = vmatmul.mubr.f32.gmra.mrb[0].mxu0 %v433
        %v575 = vpop.f32.mrb[0].mxu0
        %v576 = vadd.f32 0.0, %v575
        %v577 = vpop.f32.mrb[0].mxu0
        %578 = vmatprep.mubr.f32.mxu0 0.0
        %579 = vmatmul.mubr.f32.gmra.mrb[0].mxu0 %v434
        %v580 = vpop.f32.mrb[0].mxu0
        %v581 = vadd.f32 0.0, %v580
        %v582 = vpop.f32.mrb[0].mxu0
        %583 = vmatprep.mubr.f32.mxu0 0.0
        %584 = vmatmul.mubr.f32.gmra.mrb[0].mxu0 %v435
        %v585 = vpop.f32.mrb[0].mxu0
        %v586 = vadd.f32 0.0, %v585
        %v587 = vpop.f32.mrb[0].mxu0
        %588 = vmatprep.mubr.f32.mxu0 0.0
        %589 = vmatmul.mubr.f32.gmra.mrb[0].mxu0 %v436
        %v590 = vpop.f32.mrb[0].mxu0
        %v591 = vadd.f32 0.0, %v590
        %v592 = vpop.f32.mrb[0].mxu0
        %593 = vmatprep.mubr.f32.mxu0 0.0
        %594 = vmatmul.mubr.f32.gmra.mrb[0].mxu0 %v437
        %v595 = vpop.f32.mrb[0].mxu0
        %v596 = vadd.f32 0.0, %v595
        %v597 = vpop.f32.mrb[0].mxu0
        %598 = vmatprep.mubr.f32.mxu0 0.0
        %599 = vmatmul.mubr.f32.gmra.mrb[0].mxu0 %v438
        %v600 = vpop.f32.mrb[0].mxu0
        %v601 = vadd.f32 0.0, %v600
        %v602 = vpop.f32.mrb[0].mxu0
        %603 = vmatprep.mubr.f32.mxu0 0.0
        %604 = vmatmul.mubr.f32.gmra.mrb[0].mxu0 %v439
        %v605 = vpop.f32.mrb[0].mxu0
        %v606 = vadd.f32 0.0, %v605
        %v607 = vpop.f32.mrb[0].mxu0
        %608 = vmatprep.mubr.f32.mxu0 0.0
        %609 = vmatmul.mubr.f32.gmra.mrb[0].mxu0 %v440
        %v610 = vpop.f32.mrb[0].mxu0
        %v611 = vadd.f32 0.0, %v610
        %v612 = vpop.f32.mrb[0].mxu0
        %613 = vmatprep.mubr.f32.mxu0 0.0
        %614 = vmatmul.mubr.f32.gmra.mrb[0].mxu0 %v441
        %v615 = vpop.f32.mrb[0].mxu0
        %v616 = vadd.f32 0.0, %v615
        %v617 = vpop.f32.mrb[0].mxu0
        %618 = vmatprep.mubr.f32.mxu0 0.0
        %619 = vmatmul.mubr.f32.gmra.mrb[0].mxu0 %v442
        %v620 = vpop.f32.mrb[0].mxu0
        %v621 = vadd.f32 0.0, %v620
        %v622 = vpop.f32.mrb[0].mxu0
        %623 = vmatprep.mubr.f32.mxu0 0.0
        %624 = vmatmul.mubr.f32.gmra.mrb[0].mxu0 %v443
        %v625 = vpop.f32.mrb[0].mxu0
        %v626 = vadd.f32 0.0, %v625
        %v627 = vpop.f32.mrb[0].mxu0
        %628 = vmatprep.mubr.f32.mxu0 0.0
        %629 = vmatmul.mubr.f32.gmra.mrb[0].mxu0 %v444
        %v630 = vpop.f32.mrb[0].mxu0
        %v631 = vadd.f32 0.0, %v630
        %v632 = vpop.f32.mrb[0].mxu0
        %633 = vmatprep.mubr.f32.mxu0 0.0
        %634 = vmatmul.mubr.f32.gmra.mrb[0].mxu0 %v445
        %v635 = vpop.f32.mrb[0].mxu0
        %v636 = vadd.f32 0.0, %v635
        %v637 = vpop.f32.mrb[0].mxu0
        %638 = vmatprep.mubr.f32.mxu0 0.0
        %639 = vmatmul.mubr.f32.gmra.mrb[0].mxu0 %v446
        %v640 = vpop.f32.mrb[0].mxu0
        %v641 = vadd.f32 0.0, %v640
        %v642 = vpop.f32.mrb[0].mxu0
        %643 = vmatprep.mubr.f32.mxu0 0.0
        %644 = vmatmul.mubr.f32.gmra.mrb[0].mxu0 %v447
        %v645 = vpop.f32.mrb[0].mxu0
        %v646 = vadd.f32 0.0, %v645
        %v647 = vpop.f32.mrb[0].mxu0
        %648 = vmatprep.mubr.f32.mxu0 0.0
        %649 = vmatmul.mubr.f32.gmra.mrb[0].mxu0 %v448
        %v650 = vpop.f32.mrb[0].mxu0
        %v651 = vadd.f32 0.0, %v650
        %v652 = vpop.f32.mrb[0].mxu0
        %653 = vmatprep.mubr.f32.mxu0 0.0
        %654 = vmatmul.mubr.f32.gmra.mrb[0].mxu0 %v449
        %v655 = vpop.f32.mrb[0].mxu0
        %v656 = vadd.f32 0.0, %v655
        %v657 = vpop.f32.mrb[0].mxu0
        %658 = vmatprep.mubr.f32.mxu0 0.0
        %659 = vmatmul.mubr.f32.gmra.mrb[0].mxu0 %v450
        %v660 = vpop.f32.mrb[0].mxu0
        %v661 = vadd.f32 0.0, %v660
        %v662 = vpop.f32.mrb[0].mxu0
        %663 = vmatprep.mubr.f32.mxu0 0.0
        %664 = vmatmul.mubr.f32.gmra.mrb[0].mxu0 %v451
        %v665 = vpop.f32.mrb[0].mxu0
        %v666 = vadd.f32 0.0, %v665
        %v667 = vpop.f32.mrb[0].mxu0
        %668 = vmatprep.mubr.f32.mxu0 0.0
        %669 = vmatmul.mubr.f32.gmra.mrb[0].mxu0 %v452
        %v670 = vpop.f32.mrb[0].mxu0
        %v671 = vadd.f32 0.0, %v670
        %v672 = vpop.f32.mrb[0].mxu0
        %673 = vmatprep.mubr.f32.mxu0 0.0
        %674 = vmatmul.mubr.f32.gmra.mrb[0].mxu0 %v453
        %v675 = vpop.f32.mrb[0].mxu0
        %v676 = vadd.f32 0.0, %v675
        %v677 = vpop.f32.mrb[0].mxu0
        %678 = vmatprep.mubr.f32.mxu0 0.0
        %679 = vmatmul.mubr.f32.gmra.mrb[0].mxu0 %v454
        %v680 = vpop.f32.mrb[0].mxu0
        %v681 = vadd.f32 0.0, %v680
        %v682 = vpop.f32.mrb[0].mxu0
        %683 = vmatprep.mubr.f32.mxu0 0.0
        %684 = vmatmul.mubr.f32.gmra.mrb[0].mxu0 %v455
        %v685 = vpop.f32.mrb[0].mxu0
        %v686 = vadd.f32 0.0, %v685
        %v687 = vpop.f32.mrb[0].mxu0
        %688 = vmatprep.mubr.f32.mxu0 0.0
        %689 = vmatmul.mubr.f32.gmra.mrb[0].mxu0 %v456
        %v690 = vpop.f32.mrb[0].mxu0
        %v691 = vadd.f32 0.0, %v690
        %v692 = vpop.f32.mrb[0].mxu0
        %693 = vmatprep.mubr.f32.mxu0 0.0
        %694 = vmatmul.mubr.f32.gmra.mrb[0].mxu0 %v457
        %v695 = vpop.f32.mrb[0].mxu0
        %v696 = vadd.f32 0.0, %v695
        %v697 = vpop.f32.mrb[0].mxu0
        %698 = vdwg.mxu0
        %699 = vmatprep.subr.mxu0 0.0
        %700 = vmatpush1.msra.mxu0 %v410
        %701 = vmatprep.subr.mxu0 0.0
        %702 = vmatpush1.msra.mxu0 %v411
        %703 = vmatprep.subr.mxu0 0.0
        %704 = vmatpush1.msra.mxu0 %v412
        %705 = vmatprep.subr.mxu0 0.0
        %706 = vmatpush1.msra.mxu0 %v413
        %707 = vmatprep.subr.mxu0 0.0
        %708 = vmatpush1.msra.mxu0 %v414
        %709 = vmatprep.subr.mxu0 0.0
        %710 = vmatpush1.msra.mxu0 %v415
        %711 = vmatprep.subr.mxu0 0.0
        %712 = vmatpush1.msra.mxu0 %v416
        %713 = vmatprep.subr.mxu0 0.0
        %714 = vmatpush1.msra.mxu0 %v417
        %715 = vmatprep.subr.mxu0 0.0
        %716 = vmatpush1.msra.mxu0 %v418
        %717 = vmatprep.subr.mxu0 0.0
        %718 = vmatpush1.msra.mxu0 %v419
        %719 = vmatprep.subr.mxu0 0.0
        %720 = vmatpush1.msra.mxu0 %v420
        %721 = vmatprep.subr.mxu0 0.0
        %722 = vmatpush1.msra.mxu0 %v421
        %723 = vmatprep.subr.mxu0 0.0
        %724 = vmatpush1.msra.mxu0 %v422
        %725 = vmatprep.subr.mxu0 0.0
        %726 = vmatpush1.msra.mxu0 %v423
        %727 = vmatprep.subr.mxu0 0.0
        %728 = vmatpush1.msra.mxu0 %v424
        %729 = vmatprep.subr.mxu0 0.0
        %730 = vmatpush1.msra.mxu0 %v425
        %731 = vmatprep.subr.mxu0 0.0
        %732 = vmatpush1.msra.mxu0 0.0
        %733 = vmatprep.subr.mxu0 0.0
        %734 = vmatpush1.msra.mxu0 0.0
        %735 = vmatprep.subr.mxu0 0.0
        %736 = vmatpush1.msra.mxu0 0.0
        %737 = vmatprep.subr.mxu0 0.0
        %738 = vmatpush1.msra.mxu0 0.0
        %739 = vmatprep.subr.mxu0 0.0
        %740 = vmatpush1.msra.mxu0 0.0
        %741 = vmatprep.subr.mxu0 0.0
        %742 = vmatpush1.msra.mxu0 0.0
        %743 = vmatprep.subr.mxu0 0.0
        %744 = vmatpush1.msra.mxu0 0.0
        %745 = vmatprep.subr.mxu0 0.0
        %746 = vmatpush1.msra.mxu0 0.0
        %747 = vmatprep.subr.mxu0 0.0
        %748 = vmatpush1.msra.mxu0 0.0
        %749 = vmatprep.subr.mxu0 0.0
        %750 = vmatpush1.msra.mxu0 0.0
        %751 = vmatprep.subr.mxu0 0.0
        %752 = vmatpush1.msra.mxu0 0.0
        %753 = vmatprep.subr.mxu0 0.0
        %754 = vmatpush1.msra.mxu0 0.0
        %755 = vmatprep.subr.mxu0 0.0
        %756 = vmatpush1.msra.mxu0 0.0
        %757 = vmatprep.subr.mxu0 0.0
        %758 = vmatpush1.msra.mxu0 0.0
        %759 = vmatprep.subr.mxu0 0.0
        %760 = vmatpush1.msra.mxu0 0.0
        %761 = vmatprep.subr.mxu0 0.0
        %762 = vmatpush1.msra.mxu0 0.0
        %763 = vmatprep.mubr.f32.mxu0 0.0
        %764 = vmatmul.mubr.f32.gmra.mrb[0].mxu0 %v378
        %v765 = vpop.f32.mrb[0].mxu0
        %v766 = vadd.f32 %v541, %v765
        %v767 = vpop.f32.mrb[0].mxu0
        %768 = vmatprep.mubr.f32.mxu0 0.0
        %769 = vmatmul.mubr.f32.gmra.mrb[0].mxu0 %v379
        %v770 = vpop.f32.mrb[0].mxu0
        %v771 = vadd.f32 %v546, %v770
        %v772 = vpop.f32.mrb[0].mxu0
        %773 = vmatprep.mubr.f32.mxu0 0.0
        %774 = vmatmul.mubr.f32.gmra.mrb[0].mxu0 %v380
        %v775 = vpop.f32.mrb[0].mxu0
        %v776 = vadd.f32 %v551, %v775
        %v777 = vpop.f32.mrb[0].mxu0
        %778 = vmatprep.mubr.f32.mxu0 0.0
        %779 = vmatmul.mubr.f32.gmra.mrb[0].mxu0 %v381
        %v780 = vpop.f32.mrb[0].mxu0
        %v781 = vadd.f32 %v556, %v780
        %v782 = vpop.f32.mrb[0].mxu0
        %783 = vmatprep.mubr.f32.mxu0 0.0
        %784 = vmatmul.mubr.f32.gmra.mrb[0].mxu0 %v382
        %v785 = vpop.f32.mrb[0].mxu0
        %v786 = vadd.f32 %v561, %v785
        %v787 = vpop.f32.mrb[0].mxu0
        %788 = vmatprep.mubr.f32.mxu0 0.0
        %789 = vmatmul.mubr.f32.gmra.mrb[0].mxu0 %v383
        %v790 = vpop.f32.mrb[0].mxu0
        %v791 = vadd.f32 %v566, %v790
        %v792 = vpop.f32.mrb[0].mxu0
        %793 = vmatprep.mubr.f32.mxu0 0.0
        %794 = vmatmul.mubr.f32.gmra.mrb[0].mxu0 %v384
        %v795 = vpop.f32.mrb[0].mxu0
        %v796 = vadd.f32 %v571, %v795
        %v797 = vpop.f32.mrb[0].mxu0
        %798 = vmatprep.mubr.f32.mxu0 0.0
        %799 = vmatmul.mubr.f32.gmra.mrb[0].mxu0 %v385
        %v800 = vpop.f32.mrb[0].mxu0
        %v801 = vadd.f32 %v576, %v800
        %v802 = vpop.f32.mrb[0].mxu0
        %803 = vmatprep.mubr.f32.mxu0 0.0
        %804 = vmatmul.mubr.f32.gmra.mrb[0].mxu0 %v386
        %v805 = vpop.f32.mrb[0].mxu0
        %v806 = vadd.f32 %v581, %v805
        %v807 = vpop.f32.mrb[0].mxu0
        %808 = vmatprep.mubr.f32.mxu0 0.0
        %809 = vmatmul.mubr.f32.gmra.mrb[0].mxu0 %v387
        %v810 = vpop.f32.mrb[0].mxu0
        %v811 = vadd.f32 %v586, %v810
        %v812 = vpop.f32.mrb[0].mxu0
        %813 = vmatprep.mubr.f32.mxu0 0.0
        %814 = vmatmul.mubr.f32.gmra.mrb[0].mxu0 %v388
        %v815 = vpop.f32.mrb[0].mxu0
        %v816 = vadd.f32 %v591, %v815
        %v817 = vpop.f32.mrb[0].mxu0
        %818 = vmatprep.mubr.f32.mxu0 0.0
        %819 = vmatmul.mubr.f32.gmra.mrb[0].mxu0 %v389
        %v820 = vpop.f32.mrb[0].mxu0
        %v821 = vadd.f32 %v596, %v820
        %v822 = vpop.f32.mrb[0].mxu0
        %823 = vmatprep.mubr.f32.mxu0 0.0
        %824 = vmatmul.mubr.f32.gmra.mrb[0].mxu0 %v390
        %v825 = vpop.f32.mrb[0].mxu0
        %v826 = vadd.f32 %v601, %v825
        %v827 = vpop.f32.mrb[0].mxu0
        %828 = vmatprep.mubr.f32.mxu0 0.0
        %829 = vmatmul.mubr.f32.gmra.mrb[0].mxu0 %v391
        %v830 = vpop.f32.mrb[0].mxu0
        %v831 = vadd.f32 %v606, %v830
        %v832 = vpop.f32.mrb[0].mxu0
        %833 = vmatprep.mubr.f32.mxu0 0.0
        %834 = vmatmul.mubr.f32.gmra.mrb[0].mxu0 %v392
        %v835 = vpop.f32.mrb[0].mxu0
        %v836 = vadd.f32 %v611, %v835
        %v837 = vpop.f32.mrb[0].mxu0
        %838 = vmatprep.mubr.f32.mxu0 0.0
        %839 = vmatmul.mubr.f32.gmra.mrb[0].mxu0 %v393
        %v840 = vpop.f32.mrb[0].mxu0
        %v841 = vadd.f32 %v616, %v840
        %v842 = vpop.f32.mrb[0].mxu0
        %843 = vmatprep.mubr.f32.mxu0 0.0
        %844 = vmatmul.mubr.f32.gmra.mrb[0].mxu0 %v394
        %v845 = vpop.f32.mrb[0].mxu0
        %v846 = vadd.f32 %v621, %v845
        %v847 = vpop.f32.mrb[0].mxu0
        %848 = vmatprep.mubr.f32.mxu0 0.0
        %849 = vmatmul.mubr.f32.gmra.mrb[0].mxu0 %v395
        %v850 = vpop.f32.mrb[0].mxu0
        %v851 = vadd.f32 %v626, %v850
        %v852 = vpop.f32.mrb[0].mxu0
        %853 = vmatprep.mubr.f32.mxu0 0.0
        %854 = vmatmul.mubr.f32.gmra.mrb[0].mxu0 %v396
        %v855 = vpop.f32.mrb[0].mxu0
        %v856 = vadd.f32 %v631, %v855
        %v857 = vpop.f32.mrb[0].mxu0
        %858 = vmatprep.mubr.f32.mxu0 0.0
        %859 = vmatmul.mubr.f32.gmra.mrb[0].mxu0 %v397
        %v860 = vpop.f32.mrb[0].mxu0
        %v861 = vadd.f32 %v636, %v860
        %v862 = vpop.f32.mrb[0].mxu0
        %863 = vmatprep.mubr.f32.mxu0 0.0
        %864 = vmatmul.mubr.f32.gmra.mrb[0].mxu0 %v398
        %v865 = vpop.f32.mrb[0].mxu0
        %v866 = vadd.f32 %v641, %v865
        %v867 = vpop.f32.mrb[0].mxu0
        %868 = vmatprep.mubr.f32.mxu0 0.0
        %869 = vmatmul.mubr.f32.gmra.mrb[0].mxu0 %v399
        %v870 = vpop.f32.mrb[0].mxu0
        %v871 = vadd.f32 %v646, %v870
        %v872 = vpop.f32.mrb[0].mxu0
        %873 = vmatprep.mubr.f32.mxu0 0.0
        %874 = vmatmul.mubr.f32.gmra.mrb[0].mxu0 %v400
        %v875 = vpop.f32.mrb[0].mxu0
        %v876 = vadd.f32 %v651, %v875
        %v877 = vpop.f32.mrb[0].mxu0
        %878 = vmatprep.mubr.f32.mxu0 0.0
        %879 = vmatmul.mubr.f32.gmra.mrb[0].mxu0 %v401
        %v880 = vpop.f32.mrb[0].mxu0
        %v881 = vadd.f32 %v656, %v880
        %v882 = vpop.f32.mrb[0].mxu0
        %883 = vmatprep.mubr.f32.mxu0 0.0
        %884 = vmatmul.mubr.f32.gmra.mrb[0].mxu0 %v402
        %v885 = vpop.f32.mrb[0].mxu0
        %v886 = vadd.f32 %v661, %v885
        %v887 = vpop.f32.mrb[0].mxu0
        %888 = vmatprep.mubr.f32.mxu0 0.0
        %889 = vmatmul.mubr.f32.gmra.mrb[0].mxu0 %v403
        %v890 = vpop.f32.mrb[0].mxu0
        %v891 = vadd.f32 %v666, %v890
        %v892 = vpop.f32.mrb[0].mxu0
        %893 = vmatprep.mubr.f32.mxu0 0.0
        %894 = vmatmul.mubr.f32.gmra.mrb[0].mxu0 %v404
        %v895 = vpop.f32.mrb[0].mxu0
        %v896 = vadd.f32 %v671, %v895
        %v897 = vpop.f32.mrb[0].mxu0
        %898 = vmatprep.mubr.f32.mxu0 0.0
        %899 = vmatmul.mubr.f32.gmra.mrb[0].mxu0 %v405
        %v900 = vpop.f32.mrb[0].mxu0
        %v901 = vadd.f32 %v676, %v900
        %v902 = vpop.f32.mrb[0].mxu0
        %903 = vmatprep.mubr.f32.mxu0 0.0
        %904 = vmatmul.mubr.f32.gmra.mrb[0].mxu0 %v406
        %v905 = vpop.f32.mrb[0].mxu0
        %v906 = vadd.f32 %v681, %v905
        %v907 = vpop.f32.mrb[0].mxu0
        %908 = vmatprep.mubr.f32.mxu0 0.0
        %909 = vmatmul.mubr.f32.gmra.mrb[0].mxu0 %v407
        %v910 = vpop.f32.mrb[0].mxu0
        %v911 = vadd.f32 %v686, %v910
        %v912 = vpop.f32.mrb[0].mxu0
        %913 = vmatprep.mubr.f32.mxu0 0.0
        %914 = vmatmul.mubr.f32.gmra.mrb[0].mxu0 %v408
        %v915 = vpop.f32.mrb[0].mxu0
        %v916 = vadd.f32 %v691, %v915
        %v917 = vpop.f32.mrb[0].mxu0
        %918 = vmatprep.mubr.f32.mxu0 0.0
        %919 = vmatmul.mubr.f32.gmra.mrb[0].mxu0 %v409
        %v920 = vpop.f32.mrb[0].mxu0
        %v921 = vadd.f32 %v696, %v920
        %v922 = vpop.f32.mrb[0].mxu0
        %923 = vdwg.mxu0
        %v924 = vld [vmem:[#allocation2 + $0x9] sm:$0xff]
        %v925 = vld [vmem:[#allocation2 + $0x11] sm:$0xff]
        %v926 = vld [vmem:[#allocation2 + $0x29] sm:$0xff]
        %v927 = vld [vmem:[#allocation2 + $0x31] sm:$0xff]
        %v928 = vld [vmem:[#allocation2 + $0x49] sm:$0xff]
        %v929 = vld [vmem:[#allocation2 + $0x51] sm:$0xff]
        %v930 = vld [vmem:[#allocation2 + $0x69] sm:$0xff]
        %v931 = vld [vmem:[#allocation2 + $0x71] sm:$0xff]
        %v932 = vld [vmem:[#allocation2 + $0x89] sm:$0xff]
        %v933 = vld [vmem:[#allocation2 + $0x91] sm:$0xff]
        %v934 = vld [vmem:[#allocation2 + $0xa9] sm:$0xff]
        %v935 = vld [vmem:[#allocation2 + $0xb1] sm:$0xff]
        %v936 = vld [vmem:[#allocation2 + $0xc9] sm:$0xff]
        %v937 = vld [vmem:[#allocation2 + $0xd1] sm:$0xff]
        %v938 = vld [vmem:[#allocation2 + $0xe9] sm:$0xff]
        %v939 = vld [vmem:[#allocation2 + $0xf1] sm:$0xff]
        %v940 = vld [vmem:[#allocation2 + $0x109] sm:$0xff]
        %v941 = vld [vmem:[#allocation2 + $0x111] sm:$0xff]
        %v942 = vld [vmem:[#allocation2 + $0x129] sm:$0xff]
        %v943 = vld [vmem:[#allocation2 + $0x131] sm:$0xff]
        %v944 = vld [vmem:[#allocation2 + $0x149] sm:$0xff]
        %v945 = vld [vmem:[#allocation2 + $0x151] sm:$0xff]
        %v946 = vld [vmem:[#allocation2 + $0x169] sm:$0xff]
        %v947 = vld [vmem:[#allocation2 + $0x171] sm:$0xff]
        %v948 = vld [vmem:[#allocation2 + $0x189] sm:$0xff]
        %v949 = vld [vmem:[#allocation2 + $0x191] sm:$0xff]
        %v950 = vld [vmem:[#allocation2 + $0x1a9] sm:$0xff]
        %v951 = vld [vmem:[#allocation2 + $0x1b1] sm:$0xff]
        %v952 = vld [vmem:[#allocation2 + $0x1c9] sm:$0xff]
        %v953 = vld [vmem:[#allocation2 + $0x1d1] sm:$0xff]
        %v954 = vld [vmem:[#allocation2 + $0x1e9] sm:$0xff]
        %v955 = vld [vmem:[#allocation2 + $0x1f1] sm:$0xff]
        %v956 = vld [vmem:[#allocation6 + $0x100] sm:$0xff]
        %v957 = vld [vmem:[#allocation6 + $0x108] sm:$0xff]
        %v958 = vld [vmem:[#allocation6 + $0x110] sm:$0xff]
        %v959 = vld [vmem:[#allocation6 + $0x118] sm:$0xff]
        %v960 = vld [vmem:[#allocation6 + $0x120] sm:$0xff]
        %v961 = vld [vmem:[#allocation6 + $0x128] sm:$0xff]
        %v962 = vld [vmem:[#allocation6 + $0x130] sm:$0xff]
        %v963 = vld [vmem:[#allocation6 + $0x138] sm:$0xff]
        %v964 = vld [vmem:[#allocation6 + $0x140] sm:$0xff]
        %v965 = vld [vmem:[#allocation6 + $0x148] sm:$0xff]
        %v966 = vld [vmem:[#allocation6 + $0x150] sm:$0xff]
        %v967 = vld [vmem:[#allocation6 + $0x158] sm:$0xff]
        %v968 = vld [vmem:[#allocation6 + $0x160] sm:$0xff]
        %v969 = vld [vmem:[#allocation6 + $0x168] sm:$0xff]
        %v970 = vld [vmem:[#allocation6 + $0x170] sm:$0xff]
        %v971 = vld [vmem:[#allocation6 + $0x178] sm:$0xff]
        %972 = vmatprep.subr.mxu0 0.0
        %973 = vmatpush1.msra.mxu0 %v956
        %974 = vmatprep.subr.mxu0 0.0
        %975 = vmatpush1.msra.mxu0 %v957
        %976 = vmatprep.subr.mxu0 0.0
        %977 = vmatpush1.msra.mxu0 %v958
        %978 = vmatprep.subr.mxu0 0.0
        %979 = vmatpush1.msra.mxu0 %v959
        %980 = vmatprep.subr.mxu0 0.0
        %981 = vmatpush1.msra.mxu0 %v960
        %982 = vmatprep.subr.mxu0 0.0
        %983 = vmatpush1.msra.mxu0 %v961
        %984 = vmatprep.subr.mxu0 0.0
        %985 = vmatpush1.msra.mxu0 %v962
        %986 = vmatprep.subr.mxu0 0.0
        %987 = vmatpush1.msra.mxu0 %v963
        %988 = vmatprep.subr.mxu0 0.0
        %989 = vmatpush1.msra.mxu0 %v964
        %990 = vmatprep.subr.mxu0 0.0
        %991 = vmatpush1.msra.mxu0 %v965
        %992 = vmatprep.subr.mxu0 0.0
        %993 = vmatpush1.msra.mxu0 %v966
        %994 = vmatprep.subr.mxu0 0.0
        %995 = vmatpush1.msra.mxu0 %v967
        %996 = vmatprep.subr.mxu0 0.0
        %997 = vmatpush1.msra.mxu0 %v968
        %998 = vmatprep.subr.mxu0 0.0
        %999 = vmatpush1.msra.mxu0 %v969
        %1000 = vmatprep.subr.mxu0 0.0
        %1001 = vmatpush1.msra.mxu0 %v970
        %1002 = vmatprep.subr.mxu0 0.0
        %1003 = vmatpush1.msra.mxu0 %v971
        %1004 = vmatprep.subr.mxu0 0.0
        %1005 = vmatpush1.msra.mxu0 0.0
        %1006 = vmatprep.subr.mxu0 0.0
        %1007 = vmatpush1.msra.mxu0 0.0
        %1008 = vmatprep.subr.mxu0 0.0
        %1009 = vmatpush1.msra.mxu0 0.0
        %1010 = vmatprep.subr.mxu0 0.0
        %1011 = vmatpush1.msra.mxu0 0.0
        %1012 = vmatprep.subr.mxu0 0.0
        %1013 = vmatpush1.msra.mxu0 0.0
        %1014 = vmatprep.subr.mxu0 0.0
        %1015 = vmatpush1.msra.mxu0 0.0
        %1016 = vmatprep.subr.mxu0 0.0
        %1017 = vmatpush1.msra.mxu0 0.0
        %1018 = vmatprep.subr.mxu0 0.0
        %1019 = vmatpush1.msra.mxu0 0.0
        %1020 = vmatprep.subr.mxu0 0.0
        %1021 = vmatpush1.msra.mxu0 0.0
        %1022 = vmatprep.subr.mxu0 0.0
        %1023 = vmatpush1.msra.mxu0 0.0
        %1024 = vmatprep.subr.mxu0 0.0
        %1025 = vmatpush1.msra.mxu0 0.0
        %1026 = vmatprep.subr.mxu0 0.0
        %1027 = vmatpush1.msra.mxu0 0.0
        %1028 = vmatprep.subr.mxu0 0.0
        %1029 = vmatpush1.msra.mxu0 0.0
        %1030 = vmatprep.subr.mxu0 0.0
        %1031 = vmatpush1.msra.mxu0 0.0
        %1032 = vmatprep.subr.mxu0 0.0
        %1033 = vmatpush1.msra.mxu0 0.0
        %1034 = vmatprep.subr.mxu0 0.0
        %1035 = vmatpush1.msra.mxu0 0.0
        %1036 = vmatprep.mubr.f32.mxu0 0.0
        %1037 = vmatmul.mubr.f32.gmra.mrb[0].mxu0 %v924
        %v1038 = vpop.f32.mrb[0].mxu0
        %v1039 = vadd.f32 0.0, %v1038
        %v1040 = vpop.f32.mrb[0].mxu0
        %1041 = vmatprep.mubr.f32.mxu0 0.0
        %1042 = vmatmul.mubr.f32.gmra.mrb[0].mxu0 %v925
        %v1043 = vpop.f32.mrb[0].mxu0
        %v1044 = vadd.f32 0.0, %v1043
        %v1045 = vpop.f32.mrb[0].mxu0
        %1046 = vmatprep.mubr.f32.mxu0 0.0
        %1047 = vmatmul.mubr.f32.gmra.mrb[0].mxu0 %v926
        %v1048 = vpop.f32.mrb[0].mxu0
        %v1049 = vadd.f32 0.0, %v1048
        %v1050 = vpop.f32.mrb[0].mxu0
        %1051 = vmatprep.mubr.f32.mxu0 0.0
        %1052 = vmatmul.mubr.f32.gmra.mrb[0].mxu0 %v927
        %v1053 = vpop.f32.mrb[0].mxu0
        %v1054 = vadd.f32 0.0, %v1053
        %v1055 = vpop.f32.mrb[0].mxu0
        %1056 = vmatprep.mubr.f32.mxu0 0.0
        %1057 = vmatmul.mubr.f32.gmra.mrb[0].mxu0 %v928
        %v1058 = vpop.f32.mrb[0].mxu0
        %v1059 = vadd.f32 0.0, %v1058
        %v1060 = vpop.f32.mrb[0].mxu0
        %1061 = vmatprep.mubr.f32.mxu0 0.0
        %1062 = vmatmul.mubr.f32.gmra.mrb[0].mxu0 %v929
        %v1063 = vpop.f32.mrb[0].mxu0
        %v1064 = vadd.f32 0.0, %v1063
        %v1065 = vpop.f32.mrb[0].mxu0
        %1066 = vmatprep.mubr.f32.mxu0 0.0
        %1067 = vmatmul.mubr.f32.gmra.mrb[0].mxu0 %v930
        %v1068 = vpop.f32.mrb[0].mxu0
        %v1069 = vadd.f32 0.0, %v1068
        %v1070 = vpop.f32.mrb[0].mxu0
        %1071 = vmatprep.mubr.f32.mxu0 0.0
        %1072 = vmatmul.mubr.f32.gmra.mrb[0].mxu0 %v931
        %v1073 = vpop.f32.mrb[0].mxu0
        %v1074 = vadd.f32 0.0, %v1073
        %v1075 = vpop.f32.mrb[0].mxu0
        %1076 = vmatprep.mubr.f32.mxu0 0.0
        %1077 = vmatmul.mubr.f32.gmra.mrb[0].mxu0 %v932
        %v1078 = vpop.f32.mrb[0].mxu0
        %v1079 = vadd.f32 0.0, %v1078
        %v1080 = vpop.f32.mrb[0].mxu0
        %1081 = vmatprep.mubr.f32.mxu0 0.0
        %1082 = vmatmul.mubr.f32.gmra.mrb[0].mxu0 %v933
        %v1083 = vpop.f32.mrb[0].mxu0
        %v1084 = vadd.f32 0.0, %v1083
        %v1085 = vpop.f32.mrb[0].mxu0
        %1086 = vmatprep.mubr.f32.mxu0 0.0
        %1087 = vmatmul.mubr.f32.gmra.mrb[0].mxu0 %v934
        %v1088 = vpop.f32.mrb[0].mxu0
        %v1089 = vadd.f32 0.0, %v1088
        %v1090 = vpop.f32.mrb[0].mxu0
        %1091 = vmatprep.mubr.f32.mxu0 0.0
        %1092 = vmatmul.mubr.f32.gmra.mrb[0].mxu0 %v935
        %v1093 = vpop.f32.mrb[0].mxu0
        %v1094 = vadd.f32 0.0, %v1093
        %v1095 = vpop.f32.mrb[0].mxu0
        %1096 = vmatprep.mubr.f32.mxu0 0.0
        %1097 = vmatmul.mubr.f32.gmra.mrb[0].mxu0 %v936
        %v1098 = vpop.f32.mrb[0].mxu0
        %v1099 = vadd.f32 0.0, %v1098
        %v1100 = vpop.f32.mrb[0].mxu0
        %1101 = vmatprep.mubr.f32.mxu0 0.0
        %1102 = vmatmul.mubr.f32.gmra.mrb[0].mxu0 %v937
        %v1103 = vpop.f32.mrb[0].mxu0
        %v1104 = vadd.f32 0.0, %v1103
        %v1105 = vpop.f32.mrb[0].mxu0
        %1106 = vmatprep.mubr.f32.mxu0 0.0
        %1107 = vmatmul.mubr.f32.gmra.mrb[0].mxu0 %v938
        %v1108 = vpop.f32.mrb[0].mxu0
        %v1109 = vadd.f32 0.0, %v1108
        %v1110 = vpop.f32.mrb[0].mxu0
        %1111 = vmatprep.mubr.f32.mxu0 0.0
        %1112 = vmatmul.mubr.f32.gmra.mrb[0].mxu0 %v939
        %v1113 = vpop.f32.mrb[0].mxu0
        %v1114 = vadd.f32 0.0, %v1113
        %v1115 = vpop.f32.mrb[0].mxu0
        %1116 = vmatprep.mubr.f32.mxu0 0.0
        %1117 = vmatmul.mubr.f32.gmra.mrb[0].mxu0 %v940
        %v1118 = vpop.f32.mrb[0].mxu0
        %v1119 = vadd.f32 0.0, %v1118
        %v1120 = vpop.f32.mrb[0].mxu0
        %1121 = vmatprep.mubr.f32.mxu0 0.0
        %1122 = vmatmul.mubr.f32.gmra.mrb[0].mxu0 %v941
        %v1123 = vpop.f32.mrb[0].mxu0
        %v1124 = vadd.f32 0.0, %v1123
        %v1125 = vpop.f32.mrb[0].mxu0
        %1126 = vmatprep.mubr.f32.mxu0 0.0
        %1127 = vmatmul.mubr.f32.gmra.mrb[0].mxu0 %v942
        %v1128 = vpop.f32.mrb[0].mxu0
        %v1129 = vadd.f32 0.0, %v1128
        %v1130 = vpop.f32.mrb[0].mxu0
        %1131 = vmatprep.mubr.f32.mxu0 0.0
        %1132 = vmatmul.mubr.f32.gmra.mrb[0].mxu0 %v943
        %v1133 = vpop.f32.mrb[0].mxu0
        %v1134 = vadd.f32 0.0, %v1133
        %v1135 = vpop.f32.mrb[0].mxu0
        %1136 = vmatprep.mubr.f32.mxu0 0.0
        %1137 = vmatmul.mubr.f32.gmra.mrb[0].mxu0 %v944
        %v1138 = vpop.f32.mrb[0].mxu0
        %v1139 = vadd.f32 0.0, %v1138
        %v1140 = vpop.f32.mrb[0].mxu0
        %1141 = vmatprep.mubr.f32.mxu0 0.0
        %1142 = vmatmul.mubr.f32.gmra.mrb[0].mxu0 %v945
        %v1143 = vpop.f32.mrb[0].mxu0
        %v1144 = vadd.f32 0.0, %v1143
        %v1145 = vpop.f32.mrb[0].mxu0
        %1146 = vmatprep.mubr.f32.mxu0 0.0
        %1147 = vmatmul.mubr.f32.gmra.mrb[0].mxu0 %v946
        %v1148 = vpop.f32.mrb[0].mxu0
        %v1149 = vadd.f32 0.0, %v1148
        %v1150 = vpop.f32.mrb[0].mxu0
        %1151 = vmatprep.mubr.f32.mxu0 0.0
        %1152 = vmatmul.mubr.f32.gmra.mrb[0].mxu0 %v947
        %v1153 = vpop.f32.mrb[0].mxu0
        %v1154 = vadd.f32 0.0, %v1153
        %v1155 = vpop.f32.mrb[0].mxu0
        %1156 = vmatprep.mubr.f32.mxu0 0.0
        %1157 = vmatmul.mubr.f32.gmra.mrb[0].mxu0 %v948
        %v1158 = vpop.f32.mrb[0].mxu0
        %v1159 = vadd.f32 0.0, %v1158
        %v1160 = vpop.f32.mrb[0].mxu0
        %1161 = vmatprep.mubr.f32.mxu0 0.0
        %1162 = vmatmul.mubr.f32.gmra.mrb[0].mxu0 %v949
        %v1163 = vpop.f32.mrb[0].mxu0
        %v1164 = vadd.f32 0.0, %v1163
        %v1165 = vpop.f32.mrb[0].mxu0
        %1166 = vmatprep.mubr.f32.mxu0 0.0
        %1167 = vmatmul.mubr.f32.gmra.mrb[0].mxu0 %v950
        %v1168 = vpop.f32.mrb[0].mxu0
        %v1169 = vadd.f32 0.0, %v1168
        %v1170 = vpop.f32.mrb[0].mxu0
        %1171 = vmatprep.mubr.f32.mxu0 0.0
        %1172 = vmatmul.mubr.f32.gmra.mrb[0].mxu0 %v951
        %v1173 = vpop.f32.mrb[0].mxu0
        %v1174 = vadd.f32 0.0, %v1173
        %v1175 = vpop.f32.mrb[0].mxu0
        %1176 = vmatprep.mubr.f32.mxu0 0.0
        %1177 = vmatmul.mubr.f32.gmra.mrb[0].mxu0 %v952
        %v1178 = vpop.f32.mrb[0].mxu0
        %v1179 = vadd.f32 0.0, %v1178
        %v1180 = vpop.f32.mrb[0].mxu0
        %1181 = vmatprep.mubr.f32.mxu0 0.0
        %1182 = vmatmul.mubr.f32.gmra.mrb[0].mxu0 %v953
        %v1183 = vpop.f32.mrb[0].mxu0
        %v1184 = vadd.f32 0.0, %v1183
        %v1185 = vpop.f32.mrb[0].mxu0
        %1186 = vmatprep.mubr.f32.mxu0 0.0
        %1187 = vmatmul.mubr.f32.gmra.mrb[0].mxu0 %v954
        %v1188 = vpop.f32.mrb[0].mxu0
        %v1189 = vadd.f32 0.0, %v1188
        %v1190 = vpop.f32.mrb[0].mxu0
        %1191 = vmatprep.mubr.f32.mxu0 0.0
        %1192 = vmatmul.mubr.f32.gmra.mrb[0].mxu0 %v955
        %v1193 = vpop.f32.mrb[0].mxu0
        %v1194 = vadd.f32 0.0, %v1193
        %v1195 = vpop.f32.mrb[0].mxu0
        %1196 = vdwg.mxu0
        %v1197 = vadd.f32 %v766, %v1039
        %v1198 = vadd.f32 %v771, %v1044
        %v1199 = vadd.f32 %v776, %v1049
        %v1200 = vadd.f32 %v781, %v1054
        %v1201 = vadd.f32 %v786, %v1059
        %v1202 = vadd.f32 %v791, %v1064
        %v1203 = vadd.f32 %v796, %v1069
        %v1204 = vadd.f32 %v801, %v1074
        %v1205 = vadd.f32 %v806, %v1079
        %v1206 = vadd.f32 %v811, %v1084
        %v1207 = vadd.f32 %v816, %v1089
        %v1208 = vadd.f32 %v821, %v1094
        %v1209 = vadd.f32 %v826, %v1099
        %v1210 = vadd.f32 %v831, %v1104
        %v1211 = vadd.f32 %v836, %v1109
        %v1212 = vadd.f32 %v841, %v1114
        %v1213 = vadd.f32 %v846, %v1119
        %v1214 = vadd.f32 %v851, %v1124
        %v1215 = vadd.f32 %v856, %v1129
        %v1216 = vadd.f32 %v861, %v1134
        %v1217 = vadd.f32 %v866, %v1139
        %v1218 = vadd.f32 %v871, %v1144
        %v1219 = vadd.f32 %v876, %v1149
        %v1220 = vadd.f32 %v881, %v1154
        %v1221 = vadd.f32 %v886, %v1159
        %v1222 = vadd.f32 %v891, %v1164
        %v1223 = vadd.f32 %v896, %v1169
        %v1224 = vadd.f32 %v901, %v1174
        %v1225 = vadd.f32 %v906, %v1179
        %v1226 = vadd.f32 %v911, %v1184
        %v1227 = vadd.f32 %v916, %v1189
        %v1228 = vadd.f32 %v921, %v1194
        %v1229 = vld [vmem:[%s281 + $0x7] sm:$0xff]
        %v1230 = vld [vmem:[%s281 + $0xf] sm:$0xff]
        %v1231 = vld [vmem:[%s281 + $0x27] sm:$0xff]
        %v1232 = vld [vmem:[%s281 + $0x2f] sm:$0xff]
        %v1233 = vld [vmem:[%s281 + $0x47] sm:$0xff]
        %v1234 = vld [vmem:[%s281 + $0x4f] sm:$0xff]
        %v1235 = vld [vmem:[%s281 + $0x67] sm:$0xff]
        %v1236 = vld [vmem:[%s281 + $0x6f] sm:$0xff]
        %v1237 = vld [vmem:[%s281 + $0x87] sm:$0xff]
        %v1238 = vld [vmem:[%s281 + $0x8f] sm:$0xff]
        %v1239 = vld [vmem:[%s281 + $0xa7] sm:$0xff]
        %v1240 = vld [vmem:[%s281 + $0xaf] sm:$0xff]
        %v1241 = vld [vmem:[%s281 + $0xc7] sm:$0xff]
        %v1242 = vld [vmem:[%s281 + $0xcf] sm:$0xff]
        %v1243 = vld [vmem:[%s281 + $0xe7] sm:$0xff]
        %v1244 = vld [vmem:[%s281 + $0xef] sm:$0xff]
        %v1245 = vld [vmem:[%s281 + $0x107] sm:$0xff]
        %v1246 = vld [vmem:[%s281 + $0x10f] sm:$0xff]
        %v1247 = vld [vmem:[%s281 + $0x127] sm:$0xff]
        %v1248 = vld [vmem:[%s281 + $0x12f] sm:$0xff]
        %v1249 = vld [vmem:[%s281 + $0x147] sm:$0xff]
        %v1250 = vld [vmem:[%s281 + $0x14f] sm:$0xff]
        %v1251 = vld [vmem:[%s281 + $0x167] sm:$0xff]
        %v1252 = vld [vmem:[%s281 + $0x16f] sm:$0xff]
        %v1253 = vld [vmem:[%s281 + $0x187] sm:$0xff]
        %v1254 = vld [vmem:[%s281 + $0x18f] sm:$0xff]
        %v1255 = vld [vmem:[%s281 + $0x1a7] sm:$0xff]
        %v1256 = vld [vmem:[%s281 + $0x1af] sm:$0xff]
        %v1257 = vld [vmem:[%s281 + $0x1c7] sm:$0xff]
        %v1258 = vld [vmem:[%s281 + $0x1cf] sm:$0xff]
        %v1259 = vld [vmem:[%s281 + $0x1e7] sm:$0xff]
        %v1260 = vld [vmem:[%s281 + $0x1ef] sm:$0xff]
        %v1261 = vld [vmem:[#allocation6 + $0x180] sm:$0xff]
        %v1262 = vld [vmem:[#allocation6 + $0x188] sm:$0xff]
        %v1263 = vld [vmem:[#allocation6 + $0x190] sm:$0xff]
        %v1264 = vld [vmem:[#allocation6 + $0x198] sm:$0xff]
        %v1265 = vld [vmem:[#allocation6 + $0x1a0] sm:$0xff]
        %v1266 = vld [vmem:[#allocation6 + $0x1a8] sm:$0xff]
        %v1267 = vld [vmem:[#allocation6 + $0x1b0] sm:$0xff]
        %v1268 = vld [vmem:[#allocation6 + $0x1b8] sm:$0xff]
        %v1269 = vld [vmem:[#allocation6 + $0x1c0] sm:$0xff]
        %v1270 = vld [vmem:[#allocation6 + $0x1c8] sm:$0xff]
        %v1271 = vld [vmem:[#allocation6 + $0x1d0] sm:$0xff]
        %v1272 = vld [vmem:[#allocation6 + $0x1d8] sm:$0xff]
        %v1273 = vld [vmem:[#allocation6 + $0x1e0] sm:$0xff]
        %v1274 = vld [vmem:[#allocation6 + $0x1e8] sm:$0xff]
        %v1275 = vld [vmem:[#allocation6 + $0x1f0] sm:$0xff]
        %v1276 = vld [vmem:[#allocation6 + $0x1f8] sm:$0xff]
        %1277 = vmatprep.subr.mxu0 0.0
        %1278 = vmatpush1.msra.mxu0 %v1261
        %1279 = vmatprep.subr.mxu0 0.0
        %1280 = vmatpush1.msra.mxu0 %v1262
        %1281 = vmatprep.subr.mxu0 0.0
        %1282 = vmatpush1.msra.mxu0 %v1263
        %1283 = vmatprep.subr.mxu0 0.0
        %1284 = vmatpush1.msra.mxu0 %v1264
        %1285 = vmatprep.subr.mxu0 0.0
        %1286 = vmatpush1.msra.mxu0 %v1265
        %1287 = vmatprep.subr.mxu0 0.0
        %1288 = vmatpush1.msra.mxu0 %v1266
        %1289 = vmatprep.subr.mxu0 0.0
        %1290 = vmatpush1.msra.mxu0 %v1267
        %1291 = vmatprep.subr.mxu0 0.0
        %1292 = vmatpush1.msra.mxu0 %v1268
        %1293 = vmatprep.subr.mxu0 0.0
        %1294 = vmatpush1.msra.mxu0 %v1269
        %1295 = vmatprep.subr.mxu0 0.0
        %1296 = vmatpush1.msra.mxu0 %v1270
        %1297 = vmatprep.subr.mxu0 0.0
        %1298 = vmatpush1.msra.mxu0 %v1271
        %1299 = vmatprep.subr.mxu0 0.0
        %1300 = vmatpush1.msra.mxu0 %v1272
        %1301 = vmatprep.subr.mxu0 0.0
        %1302 = vmatpush1.msra.mxu0 %v1273
        %1303 = vmatprep.subr.mxu0 0.0
        %1304 = vmatpush1.msra.mxu0 %v1274
        %1305 = vmatprep.subr.mxu0 0.0
        %1306 = vmatpush1.msra.mxu0 %v1275
        %1307 = vmatprep.subr.mxu0 0.0
        %1308 = vmatpush1.msra.mxu0 %v1276
        %1309 = vmatprep.subr.mxu0 0.0
        %1310 = vmatpush1.msra.mxu0 0.0
        %1311 = vmatprep.subr.mxu0 0.0
        %1312 = vmatpush1.msra.mxu0 0.0
        %1313 = vmatprep.subr.mxu0 0.0
        %1314 = vmatpush1.msra.mxu0 0.0
        %1315 = vmatprep.subr.mxu0 0.0
        %1316 = vmatpush1.msra.mxu0 0.0
        %1317 = vmatprep.subr.mxu0 0.0
        %1318 = vmatpush1.msra.mxu0 0.0
        %1319 = vmatprep.subr.mxu0 0.0
        %1320 = vmatpush1.msra.mxu0 0.0
        %1321 = vmatprep.subr.mxu0 0.0
        %1322 = vmatpush1.msra.mxu0 0.0
        %1323 = vmatprep.subr.mxu0 0.0
        %1324 = vmatpush1.msra.mxu0 0.0
        %1325 = vmatprep.subr.mxu0 0.0
        %1326 = vmatpush1.msra.mxu0 0.0
        %1327 = vmatprep.subr.mxu0 0.0
        %1328 = vmatpush1.msra.mxu0 0.0
        %1329 = vmatprep.subr.mxu0 0.0
        %1330 = vmatpush1.msra.mxu0 0.0
        %1331 = vmatprep.subr.mxu0 0.0
        %1332 = vmatpush1.msra.mxu0 0.0
        %1333 = vmatprep.subr.mxu0 0.0
        %1334 = vmatpush1.msra.mxu0 0.0
        %1335 = vmatprep.subr.mxu0 0.0
        %1336 = vmatpush1.msra.mxu0 0.0
        %1337 = vmatprep.subr.mxu0 0.0
        %1338 = vmatpush1.msra.mxu0 0.0
        %1339 = vmatprep.subr.mxu0 0.0
        %1340 = vmatpush1.msra.mxu0 0.0
        %1341 = vmatprep.mubr.f32.mxu0 0.0
        %1342 = vmatmul.mubr.f32.gmra.mrb[0].mxu0 %v1229
        %v1343 = vpop.f32.mrb[0].mxu0
        %v1344 = vadd.f32 0.0, %v1343
        %v1345 = vpop.f32.mrb[0].mxu0
        %1346 = vmatprep.mubr.f32.mxu0 0.0
        %1347 = vmatmul.mubr.f32.gmra.mrb[0].mxu0 %v1230
        %v1348 = vpop.f32.mrb[0].mxu0
        %v1349 = vadd.f32 0.0, %v1348
        %v1350 = vpop.f32.mrb[0].mxu0
        %1351 = vmatprep.mubr.f32.mxu0 0.0
        %1352 = vmatmul.mubr.f32.gmra.mrb[0].mxu0 %v1231
        %v1353 = vpop.f32.mrb[0].mxu0
        %v1354 = vadd.f32 0.0, %v1353
        %v1355 = vpop.f32.mrb[0].mxu0
        %1356 = vmatprep.mubr.f32.mxu0 0.0
        %1357 = vmatmul.mubr.f32.gmra.mrb[0].mxu0 %v1232
        %v1358 = vpop.f32.mrb[0].mxu0
        %v1359 = vadd.f32 0.0, %v1358
        %v1360 = vpop.f32.mrb[0].mxu0
        %1361 = vmatprep.mubr.f32.mxu0 0.0
        %1362 = vmatmul.mubr.f32.gmra.mrb[0].mxu0 %v1233
        %v1363 = vpop.f32.mrb[0].mxu0
        %v1364 = vadd.f32 0.0, %v1363
        %v1365 = vpop.f32.mrb[0].mxu0
        %1366 = vmatprep.mubr.f32.mxu0 0.0
        %1367 = vmatmul.mubr.f32.gmra.mrb[0].mxu0 %v1234
        %v1368 = vpop.f32.mrb[0].mxu0
        %v1369 = vadd.f32 0.0, %v1368
        %v1370 = vpop.f32.mrb[0].mxu0
        %1371 = vmatprep.mubr.f32.mxu0 0.0
        %1372 = vmatmul.mubr.f32.gmra.mrb[0].mxu0 %v1235
        %v1373 = vpop.f32.mrb[0].mxu0
        %v1374 = vadd.f32 0.0, %v1373
        %v1375 = vpop.f32.mrb[0].mxu0
        %1376 = vmatprep.mubr.f32.mxu0 0.0
        %1377 = vmatmul.mubr.f32.gmra.mrb[0].mxu0 %v1236
        %v1378 = vpop.f32.mrb[0].mxu0
        %v1379 = vadd.f32 0.0, %v1378
        %v1380 = vpop.f32.mrb[0].mxu0
        %1381 = vmatprep.mubr.f32.mxu0 0.0
        %1382 = vmatmul.mubr.f32.gmra.mrb[0].mxu0 %v1237
        %v1383 = vpop.f32.mrb[0].mxu0
        %v1384 = vadd.f32 0.0, %v1383
        %v1385 = vpop.f32.mrb[0].mxu0
        %1386 = vmatprep.mubr.f32.mxu0 0.0
        %1387 = vmatmul.mubr.f32.gmra.mrb[0].mxu0 %v1238
        %v1388 = vpop.f32.mrb[0].mxu0
        %v1389 = vadd.f32 0.0, %v1388
        %v1390 = vpop.f32.mrb[0].mxu0
        %1391 = vmatprep.mubr.f32.mxu0 0.0
        %1392 = vmatmul.mubr.f32.gmra.mrb[0].mxu0 %v1239
        %v1393 = vpop.f32.mrb[0].mxu0
        %v1394 = vadd.f32 0.0, %v1393
        %v1395 = vpop.f32.mrb[0].mxu0
        %1396 = vmatprep.mubr.f32.mxu0 0.0
        %1397 = vmatmul.mubr.f32.gmra.mrb[0].mxu0 %v1240
        %v1398 = vpop.f32.mrb[0].mxu0
        %v1399 = vadd.f32 0.0, %v1398
        %v1400 = vpop.f32.mrb[0].mxu0
        %1401 = vmatprep.mubr.f32.mxu0 0.0
        %1402 = vmatmul.mubr.f32.gmra.mrb[0].mxu0 %v1241
        %v1403 = vpop.f32.mrb[0].mxu0
        %v1404 = vadd.f32 0.0, %v1403
        %v1405 = vpop.f32.mrb[0].mxu0
        %1406 = vmatprep.mubr.f32.mxu0 0.0
        %1407 = vmatmul.mubr.f32.gmra.mrb[0].mxu0 %v1242
        %v1408 = vpop.f32.mrb[0].mxu0
        %v1409 = vadd.f32 0.0, %v1408
        %v1410 = vpop.f32.mrb[0].mxu0
        %1411 = vmatprep.mubr.f32.mxu0 0.0
        %1412 = vmatmul.mubr.f32.gmra.mrb[0].mxu0 %v1243
        %v1413 = vpop.f32.mrb[0].mxu0
        %v1414 = vadd.f32 0.0, %v1413
        %v1415 = vpop.f32.mrb[0].mxu0
        %1416 = vmatprep.mubr.f32.mxu0 0.0
        %1417 = vmatmul.mubr.f32.gmra.mrb[0].mxu0 %v1244
        %v1418 = vpop.f32.mrb[0].mxu0
        %v1419 = vadd.f32 0.0, %v1418
        %v1420 = vpop.f32.mrb[0].mxu0
        %1421 = vmatprep.mubr.f32.mxu0 0.0
        %1422 = vmatmul.mubr.f32.gmra.mrb[0].mxu0 %v1245
        %v1423 = vpop.f32.mrb[0].mxu0
        %v1424 = vadd.f32 0.0, %v1423
        %v1425 = vpop.f32.mrb[0].mxu0
        %1426 = vmatprep.mubr.f32.mxu0 0.0
        %1427 = vmatmul.mubr.f32.gmra.mrb[0].mxu0 %v1246
        %v1428 = vpop.f32.mrb[0].mxu0
        %v1429 = vadd.f32 0.0, %v1428
        %v1430 = vpop.f32.mrb[0].mxu0
        %1431 = vmatprep.mubr.f32.mxu0 0.0
        %1432 = vmatmul.mubr.f32.gmra.mrb[0].mxu0 %v1247
        %v1433 = vpop.f32.mrb[0].mxu0
        %v1434 = vadd.f32 0.0, %v1433
        %v1435 = vpop.f32.mrb[0].mxu0
        %1436 = vmatprep.mubr.f32.mxu0 0.0
        %1437 = vmatmul.mubr.f32.gmra.mrb[0].mxu0 %v1248
        %v1438 = vpop.f32.mrb[0].mxu0
        %v1439 = vadd.f32 0.0, %v1438
        %v1440 = vpop.f32.mrb[0].mxu0
        %1441 = vmatprep.mubr.f32.mxu0 0.0
        %1442 = vmatmul.mubr.f32.gmra.mrb[0].mxu0 %v1249
        %v1443 = vpop.f32.mrb[0].mxu0
        %v1444 = vadd.f32 0.0, %v1443
        %v1445 = vpop.f32.mrb[0].mxu0
        %1446 = vmatprep.mubr.f32.mxu0 0.0
        %1447 = vmatmul.mubr.f32.gmra.mrb[0].mxu0 %v1250
        %v1448 = vpop.f32.mrb[0].mxu0
        %v1449 = vadd.f32 0.0, %v1448
        %v1450 = vpop.f32.mrb[0].mxu0
        %1451 = vmatprep.mubr.f32.mxu0 0.0
        %1452 = vmatmul.mubr.f32.gmra.mrb[0].mxu0 %v1251
        %v1453 = vpop.f32.mrb[0].mxu0
        %v1454 = vadd.f32 0.0, %v1453
        %v1455 = vpop.f32.mrb[0].mxu0
        %1456 = vmatprep.mubr.f32.mxu0 0.0
        %1457 = vmatmul.mubr.f32.gmra.mrb[0].mxu0 %v1252
        %v1458 = vpop.f32.mrb[0].mxu0
        %v1459 = vadd.f32 0.0, %v1458
        %v1460 = vpop.f32.mrb[0].mxu0
        %1461 = vmatprep.mubr.f32.mxu0 0.0
        %1462 = vmatmul.mubr.f32.gmra.mrb[0].mxu0 %v1253
        %v1463 = vpop.f32.mrb[0].mxu0
        %v1464 = vadd.f32 0.0, %v1463
        %v1465 = vpop.f32.mrb[0].mxu0
        %1466 = vmatprep.mubr.f32.mxu0 0.0
        %1467 = vmatmul.mubr.f32.gmra.mrb[0].mxu0 %v1254
        %v1468 = vpop.f32.mrb[0].mxu0
        %v1469 = vadd.f32 0.0, %v1468
        %v1470 = vpop.f32.mrb[0].mxu0
        %1471 = vmatprep.mubr.f32.mxu0 0.0
        %1472 = vmatmul.mubr.f32.gmra.mrb[0].mxu0 %v1255
        %v1473 = vpop.f32.mrb[0].mxu0
        %v1474 = vadd.f32 0.0, %v1473
        %v1475 = vpop.f32.mrb[0].mxu0
        %1476 = vmatprep.mubr.f32.mxu0 0.0
        %1477 = vmatmul.mubr.f32.gmra.mrb[0].mxu0 %v1256
        %v1478 = vpop.f32.mrb[0].mxu0
        %v1479 = vadd.f32 0.0, %v1478
        %v1480 = vpop.f32.mrb[0].mxu0
        %1481 = vmatprep.mubr.f32.mxu0 0.0
        %1482 = vmatmul.mubr.f32.gmra.mrb[0].mxu0 %v1257
        %v1483 = vpop.f32.mrb[0].mxu0
        %v1484 = vadd.f32 0.0, %v1483
        %v1485 = vpop.f32.mrb[0].mxu0
        %1486 = vmatprep.mubr.f32.mxu0 0.0
        %1487 = vmatmul.mubr.f32.gmra.mrb[0].mxu0 %v1258
        %v1488 = vpop.f32.mrb[0].mxu0
        %v1489 = vadd.f32 0.0, %v1488
        %v1490 = vpop.f32.mrb[0].mxu0
        %1491 = vmatprep.mubr.f32.mxu0 0.0
        %1492 = vmatmul.mubr.f32.gmra.mrb[0].mxu0 %v1259
        %v1493 = vpop.f32.mrb[0].mxu0
        %v1494 = vadd.f32 0.0, %v1493
        %v1495 = vpop.f32.mrb[0].mxu0
        %1496 = vmatprep.mubr.f32.mxu0 0.0
        %1497 = vmatmul.mubr.f32.gmra.mrb[0].mxu0 %v1260
        %v1498 = vpop.f32.mrb[0].mxu0
        %v1499 = vadd.f32 0.0, %v1498
        %v1500 = vpop.f32.mrb[0].mxu0
        %1501 = vdwg.mxu0
        %v1502 = vadd.f32 %v1197, %v1344
        %v1503 = vadd.f32 %v1198, %v1349
        %v1504 = vadd.f32 %v1199, %v1354
        %v1505 = vadd.f32 %v1200, %v1359
        %v1506 = vadd.f32 %v1201, %v1364
        %v1507 = vadd.f32 %v1202, %v1369
        %v1508 = vadd.f32 %v1203, %v1374
        %v1509 = vadd.f32 %v1204, %v1379
        %v1510 = vadd.f32 %v1205, %v1384
        %v1511 = vadd.f32 %v1206, %v1389
        %v1512 = vadd.f32 %v1207, %v1394
        %v1513 = vadd.f32 %v1208, %v1399
        %v1514 = vadd.f32 %v1209, %v1404
        %v1515 = vadd.f32 %v1210, %v1409
        %v1516 = vadd.f32 %v1211, %v1414
        %v1517 = vadd.f32 %v1212, %v1419
        %v1518 = vadd.f32 %v1213, %v1424
        %v1519 = vadd.f32 %v1214, %v1429
        %v1520 = vadd.f32 %v1215, %v1434
        %v1521 = vadd.f32 %v1216, %v1439
        %v1522 = vadd.f32 %v1217, %v1444
        %v1523 = vadd.f32 %v1218, %v1449
        %v1524 = vadd.f32 %v1219, %v1454
        %v1525 = vadd.f32 %v1220, %v1459
        %v1526 = vadd.f32 %v1221, %v1464
        %v1527 = vadd.f32 %v1222, %v1469
        %v1528 = vadd.f32 %v1223, %v1474
        %v1529 = vadd.f32 %v1224, %v1479
        %v1530 = vadd.f32 %v1225, %v1484
        %v1531 = vadd.f32 %v1226, %v1489
        %v1532 = vadd.f32 %v1227, %v1494
        %v1533 = vadd.f32 %v1228, %v1499
        %v1534 = vld [vmem:[%s281 + $0x8] sm:$0xff]
        %v1535 = vld [vmem:[%s281 + $0x10] sm:$0xff]
        %v1536 = vld [vmem:[%s281 + $0x28] sm:$0xff]
        %v1537 = vld [vmem:[%s281 + $0x30] sm:$0xff]
        %v1538 = vld [vmem:[%s281 + $0x48] sm:$0xff]
        %v1539 = vld [vmem:[%s281 + $0x50] sm:$0xff]
        %v1540 = vld [vmem:[%s281 + $0x68] sm:$0xff]
        %v1541 = vld [vmem:[%s281 + $0x70] sm:$0xff]
        %v1542 = vld [vmem:[%s281 + $0x88] sm:$0xff]
        %v1543 = vld [vmem:[%s281 + $0x90] sm:$0xff]
        %v1544 = vld [vmem:[%s281 + $0xa8] sm:$0xff]
        %v1545 = vld [vmem:[%s281 + $0xb0] sm:$0xff]
        %v1546 = vld [vmem:[%s281 + $0xc8] sm:$0xff]
        %v1547 = vld [vmem:[%s281 + $0xd0] sm:$0xff]
        %v1548 = vld [vmem:[%s281 + $0xe8] sm:$0xff]
        %v1549 = vld [vmem:[%s281 + $0xf0] sm:$0xff]
        %v1550 = vld [vmem:[%s281 + $0x108] sm:$0xff]
        %v1551 = vld [vmem:[%s281 + $0x110] sm:$0xff]
        %v1552 = vld [vmem:[%s281 + $0x128] sm:$0xff]
        %v1553 = vld [vmem:[%s281 + $0x130] sm:$0xff]
        %v1554 = vld [vmem:[%s281 + $0x148] sm:$0xff]
        %v1555 = vld [vmem:[%s281 + $0x150] sm:$0xff]
        %v1556 = vld [vmem:[%s281 + $0x168] sm:$0xff]
        %v1557 = vld [vmem:[%s281 + $0x170] sm:$0xff]
        %v1558 = vld [vmem:[%s281 + $0x188] sm:$0xff]
        %v1559 = vld [vmem:[%s281 + $0x190] sm:$0xff]
        %v1560 = vld [vmem:[%s281 + $0x1a8] sm:$0xff]
        %v1561 = vld [vmem:[%s281 + $0x1b0] sm:$0xff]
        %v1562 = vld [vmem:[%s281 + $0x1c8] sm:$0xff]
        %v1563 = vld [vmem:[%s281 + $0x1d0] sm:$0xff]
        %v1564 = vld [vmem:[%s281 + $0x1e8] sm:$0xff]
        %v1565 = vld [vmem:[%s281 + $0x1f0] sm:$0xff]
        %v1566 = vld [vmem:[#allocation6 + $0x200] sm:$0xff]
        %v1567 = vld [vmem:[#allocation6 + $0x208] sm:$0xff]
        %v1568 = vld [vmem:[#allocation6 + $0x210] sm:$0xff]
        %v1569 = vld [vmem:[#allocation6 + $0x218] sm:$0xff]
        %v1570 = vld [vmem:[#allocation6 + $0x220] sm:$0xff]
        %v1571 = vld [vmem:[#allocation6 + $0x228] sm:$0xff]
        %v1572 = vld [vmem:[#allocation6 + $0x230] sm:$0xff]
        %v1573 = vld [vmem:[#allocation6 + $0x238] sm:$0xff]
        %v1574 = vld [vmem:[#allocation6 + $0x240] sm:$0xff]
        %v1575 = vld [vmem:[#allocation6 + $0x248] sm:$0xff]
        %v1576 = vld [vmem:[#allocation6 + $0x250] sm:$0xff]
        %v1577 = vld [vmem:[#allocation6 + $0x258] sm:$0xff]
        %v1578 = vld [vmem:[#allocation6 + $0x260] sm:$0xff]
        %v1579 = vld [vmem:[#allocation6 + $0x268] sm:$0xff]
        %v1580 = vld [vmem:[#allocation6 + $0x270] sm:$0xff]
        %v1581 = vld [vmem:[#allocation6 + $0x278] sm:$0xff]
        %1582 = vmatprep.subr.mxu0 0.0
        %1583 = vmatpush1.msra.mxu0 %v1566
        %1584 = vmatprep.subr.mxu0 0.0
        %1585 = vmatpush1.msra.mxu0 %v1567
        %1586 = vmatprep.subr.mxu0 0.0
        %1587 = vmatpush1.msra.mxu0 %v1568
        %1588 = vmatprep.subr.mxu0 0.0
        %1589 = vmatpush1.msra.mxu0 %v1569
        %1590 = vmatprep.subr.mxu0 0.0
        %1591 = vmatpush1.msra.mxu0 %v1570
        %1592 = vmatprep.subr.mxu0 0.0
        %1593 = vmatpush1.msra.mxu0 %v1571
        %1594 = vmatprep.subr.mxu0 0.0
        %1595 = vmatpush1.msra.mxu0 %v1572
        %1596 = vmatprep.subr.mxu0 0.0
        %1597 = vmatpush1.msra.mxu0 %v1573
        %1598 = vmatprep.subr.mxu0 0.0
        %1599 = vmatpush1.msra.mxu0 %v1574
        %1600 = vmatprep.subr.mxu0 0.0
        %1601 = vmatpush1.msra.mxu0 %v1575
        %1602 = vmatprep.subr.mxu0 0.0
        %1603 = vmatpush1.msra.mxu0 %v1576
        %1604 = vmatprep.subr.mxu0 0.0
        %1605 = vmatpush1.msra.mxu0 %v1577
        %1606 = vmatprep.subr.mxu0 0.0
        %1607 = vmatpush1.msra.mxu0 %v1578
        %1608 = vmatprep.subr.mxu0 0.0
        %1609 = vmatpush1.msra.mxu0 %v1579
        %1610 = vmatprep.subr.mxu0 0.0
        %1611 = vmatpush1.msra.mxu0 %v1580
        %1612 = vmatprep.subr.mxu0 0.0
        %1613 = vmatpush1.msra.mxu0 %v1581
        %1614 = vmatprep.subr.mxu0 0.0
        %1615 = vmatpush1.msra.mxu0 0.0
        %1616 = vmatprep.subr.mxu0 0.0
        %1617 = vmatpush1.msra.mxu0 0.0
        %1618 = vmatprep.subr.mxu0 0.0
        %1619 = vmatpush1.msra.mxu0 0.0
        %1620 = vmatprep.subr.mxu0 0.0
        %1621 = vmatpush1.msra.mxu0 0.0
        %1622 = vmatprep.subr.mxu0 0.0
        %1623 = vmatpush1.msra.mxu0 0.0
        %1624 = vmatprep.subr.mxu0 0.0
        %1625 = vmatpush1.msra.mxu0 0.0
        %1626 = vmatprep.subr.mxu0 0.0
        %1627 = vmatpush1.msra.mxu0 0.0
        %1628 = vmatprep.subr.mxu0 0.0
        %1629 = vmatpush1.msra.mxu0 0.0
        %1630 = vmatprep.subr.mxu0 0.0
        %1631 = vmatpush1.msra.mxu0 0.0
        %1632 = vmatprep.subr.mxu0 0.0
        %1633 = vmatpush1.msra.mxu0 0.0
        %1634 = vmatprep.subr.mxu0 0.0
        %1635 = vmatpush1.msra.mxu0 0.0
        %1636 = vmatprep.subr.mxu0 0.0
        %1637 = vmatpush1.msra.mxu0 0.0
        %1638 = vmatprep.subr.mxu0 0.0
        %1639 = vmatpush1.msra.mxu0 0.0
        %1640 = vmatprep.subr.mxu0 0.0
        %1641 = vmatpush1.msra.mxu0 0.0
        %1642 = vmatprep.subr.mxu0 0.0
        %1643 = vmatpush1.msra.mxu0 0.0
        %1644 = vmatprep.subr.mxu0 0.0
        %1645 = vmatpush1.msra.mxu0 0.0
        %1646 = vmatprep.mubr.f32.mxu0 0.0
        %1647 = vmatmul.mubr.f32.gmra.mrb[0].mxu0 %v1534
        %v1648 = vpop.f32.mrb[0].mxu0
        %v1649 = vadd.f32 0.0, %v1648
        %v1650 = vpop.f32.mrb[0].mxu0
        %1651 = vmatprep.mubr.f32.mxu0 0.0
        %1652 = vmatmul.mubr.f32.gmra.mrb[0].mxu0 %v1535
        %v1653 = vpop.f32.mrb[0].mxu0
        %v1654 = vadd.f32 0.0, %v1653
        %v1655 = vpop.f32.mrb[0].mxu0
        %1656 = vmatprep.mubr.f32.mxu0 0.0
        %1657 = vmatmul.mubr.f32.gmra.mrb[0].mxu0 %v1536
        %v1658 = vpop.f32.mrb[0].mxu0
        %v1659 = vadd.f32 0.0, %v1658
        %v1660 = vpop.f32.mrb[0].mxu0
        %1661 = vmatprep.mubr.f32.mxu0 0.0
        %1662 = vmatmul.mubr.f32.gmra.mrb[0].mxu0 %v1537
        %v1663 = vpop.f32.mrb[0].mxu0
        %v1664 = vadd.f32 0.0, %v1663
        %v1665 = vpop.f32.mrb[0].mxu0
        %1666 = vmatprep.mubr.f32.mxu0 0.0
        %1667 = vmatmul.mubr.f32.gmra.mrb[0].mxu0 %v1538
        %v1668 = vpop.f32.mrb[0].mxu0
        %v1669 = vadd.f32 0.0, %v1668
        %v1670 = vpop.f32.mrb[0].mxu0
        %1671 = vmatprep.mubr.f32.mxu0 0.0
        %1672 = vmatmul.mubr.f32.gmra.mrb[0].mxu0 %v1539
        %v1673 = vpop.f32.mrb[0].mxu0
        %v1674 = vadd.f32 0.0, %v1673
        %v1675 = vpop.f32.mrb[0].mxu0
        %1676 = vmatprep.mubr.f32.mxu0 0.0
        %1677 = vmatmul.mubr.f32.gmra.mrb[0].mxu0 %v1540
        %v1678 = vpop.f32.mrb[0].mxu0
        %v1679 = vadd.f32 0.0, %v1678
        %v1680 = vpop.f32.mrb[0].mxu0
        %1681 = vmatprep.mubr.f32.mxu0 0.0
        %1682 = vmatmul.mubr.f32.gmra.mrb[0].mxu0 %v1541
        %v1683 = vpop.f32.mrb[0].mxu0
        %v1684 = vadd.f32 0.0, %v1683
        %v1685 = vpop.f32.mrb[0].mxu0
        %1686 = vmatprep.mubr.f32.mxu0 0.0
        %1687 = vmatmul.mubr.f32.gmra.mrb[0].mxu0 %v1542
        %v1688 = vpop.f32.mrb[0].mxu0
        %v1689 = vadd.f32 0.0, %v1688
        %v1690 = vpop.f32.mrb[0].mxu0
        %1691 = vmatprep.mubr.f32.mxu0 0.0
        %1692 = vmatmul.mubr.f32.gmra.mrb[0].mxu0 %v1543
        %v1693 = vpop.f32.mrb[0].mxu0
        %v1694 = vadd.f32 0.0, %v1693
        %v1695 = vpop.f32.mrb[0].mxu0
        %1696 = vmatprep.mubr.f32.mxu0 0.0
        %1697 = vmatmul.mubr.f32.gmra.mrb[0].mxu0 %v1544
        %v1698 = vpop.f32.mrb[0].mxu0
        %v1699 = vadd.f32 0.0, %v1698
        %v1700 = vpop.f32.mrb[0].mxu0
        %1701 = vmatprep.mubr.f32.mxu0 0.0
        %1702 = vmatmul.mubr.f32.gmra.mrb[0].mxu0 %v1545
        %v1703 = vpop.f32.mrb[0].mxu0
        %v1704 = vadd.f32 0.0, %v1703
        %v1705 = vpop.f32.mrb[0].mxu0
        %1706 = vmatprep.mubr.f32.mxu0 0.0
        %1707 = vmatmul.mubr.f32.gmra.mrb[0].mxu0 %v1546
        %v1708 = vpop.f32.mrb[0].mxu0
        %v1709 = vadd.f32 0.0, %v1708
        %v1710 = vpop.f32.mrb[0].mxu0
        %1711 = vmatprep.mubr.f32.mxu0 0.0
        %1712 = vmatmul.mubr.f32.gmra.mrb[0].mxu0 %v1547
        %v1713 = vpop.f32.mrb[0].mxu0
        %v1714 = vadd.f32 0.0, %v1713
        %v1715 = vpop.f32.mrb[0].mxu0
        %1716 = vmatprep.mubr.f32.mxu0 0.0
        %1717 = vmatmul.mubr.f32.gmra.mrb[0].mxu0 %v1548
        %v1718 = vpop.f32.mrb[0].mxu0
        %v1719 = vadd.f32 0.0, %v1718
        %v1720 = vpop.f32.mrb[0].mxu0
        %1721 = vmatprep.mubr.f32.mxu0 0.0
        %1722 = vmatmul.mubr.f32.gmra.mrb[0].mxu0 %v1549
        %v1723 = vpop.f32.mrb[0].mxu0
        %v1724 = vadd.f32 0.0, %v1723
        %v1725 = vpop.f32.mrb[0].mxu0
        %1726 = vmatprep.mubr.f32.mxu0 0.0
        %1727 = vmatmul.mubr.f32.gmra.mrb[0].mxu0 %v1550
        %v1728 = vpop.f32.mrb[0].mxu0
        %v1729 = vadd.f32 0.0, %v1728
        %v1730 = vpop.f32.mrb[0].mxu0
        %1731 = vmatprep.mubr.f32.mxu0 0.0
        %1732 = vmatmul.mubr.f32.gmra.mrb[0].mxu0 %v1551
        %v1733 = vpop.f32.mrb[0].mxu0
        %v1734 = vadd.f32 0.0, %v1733
        %v1735 = vpop.f32.mrb[0].mxu0
        %1736 = vmatprep.mubr.f32.mxu0 0.0
        %1737 = vmatmul.mubr.f32.gmra.mrb[0].mxu0 %v1552
        %v1738 = vpop.f32.mrb[0].mxu0
        %v1739 = vadd.f32 0.0, %v1738
        %v1740 = vpop.f32.mrb[0].mxu0
        %1741 = vmatprep.mubr.f32.mxu0 0.0
        %1742 = vmatmul.mubr.f32.gmra.mrb[0].mxu0 %v1553
        %v1743 = vpop.f32.mrb[0].mxu0
        %v1744 = vadd.f32 0.0, %v1743
        %v1745 = vpop.f32.mrb[0].mxu0
        %1746 = vmatprep.mubr.f32.mxu0 0.0
        %1747 = vmatmul.mubr.f32.gmra.mrb[0].mxu0 %v1554
        %v1748 = vpop.f32.mrb[0].mxu0
        %v1749 = vadd.f32 0.0, %v1748
        %v1750 = vpop.f32.mrb[0].mxu0
        %1751 = vmatprep.mubr.f32.mxu0 0.0
        %1752 = vmatmul.mubr.f32.gmra.mrb[0].mxu0 %v1555
        %v1753 = vpop.f32.mrb[0].mxu0
        %v1754 = vadd.f32 0.0, %v1753
        %v1755 = vpop.f32.mrb[0].mxu0
        %1756 = vmatprep.mubr.f32.mxu0 0.0
        %1757 = vmatmul.mubr.f32.gmra.mrb[0].mxu0 %v1556
        %v1758 = vpop.f32.mrb[0].mxu0
        %v1759 = vadd.f32 0.0, %v1758
        %v1760 = vpop.f32.mrb[0].mxu0
        %1761 = vmatprep.mubr.f32.mxu0 0.0
        %1762 = vmatmul.mubr.f32.gmra.mrb[0].mxu0 %v1557
        %v1763 = vpop.f32.mrb[0].mxu0
        %v1764 = vadd.f32 0.0, %v1763
        %v1765 = vpop.f32.mrb[0].mxu0
        %1766 = vmatprep.mubr.f32.mxu0 0.0
        %1767 = vmatmul.mubr.f32.gmra.mrb[0].mxu0 %v1558
        %v1768 = vpop.f32.mrb[0].mxu0
        %v1769 = vadd.f32 0.0, %v1768
        %v1770 = vpop.f32.mrb[0].mxu0
        %1771 = vmatprep.mubr.f32.mxu0 0.0
        %1772 = vmatmul.mubr.f32.gmra.mrb[0].mxu0 %v1559
        %v1773 = vpop.f32.mrb[0].mxu0
        %v1774 = vadd.f32 0.0, %v1773
        %v1775 = vpop.f32.mrb[0].mxu0
        %1776 = vmatprep.mubr.f32.mxu0 0.0
        %1777 = vmatmul.mubr.f32.gmra.mrb[0].mxu0 %v1560
        %v1778 = vpop.f32.mrb[0].mxu0
        %v1779 = vadd.f32 0.0, %v1778
        %v1780 = vpop.f32.mrb[0].mxu0
        %1781 = vmatprep.mubr.f32.mxu0 0.0
        %1782 = vmatmul.mubr.f32.gmra.mrb[0].mxu0 %v1561
        %v1783 = vpop.f32.mrb[0].mxu0
        %v1784 = vadd.f32 0.0, %v1783
        %v1785 = vpop.f32.mrb[0].mxu0
        %1786 = vmatprep.mubr.f32.mxu0 0.0
        %1787 = vmatmul.mubr.f32.gmra.mrb[0].mxu0 %v1562
        %v1788 = vpop.f32.mrb[0].mxu0
        %v1789 = vadd.f32 0.0, %v1788
        %v1790 = vpop.f32.mrb[0].mxu0
        %1791 = vmatprep.mubr.f32.mxu0 0.0
        %1792 = vmatmul.mubr.f32.gmra.mrb[0].mxu0 %v1563
        %v1793 = vpop.f32.mrb[0].mxu0
        %v1794 = vadd.f32 0.0, %v1793
        %v1795 = vpop.f32.mrb[0].mxu0
        %1796 = vmatprep.mubr.f32.mxu0 0.0
        %1797 = vmatmul.mubr.f32.gmra.mrb[0].mxu0 %v1564
        %v1798 = vpop.f32.mrb[0].mxu0
        %v1799 = vadd.f32 0.0, %v1798
        %v1800 = vpop.f32.mrb[0].mxu0
        %1801 = vmatprep.mubr.f32.mxu0 0.0
        %1802 = vmatmul.mubr.f32.gmra.mrb[0].mxu0 %v1565
        %v1803 = vpop.f32.mrb[0].mxu0
        %v1804 = vadd.f32 0.0, %v1803
        %v1805 = vpop.f32.mrb[0].mxu0
        %1806 = vdwg.mxu0
        %v1807 = vadd.f32 %v1502, %v1649
        %v1808 = vadd.f32 %v1503, %v1654
        %v1809 = vadd.f32 %v1504, %v1659
        %v1810 = vadd.f32 %v1505, %v1664
        %v1811 = vadd.f32 %v1506, %v1669
        %v1812 = vadd.f32 %v1507, %v1674
        %v1813 = vadd.f32 %v1508, %v1679
        %v1814 = vadd.f32 %v1509, %v1684
        %v1815 = vadd.f32 %v1510, %v1689
        %v1816 = vadd.f32 %v1511, %v1694
        %v1817 = vadd.f32 %v1512, %v1699
        %v1818 = vadd.f32 %v1513, %v1704
        %v1819 = vadd.f32 %v1514, %v1709
        %v1820 = vadd.f32 %v1515, %v1714
        %v1821 = vadd.f32 %v1516, %v1719
        %v1822 = vadd.f32 %v1517, %v1724
        %v1823 = vadd.f32 %v1518, %v1729
        %v1824 = vadd.f32 %v1519, %v1734
        %v1825 = vadd.f32 %v1520, %v1739
        %v1826 = vadd.f32 %v1521, %v1744
        %v1827 = vadd.f32 %v1522, %v1749
        %v1828 = vadd.f32 %v1523, %v1754
        %v1829 = vadd.f32 %v1524, %v1759
        %v1830 = vadd.f32 %v1525, %v1764
        %v1831 = vadd.f32 %v1526, %v1769
        %v1832 = vadd.f32 %v1527, %v1774
        %v1833 = vadd.f32 %v1528, %v1779
        %v1834 = vadd.f32 %v1529, %v1784
        %v1835 = vadd.f32 %v1530, %v1789
        %v1836 = vadd.f32 %v1531, %v1794
        %v1837 = vadd.f32 %v1532, %v1799
        %v1838 = vadd.f32 %v1533, %v1804
        %v1839 = vld [vmem:[%s281 + $0x9] sm:$0xff]
        %v1840 = vld [vmem:[%s281 + $0x11] sm:$0xff]
        %v1841 = vld [vmem:[%s281 + $0x29] sm:$0xff]
        %v1842 = vld [vmem:[%s281 + $0x31] sm:$0xff]
        %v1843 = vld [vmem:[%s281 + $0x49] sm:$0xff]
        %v1844 = vld [vmem:[%s281 + $0x51] sm:$0xff]
        %v1845 = vld [vmem:[%s281 + $0x69] sm:$0xff]
        %v1846 = vld [vmem:[%s281 + $0x71] sm:$0xff]
        %v1847 = vld [vmem:[%s281 + $0x89] sm:$0xff]
        %v1848 = vld [vmem:[%s281 + $0x91] sm:$0xff]
        %v1849 = vld [vmem:[%s281 + $0xa9] sm:$0xff]
        %v1850 = vld [vmem:[%s281 + $0xb1] sm:$0xff]
        %v1851 = vld [vmem:[%s281 + $0xc9] sm:$0xff]
        %v1852 = vld [vmem:[%s281 + $0xd1] sm:$0xff]
        %v1853 = vld [vmem:[%s281 + $0xe9] sm:$0xff]
        %v1854 = vld [vmem:[%s281 + $0xf1] sm:$0xff]
        %v1855 = vld [vmem:[%s281 + $0x109] sm:$0xff]
        %v1856 = vld [vmem:[%s281 + $0x111] sm:$0xff]
        %v1857 = vld [vmem:[%s281 + $0x129] sm:$0xff]
        %v1858 = vld [vmem:[%s281 + $0x131] sm:$0xff]
        %v1859 = vld [vmem:[%s281 + $0x149] sm:$0xff]
        %v1860 = vld [vmem:[%s281 + $0x151] sm:$0xff]
        %v1861 = vld [vmem:[%s281 + $0x169] sm:$0xff]
        %v1862 = vld [vmem:[%s281 + $0x171] sm:$0xff]
        %v1863 = vld [vmem:[%s281 + $0x189] sm:$0xff]
        %v1864 = vld [vmem:[%s281 + $0x191] sm:$0xff]
        %v1865 = vld [vmem:[%s281 + $0x1a9] sm:$0xff]
        %v1866 = vld [vmem:[%s281 + $0x1b1] sm:$0xff]
        %v1867 = vld [vmem:[%s281 + $0x1c9] sm:$0xff]
        %v1868 = vld [vmem:[%s281 + $0x1d1] sm:$0xff]
        %v1869 = vld [vmem:[%s281 + $0x1e9] sm:$0xff]
        %v1870 = vld [vmem:[%s281 + $0x1f1] sm:$0xff]
        %v1871 = vld [vmem:[#allocation6 + $0x280] sm:$0xff]
        %v1872 = vld [vmem:[#allocation6 + $0x288] sm:$0xff]
        %v1873 = vld [vmem:[#allocation6 + $0x290] sm:$0xff]
        %v1874 = vld [vmem:[#allocation6 + $0x298] sm:$0xff]
        %v1875 = vld [vmem:[#allocation6 + $0x2a0] sm:$0xff]
        %v1876 = vld [vmem:[#allocation6 + $0x2a8] sm:$0xff]
        %v1877 = vld [vmem:[#allocation6 + $0x2b0] sm:$0xff]
        %v1878 = vld [vmem:[#allocation6 + $0x2b8] sm:$0xff]
        %v1879 = vld [vmem:[#allocation6 + $0x2c0] sm:$0xff]
        %v1880 = vld [vmem:[#allocation6 + $0x2c8] sm:$0xff]
        %v1881 = vld [vmem:[#allocation6 + $0x2d0] sm:$0xff]
        %v1882 = vld [vmem:[#allocation6 + $0x2d8] sm:$0xff]
        %v1883 = vld [vmem:[#allocation6 + $0x2e0] sm:$0xff]
        %v1884 = vld [vmem:[#allocation6 + $0x2e8] sm:$0xff]
        %v1885 = vld [vmem:[#allocation6 + $0x2f0] sm:$0xff]
        %v1886 = vld [vmem:[#allocation6 + $0x2f8] sm:$0xff]
        %1887 = vmatprep.subr.mxu0 0.0
        %1888 = vmatpush1.msra.mxu0 %v1871
        %1889 = vmatprep.subr.mxu0 0.0
        %1890 = vmatpush1.msra.mxu0 %v1872
        %1891 = vmatprep.subr.mxu0 0.0
        %1892 = vmatpush1.msra.mxu0 %v1873
        %1893 = vmatprep.subr.mxu0 0.0
        %1894 = vmatpush1.msra.mxu0 %v1874
        %1895 = vmatprep.subr.mxu0 0.0
        %1896 = vmatpush1.msra.mxu0 %v1875
        %1897 = vmatprep.subr.mxu0 0.0
        %1898 = vmatpush1.msra.mxu0 %v1876
        %1899 = vmatprep.subr.mxu0 0.0
        %1900 = vmatpush1.msra.mxu0 %v1877
        %1901 = vmatprep.subr.mxu0 0.0
        %1902 = vmatpush1.msra.mxu0 %v1878
        %1903 = vmatprep.subr.mxu0 0.0
        %1904 = vmatpush1.msra.mxu0 %v1879
        %1905 = vmatprep.subr.mxu0 0.0
        %1906 = vmatpush1.msra.mxu0 %v1880
        %1907 = vmatprep.subr.mxu0 0.0
        %1908 = vmatpush1.msra.mxu0 %v1881
        %1909 = vmatprep.subr.mxu0 0.0
        %1910 = vmatpush1.msra.mxu0 %v1882
        %1911 = vmatprep.subr.mxu0 0.0
        %1912 = vmatpush1.msra.mxu0 %v1883
        %1913 = vmatprep.subr.mxu0 0.0
        %1914 = vmatpush1.msra.mxu0 %v1884
        %1915 = vmatprep.subr.mxu0 0.0
        %1916 = vmatpush1.msra.mxu0 %v1885
        %1917 = vmatprep.subr.mxu0 0.0
        %1918 = vmatpush1.msra.mxu0 %v1886
        %1919 = vmatprep.subr.mxu0 0.0
        %1920 = vmatpush1.msra.mxu0 0.0
        %1921 = vmatprep.subr.mxu0 0.0
        %1922 = vmatpush1.msra.mxu0 0.0
        %1923 = vmatprep.subr.mxu0 0.0
        %1924 = vmatpush1.msra.mxu0 0.0
        %1925 = vmatprep.subr.mxu0 0.0
        %1926 = vmatpush1.msra.mxu0 0.0
        %1927 = vmatprep.subr.mxu0 0.0
        %1928 = vmatpush1.msra.mxu0 0.0
        %1929 = vmatprep.subr.mxu0 0.0
        %1930 = vmatpush1.msra.mxu0 0.0
        %1931 = vmatprep.subr.mxu0 0.0
        %1932 = vmatpush1.msra.mxu0 0.0
        %1933 = vmatprep.subr.mxu0 0.0
        %1934 = vmatpush1.msra.mxu0 0.0
        %1935 = vmatprep.subr.mxu0 0.0
        %1936 = vmatpush1.msra.mxu0 0.0
        %1937 = vmatprep.subr.mxu0 0.0
        %1938 = vmatpush1.msra.mxu0 0.0
        %1939 = vmatprep.subr.mxu0 0.0
        %1940 = vmatpush1.msra.mxu0 0.0
        %1941 = vmatprep.subr.mxu0 0.0
        %1942 = vmatpush1.msra.mxu0 0.0
        %1943 = vmatprep.subr.mxu0 0.0
        %1944 = vmatpush1.msra.mxu0 0.0
        %1945 = vmatprep.subr.mxu0 0.0
        %1946 = vmatpush1.msra.mxu0 0.0
        %1947 = vmatprep.subr.mxu0 0.0
        %1948 = vmatpush1.msra.mxu0 0.0
        %1949 = vmatprep.subr.mxu0 0.0
        %1950 = vmatpush1.msra.mxu0 0.0
        %1951 = vmatprep.mubr.f32.mxu0 0.0
        %1952 = vmatmul.mubr.f32.gmra.mrb[0].mxu0 %v1839
        %v1953 = vpop.f32.mrb[0].mxu0
        %v1954 = vadd.f32 0.0, %v1953
        %v1955 = vpop.f32.mrb[0].mxu0
        %1956 = vmatprep.mubr.f32.mxu0 0.0
        %1957 = vmatmul.mubr.f32.gmra.mrb[0].mxu0 %v1840
        %v1958 = vpop.f32.mrb[0].mxu0
        %v1959 = vadd.f32 0.0, %v1958
        %v1960 = vpop.f32.mrb[0].mxu0
        %1961 = vmatprep.mubr.f32.mxu0 0.0
        %1962 = vmatmul.mubr.f32.gmra.mrb[0].mxu0 %v1841
        %v1963 = vpop.f32.mrb[0].mxu0
        %v1964 = vadd.f32 0.0, %v1963
        %v1965 = vpop.f32.mrb[0].mxu0
        %1966 = vmatprep.mubr.f32.mxu0 0.0
        %1967 = vmatmul.mubr.f32.gmra.mrb[0].mxu0 %v1842
        %v1968 = vpop.f32.mrb[0].mxu0
        %v1969 = vadd.f32 0.0, %v1968
        %v1970 = vpop.f32.mrb[0].mxu0
        %1971 = vmatprep.mubr.f32.mxu0 0.0
        %1972 = vmatmul.mubr.f32.gmra.mrb[0].mxu0 %v1843
        %v1973 = vpop.f32.mrb[0].mxu0
        %v1974 = vadd.f32 0.0, %v1973
        %v1975 = vpop.f32.mrb[0].mxu0
        %1976 = vmatprep.mubr.f32.mxu0 0.0
        %1977 = vmatmul.mubr.f32.gmra.mrb[0].mxu0 %v1844
        %v1978 = vpop.f32.mrb[0].mxu0
        %v1979 = vadd.f32 0.0, %v1978
        %v1980 = vpop.f32.mrb[0].mxu0
        %1981 = vmatprep.mubr.f32.mxu0 0.0
        %1982 = vmatmul.mubr.f32.gmra.mrb[0].mxu0 %v1845
        %v1983 = vpop.f32.mrb[0].mxu0
        %v1984 = vadd.f32 0.0, %v1983
        %v1985 = vpop.f32.mrb[0].mxu0
        %1986 = vmatprep.mubr.f32.mxu0 0.0
        %1987 = vmatmul.mubr.f32.gmra.mrb[0].mxu0 %v1846
        %v1988 = vpop.f32.mrb[0].mxu0
        %v1989 = vadd.f32 0.0, %v1988
        %v1990 = vpop.f32.mrb[0].mxu0
        %1991 = vmatprep.mubr.f32.mxu0 0.0
        %1992 = vmatmul.mubr.f32.gmra.mrb[0].mxu0 %v1847
        %v1993 = vpop.f32.mrb[0].mxu0
        %v1994 = vadd.f32 0.0, %v1993
        %v1995 = vpop.f32.mrb[0].mxu0
        %1996 = vmatprep.mubr.f32.mxu0 0.0
        %1997 = vmatmul.mubr.f32.gmra.mrb[0].mxu0 %v1848
        %v1998 = vpop.f32.mrb[0].mxu0
        %v1999 = vadd.f32 0.0, %v1998
        %v2000 = vpop.f32.mrb[0].mxu0
        %2001 = vmatprep.mubr.f32.mxu0 0.0
        %2002 = vmatmul.mubr.f32.gmra.mrb[0].mxu0 %v1849
        %v2003 = vpop.f32.mrb[0].mxu0
        %v2004 = vadd.f32 0.0, %v2003
        %v2005 = vpop.f32.mrb[0].mxu0
        %2006 = vmatprep.mubr.f32.mxu0 0.0
        %2007 = vmatmul.mubr.f32.gmra.mrb[0].mxu0 %v1850
        %v2008 = vpop.f32.mrb[0].mxu0
        %v2009 = vadd.f32 0.0, %v2008
        %v2010 = vpop.f32.mrb[0].mxu0
        %2011 = vmatprep.mubr.f32.mxu0 0.0
        %2012 = vmatmul.mubr.f32.gmra.mrb[0].mxu0 %v1851
        %v2013 = vpop.f32.mrb[0].mxu0
        %v2014 = vadd.f32 0.0, %v2013
        %v2015 = vpop.f32.mrb[0].mxu0
        %2016 = vmatprep.mubr.f32.mxu0 0.0
        %2017 = vmatmul.mubr.f32.gmra.mrb[0].mxu0 %v1852
        %v2018 = vpop.f32.mrb[0].mxu0
        %v2019 = vadd.f32 0.0, %v2018
        %v2020 = vpop.f32.mrb[0].mxu0
        %2021 = vmatprep.mubr.f32.mxu0 0.0
        %2022 = vmatmul.mubr.f32.gmra.mrb[0].mxu0 %v1853
        %v2023 = vpop.f32.mrb[0].mxu0
        %v2024 = vadd.f32 0.0, %v2023
        %v2025 = vpop.f32.mrb[0].mxu0
        %2026 = vmatprep.mubr.f32.mxu0 0.0
        %2027 = vmatmul.mubr.f32.gmra.mrb[0].mxu0 %v1854
        %v2028 = vpop.f32.mrb[0].mxu0
        %v2029 = vadd.f32 0.0, %v2028
        %v2030 = vpop.f32.mrb[0].mxu0
        %2031 = vmatprep.mubr.f32.mxu0 0.0
        %2032 = vmatmul.mubr.f32.gmra.mrb[0].mxu0 %v1855
        %v2033 = vpop.f32.mrb[0].mxu0
        %v2034 = vadd.f32 0.0, %v2033
        %v2035 = vpop.f32.mrb[0].mxu0
        %2036 = vmatprep.mubr.f32.mxu0 0.0
        %2037 = vmatmul.mubr.f32.gmra.mrb[0].mxu0 %v1856
        %v2038 = vpop.f32.mrb[0].mxu0
        %v2039 = vadd.f32 0.0, %v2038
        %v2040 = vpop.f32.mrb[0].mxu0
        %2041 = vmatprep.mubr.f32.mxu0 0.0
        %2042 = vmatmul.mubr.f32.gmra.mrb[0].mxu0 %v1857
        %v2043 = vpop.f32.mrb[0].mxu0
        %v2044 = vadd.f32 0.0, %v2043
        %v2045 = vpop.f32.mrb[0].mxu0
        %2046 = vmatprep.mubr.f32.mxu0 0.0
        %2047 = vmatmul.mubr.f32.gmra.mrb[0].mxu0 %v1858
        %v2048 = vpop.f32.mrb[0].mxu0
        %v2049 = vadd.f32 0.0, %v2048
        %v2050 = vpop.f32.mrb[0].mxu0
        %2051 = vmatprep.mubr.f32.mxu0 0.0
        %2052 = vmatmul.mubr.f32.gmra.mrb[0].mxu0 %v1859
        %v2053 = vpop.f32.mrb[0].mxu0
        %v2054 = vadd.f32 0.0, %v2053
        %v2055 = vpop.f32.mrb[0].mxu0
        %2056 = vmatprep.mubr.f32.mxu0 0.0
        %2057 = vmatmul.mubr.f32.gmra.mrb[0].mxu0 %v1860
        %v2058 = vpop.f32.mrb[0].mxu0
        %v2059 = vadd.f32 0.0, %v2058
        %v2060 = vpop.f32.mrb[0].mxu0
        %2061 = vmatprep.mubr.f32.mxu0 0.0
        %2062 = vmatmul.mubr.f32.gmra.mrb[0].mxu0 %v1861
        %v2063 = vpop.f32.mrb[0].mxu0
        %v2064 = vadd.f32 0.0, %v2063
        %v2065 = vpop.f32.mrb[0].mxu0
        %2066 = vmatprep.mubr.f32.mxu0 0.0
        %2067 = vmatmul.mubr.f32.gmra.mrb[0].mxu0 %v1862
        %v2068 = vpop.f32.mrb[0].mxu0
        %v2069 = vadd.f32 0.0, %v2068
        %v2070 = vpop.f32.mrb[0].mxu0
        %2071 = vmatprep.mubr.f32.mxu0 0.0
        %2072 = vmatmul.mubr.f32.gmra.mrb[0].mxu0 %v1863
        %v2073 = vpop.f32.mrb[0].mxu0
        %v2074 = vadd.f32 0.0, %v2073
        %v2075 = vpop.f32.mrb[0].mxu0
        %2076 = vmatprep.mubr.f32.mxu0 0.0
        %2077 = vmatmul.mubr.f32.gmra.mrb[0].mxu0 %v1864
        %v2078 = vpop.f32.mrb[0].mxu0
        %v2079 = vadd.f32 0.0, %v2078
        %v2080 = vpop.f32.mrb[0].mxu0
        %2081 = vmatprep.mubr.f32.mxu0 0.0
        %2082 = vmatmul.mubr.f32.gmra.mrb[0].mxu0 %v1865
        %v2083 = vpop.f32.mrb[0].mxu0
        %v2084 = vadd.f32 0.0, %v2083
        %v2085 = vpop.f32.mrb[0].mxu0
        %2086 = vmatprep.mubr.f32.mxu0 0.0
        %2087 = vmatmul.mubr.f32.gmra.mrb[0].mxu0 %v1866
        %v2088 = vpop.f32.mrb[0].mxu0
        %v2089 = vadd.f32 0.0, %v2088
        %v2090 = vpop.f32.mrb[0].mxu0
        %2091 = vmatprep.mubr.f32.mxu0 0.0
        %2092 = vmatmul.mubr.f32.gmra.mrb[0].mxu0 %v1867
        %v2093 = vpop.f32.mrb[0].mxu0
        %v2094 = vadd.f32 0.0, %v2093
        %v2095 = vpop.f32.mrb[0].mxu0
        %2096 = vmatprep.mubr.f32.mxu0 0.0
        %2097 = vmatmul.mubr.f32.gmra.mrb[0].mxu0 %v1868
        %v2098 = vpop.f32.mrb[0].mxu0
        %v2099 = vadd.f32 0.0, %v2098
        %v2100 = vpop.f32.mrb[0].mxu0
        %2101 = vmatprep.mubr.f32.mxu0 0.0
        %2102 = vmatmul.mubr.f32.gmra.mrb[0].mxu0 %v1869
        %v2103 = vpop.f32.mrb[0].mxu0
        %v2104 = vadd.f32 0.0, %v2103
        %v2105 = vpop.f32.mrb[0].mxu0
        %2106 = vmatprep.mubr.f32.mxu0 0.0
        %2107 = vmatmul.mubr.f32.gmra.mrb[0].mxu0 %v1870
        %v2108 = vpop.f32.mrb[0].mxu0
        %v2109 = vadd.f32 0.0, %v2108
        %v2110 = vpop.f32.mrb[0].mxu0
        %2111 = vdwg.mxu0
        %v2112 = vadd.f32 %v1807, %v1954
        %v2113 = vadd.f32 %v1808, %v1959
        %v2114 = vadd.f32 %v1809, %v1964
        %v2115 = vadd.f32 %v1810, %v1969
        %v2116 = vadd.f32 %v1811, %v1974
        %v2117 = vadd.f32 %v1812, %v1979
        %v2118 = vadd.f32 %v1813, %v1984
        %v2119 = vadd.f32 %v1814, %v1989
        %v2120 = vadd.f32 %v1815, %v1994
        %v2121 = vadd.f32 %v1816, %v1999
        %v2122 = vadd.f32 %v1817, %v2004
        %v2123 = vadd.f32 %v1818, %v2009
        %v2124 = vadd.f32 %v1819, %v2014
        %v2125 = vadd.f32 %v1820, %v2019
        %v2126 = vadd.f32 %v1821, %v2024
        %v2127 = vadd.f32 %v1822, %v2029
        %v2128 = vadd.f32 %v1823, %v2034
        %v2129 = vadd.f32 %v1824, %v2039
        %v2130 = vadd.f32 %v1825, %v2044
        %v2131 = vadd.f32 %v1826, %v2049
        %v2132 = vadd.f32 %v1827, %v2054
        %v2133 = vadd.f32 %v1828, %v2059
        %v2134 = vadd.f32 %v1829, %v2064
        %v2135 = vadd.f32 %v1830, %v2069
        %v2136 = vadd.f32 %v1831, %v2074
        %v2137 = vadd.f32 %v1832, %v2079
        %v2138 = vadd.f32 %v1833, %v2084
        %v2139 = vadd.f32 %v1834, %v2089
        %v2140 = vadd.f32 %v1835, %v2094
        %v2141 = vadd.f32 %v1836, %v2099
        %v2142 = vadd.f32 %v1837, %v2104
        %v2143 = vadd.f32 %v1838, %v2109
        %s2144 = scalar_lea.vmem [#allocation2], 64
        %v2145 = vld [vmem:[%s2144 + $0x7] sm:$0xff]
        %v2146 = vld [vmem:[%s2144 + $0xf] sm:$0xff]
        %v2147 = vld [vmem:[%s2144 + $0x27] sm:$0xff]
        %v2148 = vld [vmem:[%s2144 + $0x2f] sm:$0xff]
        %v2149 = vld [vmem:[%s2144 + $0x47] sm:$0xff]
        %v2150 = vld [vmem:[%s2144 + $0x4f] sm:$0xff]
        %v2151 = vld [vmem:[%s2144 + $0x67] sm:$0xff]
        %v2152 = vld [vmem:[%s2144 + $0x6f] sm:$0xff]
        %v2153 = vld [vmem:[%s2144 + $0x87] sm:$0xff]
        %v2154 = vld [vmem:[%s2144 + $0x8f] sm:$0xff]
        %v2155 = vld [vmem:[%s2144 + $0xa7] sm:$0xff]
        %v2156 = vld [vmem:[%s2144 + $0xaf] sm:$0xff]
        %v2157 = vld [vmem:[%s2144 + $0xc7] sm:$0xff]
        %v2158 = vld [vmem:[%s2144 + $0xcf] sm:$0xff]
        %v2159 = vld [vmem:[%s2144 + $0xe7] sm:$0xff]
        %v2160 = vld [vmem:[%s2144 + $0xef] sm:$0xff]
        %v2161 = vld [vmem:[%s2144 + $0x107] sm:$0xff]
        %v2162 = vld [vmem:[%s2144 + $0x10f] sm:$0xff]
        %v2163 = vld [vmem:[%s2144 + $0x127] sm:$0xff]
        %v2164 = vld [vmem:[%s2144 + $0x12f] sm:$0xff]
        %v2165 = vld [vmem:[%s2144 + $0x147] sm:$0xff]
        %v2166 = vld [vmem:[%s2144 + $0x14f] sm:$0xff]
        %v2167 = vld [vmem:[%s2144 + $0x167] sm:$0xff]
        %v2168 = vld [vmem:[%s2144 + $0x16f] sm:$0xff]
        %v2169 = vld [vmem:[%s2144 + $0x187] sm:$0xff]
        %v2170 = vld [vmem:[%s2144 + $0x18f] sm:$0xff]
        %v2171 = vld [vmem:[%s2144 + $0x1a7] sm:$0xff]
        %v2172 = vld [vmem:[%s2144 + $0x1af] sm:$0xff]
        %v2173 = vld [vmem:[%s2144 + $0x1c7] sm:$0xff]
        %v2174 = vld [vmem:[%s2144 + $0x1cf] sm:$0xff]
        %v2175 = vld [vmem:[%s2144 + $0x1e7] sm:$0xff]
        %v2176 = vld [vmem:[%s2144 + $0x1ef] sm:$0xff]
        %v2177 = vld [vmem:[#allocation6 + $0x300] sm:$0xff]
        %v2178 = vld [vmem:[#allocation6 + $0x308] sm:$0xff]
        %v2179 = vld [vmem:[#allocation6 + $0x310] sm:$0xff]
        %v2180 = vld [vmem:[#allocation6 + $0x318] sm:$0xff]
        %v2181 = vld [vmem:[#allocation6 + $0x320] sm:$0xff]
        %v2182 = vld [vmem:[#allocation6 + $0x328] sm:$0xff]
        %v2183 = vld [vmem:[#allocation6 + $0x330] sm:$0xff]
        %v2184 = vld [vmem:[#allocation6 + $0x338] sm:$0xff]
        %v2185 = vld [vmem:[#allocation6 + $0x340] sm:$0xff]
        %v2186 = vld [vmem:[#allocation6 + $0x348] sm:$0xff]
        %v2187 = vld [vmem:[#allocation6 + $0x350] sm:$0xff]
        %v2188 = vld [vmem:[#allocation6 + $0x358] sm:$0xff]
        %v2189 = vld [vmem:[#allocation6 + $0x360] sm:$0xff]
        %v2190 = vld [vmem:[#allocation6 + $0x368] sm:$0xff]
        %v2191 = vld [vmem:[#allocation6 + $0x370] sm:$0xff]
        %v2192 = vld [vmem:[#allocation6 + $0x378] sm:$0xff]
        %2193 = vmatprep.subr.mxu0 0.0
        %2194 = vmatpush1.msra.mxu0 %v2177
        %2195 = vmatprep.subr.mxu0 0.0
        %2196 = vmatpush1.msra.mxu0 %v2178
        %2197 = vmatprep.subr.mxu0 0.0
        %2198 = vmatpush1.msra.mxu0 %v2179
        %2199 = vmatprep.subr.mxu0 0.0
        %2200 = vmatpush1.msra.mxu0 %v2180
        %2201 = vmatprep.subr.mxu0 0.0
        %2202 = vmatpush1.msra.mxu0 %v2181
        %2203 = vmatprep.subr.mxu0 0.0
        %2204 = vmatpush1.msra.mxu0 %v2182
        %2205 = vmatprep.subr.mxu0 0.0
        %2206 = vmatpush1.msra.mxu0 %v2183
        %2207 = vmatprep.subr.mxu0 0.0
        %2208 = vmatpush1.msra.mxu0 %v2184
        %2209 = vmatprep.subr.mxu0 0.0
        %2210 = vmatpush1.msra.mxu0 %v2185
        %2211 = vmatprep.subr.mxu0 0.0
        %2212 = vmatpush1.msra.mxu0 %v2186
        %2213 = vmatprep.subr.mxu0 0.0
        %2214 = vmatpush1.msra.mxu0 %v2187
        %2215 = vmatprep.subr.mxu0 0.0
        %2216 = vmatpush1.msra.mxu0 %v2188
        %2217 = vmatprep.subr.mxu0 0.0
        %2218 = vmatpush1.msra.mxu0 %v2189
        %2219 = vmatprep.subr.mxu0 0.0
        %2220 = vmatpush1.msra.mxu0 %v2190
        %2221 = vmatprep.subr.mxu0 0.0
        %2222 = vmatpush1.msra.mxu0 %v2191
        %2223 = vmatprep.subr.mxu0 0.0
        %2224 = vmatpush1.msra.mxu0 %v2192
        %2225 = vmatprep.subr.mxu0 0.0
        %2226 = vmatpush1.msra.mxu0 0.0
        %2227 = vmatprep.subr.mxu0 0.0
        %2228 = vmatpush1.msra.mxu0 0.0
        %2229 = vmatprep.subr.mxu0 0.0
        %2230 = vmatpush1.msra.mxu0 0.0
        %2231 = vmatprep.subr.mxu0 0.0
        %2232 = vmatpush1.msra.mxu0 0.0
        %2233 = vmatprep.subr.mxu0 0.0
        %2234 = vmatpush1.msra.mxu0 0.0
        %2235 = vmatprep.subr.mxu0 0.0
        %2236 = vmatpush1.msra.mxu0 0.0
        %2237 = vmatprep.subr.mxu0 0.0
        %2238 = vmatpush1.msra.mxu0 0.0
        %2239 = vmatprep.subr.mxu0 0.0
        %2240 = vmatpush1.msra.mxu0 0.0
        %2241 = vmatprep.subr.mxu0 0.0
        %2242 = vmatpush1.msra.mxu0 0.0
        %2243 = vmatprep.subr.mxu0 0.0
        %2244 = vmatpush1.msra.mxu0 0.0
        %2245 = vmatprep.subr.mxu0 0.0
        %2246 = vmatpush1.msra.mxu0 0.0
        %2247 = vmatprep.subr.mxu0 0.0
        %2248 = vmatpush1.msra.mxu0 0.0
        %2249 = vmatprep.subr.mxu0 0.0
        %2250 = vmatpush1.msra.mxu0 0.0
        %2251 = vmatprep.subr.mxu0 0.0
        %2252 = vmatpush1.msra.mxu0 0.0
        %2253 = vmatprep.subr.mxu0 0.0
        %2254 = vmatpush1.msra.mxu0 0.0
        %2255 = vmatprep.subr.mxu0 0.0
        %2256 = vmatpush1.msra.mxu0 0.0
        %2257 = vmatprep.mubr.f32.mxu0 0.0
        %2258 = vmatmul.mubr.f32.gmra.mrb[0].mxu0 %v2145
        %v2259 = vpop.f32.mrb[0].mxu0
        %v2260 = vadd.f32 0.0, %v2259
        %v2261 = vpop.f32.mrb[0].mxu0
        %2262 = vmatprep.mubr.f32.mxu0 0.0
        %2263 = vmatmul.mubr.f32.gmra.mrb[0].mxu0 %v2146
        %v2264 = vpop.f32.mrb[0].mxu0
        %v2265 = vadd.f32 0.0, %v2264
        %v2266 = vpop.f32.mrb[0].mxu0
        %2267 = vmatprep.mubr.f32.mxu0 0.0
        %2268 = vmatmul.mubr.f32.gmra.mrb[0].mxu0 %v2147
        %v2269 = vpop.f32.mrb[0].mxu0
        %v2270 = vadd.f32 0.0, %v2269
        %v2271 = vpop.f32.mrb[0].mxu0
        %2272 = vmatprep.mubr.f32.mxu0 0.0
        %2273 = vmatmul.mubr.f32.gmra.mrb[0].mxu0 %v2148
        %v2274 = vpop.f32.mrb[0].mxu0
        %v2275 = vadd.f32 0.0, %v2274
        %v2276 = vpop.f32.mrb[0].mxu0
        %2277 = vmatprep.mubr.f32.mxu0 0.0
        %2278 = vmatmul.mubr.f32.gmra.mrb[0].mxu0 %v2149
        %v2279 = vpop.f32.mrb[0].mxu0
        %v2280 = vadd.f32 0.0, %v2279
        %v2281 = vpop.f32.mrb[0].mxu0
        %2282 = vmatprep.mubr.f32.mxu0 0.0
        %2283 = vmatmul.mubr.f32.gmra.mrb[0].mxu0 %v2150
        %v2284 = vpop.f32.mrb[0].mxu0
        %v2285 = vadd.f32 0.0, %v2284
        %v2286 = vpop.f32.mrb[0].mxu0
        %2287 = vmatprep.mubr.f32.mxu0 0.0
        %2288 = vmatmul.mubr.f32.gmra.mrb[0].mxu0 %v2151
        %v2289 = vpop.f32.mrb[0].mxu0
        %v2290 = vadd.f32 0.0, %v2289
        %v2291 = vpop.f32.mrb[0].mxu0
        %2292 = vmatprep.mubr.f32.mxu0 0.0
        %2293 = vmatmul.mubr.f32.gmra.mrb[0].mxu0 %v2152
        %v2294 = vpop.f32.mrb[0].mxu0
        %v2295 = vadd.f32 0.0, %v2294
        %v2296 = vpop.f32.mrb[0].mxu0
        %2297 = vmatprep.mubr.f32.mxu0 0.0
        %2298 = vmatmul.mubr.f32.gmra.mrb[0].mxu0 %v2153
        %v2299 = vpop.f32.mrb[0].mxu0
        %v2300 = vadd.f32 0.0, %v2299
        %v2301 = vpop.f32.mrb[0].mxu0
        %2302 = vmatprep.mubr.f32.mxu0 0.0
        %2303 = vmatmul.mubr.f32.gmra.mrb[0].mxu0 %v2154
        %v2304 = vpop.f32.mrb[0].mxu0
        %v2305 = vadd.f32 0.0, %v2304
        %v2306 = vpop.f32.mrb[0].mxu0
        %2307 = vmatprep.mubr.f32.mxu0 0.0
        %2308 = vmatmul.mubr.f32.gmra.mrb[0].mxu0 %v2155
        %v2309 = vpop.f32.mrb[0].mxu0
        %v2310 = vadd.f32 0.0, %v2309
        %v2311 = vpop.f32.mrb[0].mxu0
        %2312 = vmatprep.mubr.f32.mxu0 0.0
        %2313 = vmatmul.mubr.f32.gmra.mrb[0].mxu0 %v2156
        %v2314 = vpop.f32.mrb[0].mxu0
        %v2315 = vadd.f32 0.0, %v2314
        %v2316 = vpop.f32.mrb[0].mxu0
        %2317 = vmatprep.mubr.f32.mxu0 0.0
        %2318 = vmatmul.mubr.f32.gmra.mrb[0].mxu0 %v2157
        %v2319 = vpop.f32.mrb[0].mxu0
        %v2320 = vadd.f32 0.0, %v2319
        %v2321 = vpop.f32.mrb[0].mxu0
        %2322 = vmatprep.mubr.f32.mxu0 0.0
        %2323 = vmatmul.mubr.f32.gmra.mrb[0].mxu0 %v2158
        %v2324 = vpop.f32.mrb[0].mxu0
        %v2325 = vadd.f32 0.0, %v2324
        %v2326 = vpop.f32.mrb[0].mxu0
        %2327 = vmatprep.mubr.f32.mxu0 0.0
        %2328 = vmatmul.mubr.f32.gmra.mrb[0].mxu0 %v2159
        %v2329 = vpop.f32.mrb[0].mxu0
        %v2330 = vadd.f32 0.0, %v2329
        %v2331 = vpop.f32.mrb[0].mxu0
        %2332 = vmatprep.mubr.f32.mxu0 0.0
        %2333 = vmatmul.mubr.f32.gmra.mrb[0].mxu0 %v2160
        %v2334 = vpop.f32.mrb[0].mxu0
        %v2335 = vadd.f32 0.0, %v2334
        %v2336 = vpop.f32.mrb[0].mxu0
        %2337 = vmatprep.mubr.f32.mxu0 0.0
        %2338 = vmatmul.mubr.f32.gmra.mrb[0].mxu0 %v2161
        %v2339 = vpop.f32.mrb[0].mxu0
        %v2340 = vadd.f32 0.0, %v2339
        %v2341 = vpop.f32.mrb[0].mxu0
        %2342 = vmatprep.mubr.f32.mxu0 0.0
        %2343 = vmatmul.mubr.f32.gmra.mrb[0].mxu0 %v2162
        %v2344 = vpop.f32.mrb[0].mxu0
        %v2345 = vadd.f32 0.0, %v2344
        %v2346 = vpop.f32.mrb[0].mxu0
        %2347 = vmatprep.mubr.f32.mxu0 0.0
        %2348 = vmatmul.mubr.f32.gmra.mrb[0].mxu0 %v2163
        %v2349 = vpop.f32.mrb[0].mxu0
        %v2350 = vadd.f32 0.0, %v2349
        %v2351 = vpop.f32.mrb[0].mxu0
        %2352 = vmatprep.mubr.f32.mxu0 0.0
        %2353 = vmatmul.mubr.f32.gmra.mrb[0].mxu0 %v2164
        %v2354 = vpop.f32.mrb[0].mxu0
        %v2355 = vadd.f32 0.0, %v2354
        %v2356 = vpop.f32.mrb[0].mxu0
        %2357 = vmatprep.mubr.f32.mxu0 0.0
        %2358 = vmatmul.mubr.f32.gmra.mrb[0].mxu0 %v2165
        %v2359 = vpop.f32.mrb[0].mxu0
        %v2360 = vadd.f32 0.0, %v2359
        %v2361 = vpop.f32.mrb[0].mxu0
        %2362 = vmatprep.mubr.f32.mxu0 0.0
        %2363 = vmatmul.mubr.f32.gmra.mrb[0].mxu0 %v2166
        %v2364 = vpop.f32.mrb[0].mxu0
        %v2365 = vadd.f32 0.0, %v2364
        %v2366 = vpop.f32.mrb[0].mxu0
        %2367 = vmatprep.mubr.f32.mxu0 0.0
        %2368 = vmatmul.mubr.f32.gmra.mrb[0].mxu0 %v2167
        %v2369 = vpop.f32.mrb[0].mxu0
        %v2370 = vadd.f32 0.0, %v2369
        %v2371 = vpop.f32.mrb[0].mxu0
        %2372 = vmatprep.mubr.f32.mxu0 0.0
        %2373 = vmatmul.mubr.f32.gmra.mrb[0].mxu0 %v2168
        %v2374 = vpop.f32.mrb[0].mxu0
        %v2375 = vadd.f32 0.0, %v2374
        %v2376 = vpop.f32.mrb[0].mxu0
        %2377 = vmatprep.mubr.f32.mxu0 0.0
        %2378 = vmatmul.mubr.f32.gmra.mrb[0].mxu0 %v2169
        %v2379 = vpop.f32.mrb[0].mxu0
        %v2380 = vadd.f32 0.0, %v2379
        %v2381 = vpop.f32.mrb[0].mxu0
        %2382 = vmatprep.mubr.f32.mxu0 0.0
        %2383 = vmatmul.mubr.f32.gmra.mrb[0].mxu0 %v2170
        %v2384 = vpop.f32.mrb[0].mxu0
        %v2385 = vadd.f32 0.0, %v2384
        %v2386 = vpop.f32.mrb[0].mxu0
        %2387 = vmatprep.mubr.f32.mxu0 0.0
        %2388 = vmatmul.mubr.f32.gmra.mrb[0].mxu0 %v2171
        %v2389 = vpop.f32.mrb[0].mxu0
        %v2390 = vadd.f32 0.0, %v2389
        %v2391 = vpop.f32.mrb[0].mxu0
        %2392 = vmatprep.mubr.f32.mxu0 0.0
        %2393 = vmatmul.mubr.f32.gmra.mrb[0].mxu0 %v2172
        %v2394 = vpop.f32.mrb[0].mxu0
        %v2395 = vadd.f32 0.0, %v2394
        %v2396 = vpop.f32.mrb[0].mxu0
        %2397 = vmatprep.mubr.f32.mxu0 0.0
        %2398 = vmatmul.mubr.f32.gmra.mrb[0].mxu0 %v2173
        %v2399 = vpop.f32.mrb[0].mxu0
        %v2400 = vadd.f32 0.0, %v2399
        %v2401 = vpop.f32.mrb[0].mxu0
        %2402 = vmatprep.mubr.f32.mxu0 0.0
        %2403 = vmatmul.mubr.f32.gmra.mrb[0].mxu0 %v2174
        %v2404 = vpop.f32.mrb[0].mxu0
        %v2405 = vadd.f32 0.0, %v2404
        %v2406 = vpop.f32.mrb[0].mxu0
        %2407 = vmatprep.mubr.f32.mxu0 0.0
        %2408 = vmatmul.mubr.f32.gmra.mrb[0].mxu0 %v2175
        %v2409 = vpop.f32.mrb[0].mxu0
        %v2410 = vadd.f32 0.0, %v2409
        %v2411 = vpop.f32.mrb[0].mxu0
        %2412 = vmatprep.mubr.f32.mxu0 0.0
        %2413 = vmatmul.mubr.f32.gmra.mrb[0].mxu0 %v2176
        %v2414 = vpop.f32.mrb[0].mxu0
        %v2415 = vadd.f32 0.0, %v2414
        %v2416 = vpop.f32.mrb[0].mxu0
        %2417 = vdwg.mxu0
        %v2418 = vadd.f32 %v2112, %v2260
        %v2419 = vadd.f32 %v2113, %v2265
        %v2420 = vadd.f32 %v2114, %v2270
        %v2421 = vadd.f32 %v2115, %v2275
        %v2422 = vadd.f32 %v2116, %v2280
        %v2423 = vadd.f32 %v2117, %v2285
        %v2424 = vadd.f32 %v2118, %v2290
        %v2425 = vadd.f32 %v2119, %v2295
        %v2426 = vadd.f32 %v2120, %v2300
        %v2427 = vadd.f32 %v2121, %v2305
        %v2428 = vadd.f32 %v2122, %v2310
        %v2429 = vadd.f32 %v2123, %v2315
        %v2430 = vadd.f32 %v2124, %v2320
        %v2431 = vadd.f32 %v2125, %v2325
        %v2432 = vadd.f32 %v2126, %v2330
        %v2433 = vadd.f32 %v2127, %v2335
        %v2434 = vadd.f32 %v2128, %v2340
        %v2435 = vadd.f32 %v2129, %v2345
        %v2436 = vadd.f32 %v2130, %v2350
        %v2437 = vadd.f32 %v2131, %v2355
        %v2438 = vadd.f32 %v2132, %v2360
        %v2439 = vadd.f32 %v2133, %v2365
        %v2440 = vadd.f32 %v2134, %v2370
        %v2441 = vadd.f32 %v2135, %v2375
        %v2442 = vadd.f32 %v2136, %v2380
        %v2443 = vadd.f32 %v2137, %v2385
        %v2444 = vadd.f32 %v2138, %v2390
        %v2445 = vadd.f32 %v2139, %v2395
        %v2446 = vadd.f32 %v2140, %v2400
        %v2447 = vadd.f32 %v2141, %v2405
        %v2448 = vadd.f32 %v2142, %v2410
        %v2449 = vadd.f32 %v2143, %v2415
        %v2450 = vld [vmem:[%s2144 + $0x8] sm:$0xff]
        %v2451 = vld [vmem:[%s2144 + $0x10] sm:$0xff]
        %v2452 = vld [vmem:[%s2144 + $0x28] sm:$0xff]
        %v2453 = vld [vmem:[%s2144 + $0x30] sm:$0xff]
        %v2454 = vld [vmem:[%s2144 + $0x48] sm:$0xff]
        %v2455 = vld [vmem:[%s2144 + $0x50] sm:$0xff]
        %v2456 = vld [vmem:[%s2144 + $0x68] sm:$0xff]
        %v2457 = vld [vmem:[%s2144 + $0x70] sm:$0xff]
        %v2458 = vld [vmem:[%s2144 + $0x88] sm:$0xff]
        %v2459 = vld [vmem:[%s2144 + $0x90] sm:$0xff]
        %v2460 = vld [vmem:[%s2144 + $0xa8] sm:$0xff]
        %v2461 = vld [vmem:[%s2144 + $0xb0] sm:$0xff]
        %v2462 = vld [vmem:[%s2144 + $0xc8] sm:$0xff]
        %v2463 = vld [vmem:[%s2144 + $0xd0] sm:$0xff]
        %v2464 = vld [vmem:[%s2144 + $0xe8] sm:$0xff]
        %v2465 = vld [vmem:[%s2144 + $0xf0] sm:$0xff]
        %v2466 = vld [vmem:[%s2144 + $0x108] sm:$0xff]
        %v2467 = vld [vmem:[%s2144 + $0x110] sm:$0xff]
        %v2468 = vld [vmem:[%s2144 + $0x128] sm:$0xff]
        %v2469 = vld [vmem:[%s2144 + $0x130] sm:$0xff]
        %v2470 = vld [vmem:[%s2144 + $0x148] sm:$0xff]
        %v2471 = vld [vmem:[%s2144 + $0x150] sm:$0xff]
        %v2472 = vld [vmem:[%s2144 + $0x168] sm:$0xff]
        %v2473 = vld [vmem:[%s2144 + $0x170] sm:$0xff]
        %v2474 = vld [vmem:[%s2144 + $0x188] sm:$0xff]
        %v2475 = vld [vmem:[%s2144 + $0x190] sm:$0xff]
        %v2476 = vld [vmem:[%s2144 + $0x1a8] sm:$0xff]
        %v2477 = vld [vmem:[%s2144 + $0x1b0] sm:$0xff]
        %v2478 = vld [vmem:[%s2144 + $0x1c8] sm:$0xff]
        %v2479 = vld [vmem:[%s2144 + $0x1d0] sm:$0xff]
        %v2480 = vld [vmem:[%s2144 + $0x1e8] sm:$0xff]
        %v2481 = vld [vmem:[%s2144 + $0x1f0] sm:$0xff]
        %v2482 = vld [vmem:[#allocation6 + $0x380] sm:$0xff]
        %v2483 = vld [vmem:[#allocation6 + $0x388] sm:$0xff]
        %v2484 = vld [vmem:[#allocation6 + $0x390] sm:$0xff]
        %v2485 = vld [vmem:[#allocation6 + $0x398] sm:$0xff]
        %v2486 = vld [vmem:[#allocation6 + $0x3a0] sm:$0xff]
        %v2487 = vld [vmem:[#allocation6 + $0x3a8] sm:$0xff]
        %v2488 = vld [vmem:[#allocation6 + $0x3b0] sm:$0xff]
        %v2489 = vld [vmem:[#allocation6 + $0x3b8] sm:$0xff]
        %v2490 = vld [vmem:[#allocation6 + $0x3c0] sm:$0xff]
        %v2491 = vld [vmem:[#allocation6 + $0x3c8] sm:$0xff]
        %v2492 = vld [vmem:[#allocation6 + $0x3d0] sm:$0xff]
        %v2493 = vld [vmem:[#allocation6 + $0x3d8] sm:$0xff]
        %v2494 = vld [vmem:[#allocation6 + $0x3e0] sm:$0xff]
        %v2495 = vld [vmem:[#allocation6 + $0x3e8] sm:$0xff]
        %v2496 = vld [vmem:[#allocation6 + $0x3f0] sm:$0xff]
        %v2497 = vld [vmem:[#allocation6 + $0x3f8] sm:$0xff]
        %2498 = vmatprep.subr.mxu0 0.0
        %2499 = vmatpush1.msra.mxu0 %v2482
        %2500 = vmatprep.subr.mxu0 0.0
        %2501 = vmatpush1.msra.mxu0 %v2483
        %2502 = vmatprep.subr.mxu0 0.0
        %2503 = vmatpush1.msra.mxu0 %v2484
        %2504 = vmatprep.subr.mxu0 0.0
        %2505 = vmatpush1.msra.mxu0 %v2485
        %2506 = vmatprep.subr.mxu0 0.0
        %2507 = vmatpush1.msra.mxu0 %v2486
        %2508 = vmatprep.subr.mxu0 0.0
        %2509 = vmatpush1.msra.mxu0 %v2487
        %2510 = vmatprep.subr.mxu0 0.0
        %2511 = vmatpush1.msra.mxu0 %v2488
        %2512 = vmatprep.subr.mxu0 0.0
        %2513 = vmatpush1.msra.mxu0 %v2489
        %2514 = vmatprep.subr.mxu0 0.0
        %2515 = vmatpush1.msra.mxu0 %v2490
        %2516 = vmatprep.subr.mxu0 0.0
        %2517 = vmatpush1.msra.mxu0 %v2491
        %2518 = vmatprep.subr.mxu0 0.0
        %2519 = vmatpush1.msra.mxu0 %v2492
        %2520 = vmatprep.subr.mxu0 0.0
        %2521 = vmatpush1.msra.mxu0 %v2493
        %2522 = vmatprep.subr.mxu0 0.0
        %2523 = vmatpush1.msra.mxu0 %v2494
        %2524 = vmatprep.subr.mxu0 0.0
        %2525 = vmatpush1.msra.mxu0 %v2495
        %2526 = vmatprep.subr.mxu0 0.0
        %2527 = vmatpush1.msra.mxu0 %v2496
        %2528 = vmatprep.subr.mxu0 0.0
        %2529 = vmatpush1.msra.mxu0 %v2497
        %2530 = vmatprep.subr.mxu0 0.0
        %2531 = vmatpush1.msra.mxu0 0.0
        %2532 = vmatprep.subr.mxu0 0.0
        %2533 = vmatpush1.msra.mxu0 0.0
        %2534 = vmatprep.subr.mxu0 0.0
        %2535 = vmatpush1.msra.mxu0 0.0
        %2536 = vmatprep.subr.mxu0 0.0
        %2537 = vmatpush1.msra.mxu0 0.0
        %2538 = vmatprep.subr.mxu0 0.0
        %2539 = vmatpush1.msra.mxu0 0.0
        %2540 = vmatprep.subr.mxu0 0.0
        %2541 = vmatpush1.msra.mxu0 0.0
        %2542 = vmatprep.subr.mxu0 0.0
        %2543 = vmatpush1.msra.mxu0 0.0
        %2544 = vmatprep.subr.mxu0 0.0
        %2545 = vmatpush1.msra.mxu0 0.0
        %2546 = vmatprep.subr.mxu0 0.0
        %2547 = vmatpush1.msra.mxu0 0.0
        %2548 = vmatprep.subr.mxu0 0.0
        %2549 = vmatpush1.msra.mxu0 0.0
        %2550 = vmatprep.subr.mxu0 0.0
        %2551 = vmatpush1.msra.mxu0 0.0
        %2552 = vmatprep.subr.mxu0 0.0
        %2553 = vmatpush1.msra.mxu0 0.0
        %2554 = vmatprep.subr.mxu0 0.0
        %2555 = vmatpush1.msra.mxu0 0.0
        %2556 = vmatprep.subr.mxu0 0.0
        %2557 = vmatpush1.msra.mxu0 0.0
        %2558 = vmatprep.subr.mxu0 0.0
        %2559 = vmatpush1.msra.mxu0 0.0
        %2560 = vmatprep.subr.mxu0 0.0
        %2561 = vmatpush1.msra.mxu0 0.0
        %2562 = vmatprep.mubr.f32.mxu0 0.0
        %2563 = vmatmul.mubr.f32.gmra.mrb[0].mxu0 %v2450
        %v2564 = vpop.f32.mrb[0].mxu0
        %v2565 = vadd.f32 0.0, %v2564
        %v2566 = vpop.f32.mrb[0].mxu0
        %2567 = vmatprep.mubr.f32.mxu0 0.0
        %2568 = vmatmul.mubr.f32.gmra.mrb[0].mxu0 %v2451
        %v2569 = vpop.f32.mrb[0].mxu0
        %v2570 = vadd.f32 0.0, %v2569
        %v2571 = vpop.f32.mrb[0].mxu0
        %2572 = vmatprep.mubr.f32.mxu0 0.0
        %2573 = vmatmul.mubr.f32.gmra.mrb[0].mxu0 %v2452
        %v2574 = vpop.f32.mrb[0].mxu0
        %v2575 = vadd.f32 0.0, %v2574
        %v2576 = vpop.f32.mrb[0].mxu0
        %2577 = vmatprep.mubr.f32.mxu0 0.0
        %2578 = vmatmul.mubr.f32.gmra.mrb[0].mxu0 %v2453
        %v2579 = vpop.f32.mrb[0].mxu0
        %v2580 = vadd.f32 0.0, %v2579
        %v2581 = vpop.f32.mrb[0].mxu0
        %2582 = vmatprep.mubr.f32.mxu0 0.0
        %2583 = vmatmul.mubr.f32.gmra.mrb[0].mxu0 %v2454
        %v2584 = vpop.f32.mrb[0].mxu0
        %v2585 = vadd.f32 0.0, %v2584
        %v2586 = vpop.f32.mrb[0].mxu0
        %2587 = vmatprep.mubr.f32.mxu0 0.0
        %2588 = vmatmul.mubr.f32.gmra.mrb[0].mxu0 %v2455
        %v2589 = vpop.f32.mrb[0].mxu0
        %v2590 = vadd.f32 0.0, %v2589
        %v2591 = vpop.f32.mrb[0].mxu0
        %2592 = vmatprep.mubr.f32.mxu0 0.0
        %2593 = vmatmul.mubr.f32.gmra.mrb[0].mxu0 %v2456
        %v2594 = vpop.f32.mrb[0].mxu0
        %v2595 = vadd.f32 0.0, %v2594
        %v2596 = vpop.f32.mrb[0].mxu0
        %2597 = vmatprep.mubr.f32.mxu0 0.0
        %2598 = vmatmul.mubr.f32.gmra.mrb[0].mxu0 %v2457
        %v2599 = vpop.f32.mrb[0].mxu0
        %v2600 = vadd.f32 0.0, %v2599
        %v2601 = vpop.f32.mrb[0].mxu0
        %2602 = vmatprep.mubr.f32.mxu0 0.0
        %2603 = vmatmul.mubr.f32.gmra.mrb[0].mxu0 %v2458
        %v2604 = vpop.f32.mrb[0].mxu0
        %v2605 = vadd.f32 0.0, %v2604
        %v2606 = vpop.f32.mrb[0].mxu0
        %2607 = vmatprep.mubr.f32.mxu0 0.0
        %2608 = vmatmul.mubr.f32.gmra.mrb[0].mxu0 %v2459
        %v2609 = vpop.f32.mrb[0].mxu0
        %v2610 = vadd.f32 0.0, %v2609
        %v2611 = vpop.f32.mrb[0].mxu0
        %2612 = vmatprep.mubr.f32.mxu0 0.0
        %2613 = vmatmul.mubr.f32.gmra.mrb[0].mxu0 %v2460
        %v2614 = vpop.f32.mrb[0].mxu0
        %v2615 = vadd.f32 0.0, %v2614
        %v2616 = vpop.f32.mrb[0].mxu0
        %2617 = vmatprep.mubr.f32.mxu0 0.0
        %2618 = vmatmul.mubr.f32.gmra.mrb[0].mxu0 %v2461
        %v2619 = vpop.f32.mrb[0].mxu0
        %v2620 = vadd.f32 0.0, %v2619
        %v2621 = vpop.f32.mrb[0].mxu0
        %2622 = vmatprep.mubr.f32.mxu0 0.0
        %2623 = vmatmul.mubr.f32.gmra.mrb[0].mxu0 %v2462
        %v2624 = vpop.f32.mrb[0].mxu0
        %v2625 = vadd.f32 0.0, %v2624
        %v2626 = vpop.f32.mrb[0].mxu0
        %2627 = vmatprep.mubr.f32.mxu0 0.0
        %2628 = vmatmul.mubr.f32.gmra.mrb[0].mxu0 %v2463
        %v2629 = vpop.f32.mrb[0].mxu0
        %v2630 = vadd.f32 0.0, %v2629
        %v2631 = vpop.f32.mrb[0].mxu0
        %2632 = vmatprep.mubr.f32.mxu0 0.0
        %2633 = vmatmul.mubr.f32.gmra.mrb[0].mxu0 %v2464
        %v2634 = vpop.f32.mrb[0].mxu0
        %v2635 = vadd.f32 0.0, %v2634
        %v2636 = vpop.f32.mrb[0].mxu0
        %2637 = vmatprep.mubr.f32.mxu0 0.0
        %2638 = vmatmul.mubr.f32.gmra.mrb[0].mxu0 %v2465
        %v2639 = vpop.f32.mrb[0].mxu0
        %v2640 = vadd.f32 0.0, %v2639
        %v2641 = vpop.f32.mrb[0].mxu0
        %2642 = vmatprep.mubr.f32.mxu0 0.0
        %2643 = vmatmul.mubr.f32.gmra.mrb[0].mxu0 %v2466
        %v2644 = vpop.f32.mrb[0].mxu0
        %v2645 = vadd.f32 0.0, %v2644
        %v2646 = vpop.f32.mrb[0].mxu0
        %2647 = vmatprep.mubr.f32.mxu0 0.0
        %2648 = vmatmul.mubr.f32.gmra.mrb[0].mxu0 %v2467
        %v2649 = vpop.f32.mrb[0].mxu0
        %v2650 = vadd.f32 0.0, %v2649
        %v2651 = vpop.f32.mrb[0].mxu0
        %2652 = vmatprep.mubr.f32.mxu0 0.0
        %2653 = vmatmul.mubr.f32.gmra.mrb[0].mxu0 %v2468
        %v2654 = vpop.f32.mrb[0].mxu0
        %v2655 = vadd.f32 0.0, %v2654
        %v2656 = vpop.f32.mrb[0].mxu0
        %2657 = vmatprep.mubr.f32.mxu0 0.0
        %2658 = vmatmul.mubr.f32.gmra.mrb[0].mxu0 %v2469
        %v2659 = vpop.f32.mrb[0].mxu0
        %v2660 = vadd.f32 0.0, %v2659
        %v2661 = vpop.f32.mrb[0].mxu0
        %2662 = vmatprep.mubr.f32.mxu0 0.0
        %2663 = vmatmul.mubr.f32.gmra.mrb[0].mxu0 %v2470
        %v2664 = vpop.f32.mrb[0].mxu0
        %v2665 = vadd.f32 0.0, %v2664
        %v2666 = vpop.f32.mrb[0].mxu0
        %2667 = vmatprep.mubr.f32.mxu0 0.0
        %2668 = vmatmul.mubr.f32.gmra.mrb[0].mxu0 %v2471
        %v2669 = vpop.f32.mrb[0].mxu0
        %v2670 = vadd.f32 0.0, %v2669
        %v2671 = vpop.f32.mrb[0].mxu0
        %2672 = vmatprep.mubr.f32.mxu0 0.0
        %2673 = vmatmul.mubr.f32.gmra.mrb[0].mxu0 %v2472
        %v2674 = vpop.f32.mrb[0].mxu0
        %v2675 = vadd.f32 0.0, %v2674
        %v2676 = vpop.f32.mrb[0].mxu0
        %2677 = vmatprep.mubr.f32.mxu0 0.0
        %2678 = vmatmul.mubr.f32.gmra.mrb[0].mxu0 %v2473
        %v2679 = vpop.f32.mrb[0].mxu0
        %v2680 = vadd.f32 0.0, %v2679
        %v2681 = vpop.f32.mrb[0].mxu0
        %2682 = vmatprep.mubr.f32.mxu0 0.0
        %2683 = vmatmul.mubr.f32.gmra.mrb[0].mxu0 %v2474
        %v2684 = vpop.f32.mrb[0].mxu0
        %v2685 = vadd.f32 0.0, %v2684
        %v2686 = vpop.f32.mrb[0].mxu0
        %2687 = vmatprep.mubr.f32.mxu0 0.0
        %2688 = vmatmul.mubr.f32.gmra.mrb[0].mxu0 %v2475
        %v2689 = vpop.f32.mrb[0].mxu0
        %v2690 = vadd.f32 0.0, %v2689
        %v2691 = vpop.f32.mrb[0].mxu0
        %2692 = vmatprep.mubr.f32.mxu0 0.0
        %2693 = vmatmul.mubr.f32.gmra.mrb[0].mxu0 %v2476
        %v2694 = vpop.f32.mrb[0].mxu0
        %v2695 = vadd.f32 0.0, %v2694
        %v2696 = vpop.f32.mrb[0].mxu0
        %2697 = vmatprep.mubr.f32.mxu0 0.0
        %2698 = vmatmul.mubr.f32.gmra.mrb[0].mxu0 %v2477
        %v2699 = vpop.f32.mrb[0].mxu0
        %v2700 = vadd.f32 0.0, %v2699
        %v2701 = vpop.f32.mrb[0].mxu0
        %2702 = vmatprep.mubr.f32.mxu0 0.0
        %2703 = vmatmul.mubr.f32.gmra.mrb[0].mxu0 %v2478
        %v2704 = vpop.f32.mrb[0].mxu0
        %v2705 = vadd.f32 0.0, %v2704
        %v2706 = vpop.f32.mrb[0].mxu0
        %2707 = vmatprep.mubr.f32.mxu0 0.0
        %2708 = vmatmul.mubr.f32.gmra.mrb[0].mxu0 %v2479
        %v2709 = vpop.f32.mrb[0].mxu0
        %v2710 = vadd.f32 0.0, %v2709
        %v2711 = vpop.f32.mrb[0].mxu0
        %2712 = vmatprep.mubr.f32.mxu0 0.0
        %2713 = vmatmul.mubr.f32.gmra.mrb[0].mxu0 %v2480
        %v2714 = vpop.f32.mrb[0].mxu0
        %v2715 = vadd.f32 0.0, %v2714
        %v2716 = vpop.f32.mrb[0].mxu0
        %2717 = vmatprep.mubr.f32.mxu0 0.0
        %2718 = vmatmul.mubr.f32.gmra.mrb[0].mxu0 %v2481
        %v2719 = vpop.f32.mrb[0].mxu0
        %v2720 = vadd.f32 0.0, %v2719
        %v2721 = vpop.f32.mrb[0].mxu0
        %2722 = vdwg.mxu0
        %v2723 = vadd.f32 %v2418, %v2565
        %v2724 = vadd.f32 %v2419, %v2570
        %v2725 = vadd.f32 %v2420, %v2575
        %v2726 = vadd.f32 %v2421, %v2580
        %v2727 = vadd.f32 %v2422, %v2585
        %v2728 = vadd.f32 %v2423, %v2590
        %v2729 = vadd.f32 %v2424, %v2595
        %v2730 = vadd.f32 %v2425, %v2600
        %v2731 = vadd.f32 %v2426, %v2605
        %v2732 = vadd.f32 %v2427, %v2610
        %v2733 = vadd.f32 %v2428, %v2615
        %v2734 = vadd.f32 %v2429, %v2620
        %v2735 = vadd.f32 %v2430, %v2625
        %v2736 = vadd.f32 %v2431, %v2630
        %v2737 = vadd.f32 %v2432, %v2635
        %v2738 = vadd.f32 %v2433, %v2640
        %v2739 = vadd.f32 %v2434, %v2645
        %v2740 = vadd.f32 %v2435, %v2650
        %v2741 = vadd.f32 %v2436, %v2655
        %v2742 = vadd.f32 %v2437, %v2660
        %v2743 = vadd.f32 %v2438, %v2665
        %v2744 = vadd.f32 %v2439, %v2670
        %v2745 = vadd.f32 %v2440, %v2675
        %v2746 = vadd.f32 %v2441, %v2680
        %v2747 = vadd.f32 %v2442, %v2685
        %v2748 = vadd.f32 %v2443, %v2690
        %v2749 = vadd.f32 %v2444, %v2695
        %v2750 = vadd.f32 %v2445, %v2700
        %v2751 = vadd.f32 %v2446, %v2705
        %v2752 = vadd.f32 %v2447, %v2710
        %v2753 = vadd.f32 %v2448, %v2715
        %v2754 = vadd.f32 %v2449, %v2720
        %v2755 = vld [vmem:[%s2144 + $0x9] sm:$0xff]
        %v2756 = vld [vmem:[%s2144 + $0x11] sm:$0xff]
        %v2757 = vld [vmem:[%s2144 + $0x29] sm:$0xff]
        %v2758 = vld [vmem:[%s2144 + $0x31] sm:$0xff]
        %v2759 = vld [vmem:[%s2144 + $0x49] sm:$0xff]
        %v2760 = vld [vmem:[%s2144 + $0x51] sm:$0xff]
        %v2761 = vld [vmem:[%s2144 + $0x69] sm:$0xff]
        %v2762 = vld [vmem:[%s2144 + $0x71] sm:$0xff]
        %v2763 = vld [vmem:[%s2144 + $0x89] sm:$0xff]
        %v2764 = vld [vmem:[%s2144 + $0x91] sm:$0xff]
        %v2765 = vld [vmem:[%s2144 + $0xa9] sm:$0xff]
        %v2766 = vld [vmem:[%s2144 + $0xb1] sm:$0xff]
        %v2767 = vld [vmem:[%s2144 + $0xc9] sm:$0xff]
        %v2768 = vld [vmem:[%s2144 + $0xd1] sm:$0xff]
        %v2769 = vld [vmem:[%s2144 + $0xe9] sm:$0xff]
        %v2770 = vld [vmem:[%s2144 + $0xf1] sm:$0xff]
        %v2771 = vld [vmem:[%s2144 + $0x109] sm:$0xff]
        %v2772 = vld [vmem:[%s2144 + $0x111] sm:$0xff]
        %v2773 = vld [vmem:[%s2144 + $0x129] sm:$0xff]
        %v2774 = vld [vmem:[%s2144 + $0x131] sm:$0xff]
        %v2775 = vld [vmem:[%s2144 + $0x149] sm:$0xff]
        %v2776 = vld [vmem:[%s2144 + $0x151] sm:$0xff]
        %v2777 = vld [vmem:[%s2144 + $0x169] sm:$0xff]
        %v2778 = vld [vmem:[%s2144 + $0x171] sm:$0xff]
        %v2779 = vld [vmem:[%s2144 + $0x189] sm:$0xff]
        %v2780 = vld [vmem:[%s2144 + $0x191] sm:$0xff]
        %v2781 = vld [vmem:[%s2144 + $0x1a9] sm:$0xff]
        %v2782 = vld [vmem:[%s2144 + $0x1b1] sm:$0xff]
        %v2783 = vld [vmem:[%s2144 + $0x1c9] sm:$0xff]
        %v2784 = vld [vmem:[%s2144 + $0x1d1] sm:$0xff]
        %v2785 = vld [vmem:[%s2144 + $0x1e9] sm:$0xff]
        %v2786 = vld [vmem:[%s2144 + $0x1f1] sm:$0xff]
        %v2787 = vld [vmem:[#allocation6 + $0x400] sm:$0xff]
        %v2788 = vld [vmem:[#allocation6 + $0x408] sm:$0xff]
        %v2789 = vld [vmem:[#allocation6 + $0x410] sm:$0xff]
        %v2790 = vld [vmem:[#allocation6 + $0x418] sm:$0xff]
        %v2791 = vld [vmem:[#allocation6 + $0x420] sm:$0xff]
        %v2792 = vld [vmem:[#allocation6 + $0x428] sm:$0xff]
        %v2793 = vld [vmem:[#allocation6 + $0x430] sm:$0xff]
        %v2794 = vld [vmem:[#allocation6 + $0x438] sm:$0xff]
        %v2795 = vld [vmem:[#allocation6 + $0x440] sm:$0xff]
        %v2796 = vld [vmem:[#allocation6 + $0x448] sm:$0xff]
        %v2797 = vld [vmem:[#allocation6 + $0x450] sm:$0xff]
        %v2798 = vld [vmem:[#allocation6 + $0x458] sm:$0xff]
        %v2799 = vld [vmem:[#allocation6 + $0x460] sm:$0xff]
        %v2800 = vld [vmem:[#allocation6 + $0x468] sm:$0xff]
        %v2801 = vld [vmem:[#allocation6 + $0x470] sm:$0xff]
        %v2802 = vld [vmem:[#allocation6 + $0x478] sm:$0xff]
        %2803 = vmatprep.subr.mxu0 0.0
        %2804 = vmatpush1.msra.mxu0 %v2787
        %2805 = vmatprep.subr.mxu0 0.0
        %2806 = vmatpush1.msra.mxu0 %v2788
        %2807 = vmatprep.subr.mxu0 0.0
        %2808 = vmatpush1.msra.mxu0 %v2789
        %2809 = vmatprep.subr.mxu0 0.0
        %2810 = vmatpush1.msra.mxu0 %v2790
        %2811 = vmatprep.subr.mxu0 0.0
        %2812 = vmatpush1.msra.mxu0 %v2791
        %2813 = vmatprep.subr.mxu0 0.0
        %2814 = vmatpush1.msra.mxu0 %v2792
        %2815 = vmatprep.subr.mxu0 0.0
        %2816 = vmatpush1.msra.mxu0 %v2793
        %2817 = vmatprep.subr.mxu0 0.0
        %2818 = vmatpush1.msra.mxu0 %v2794
        %2819 = vmatprep.subr.mxu0 0.0
        %2820 = vmatpush1.msra.mxu0 %v2795
        %2821 = vmatprep.subr.mxu0 0.0
        %2822 = vmatpush1.msra.mxu0 %v2796
        %2823 = vmatprep.subr.mxu0 0.0
        %2824 = vmatpush1.msra.mxu0 %v2797
        %2825 = vmatprep.subr.mxu0 0.0
        %2826 = vmatpush1.msra.mxu0 %v2798
        %2827 = vmatprep.subr.mxu0 0.0
        %2828 = vmatpush1.msra.mxu0 %v2799
        %2829 = vmatprep.subr.mxu0 0.0
        %2830 = vmatpush1.msra.mxu0 %v2800
        %2831 = vmatprep.subr.mxu0 0.0
        %2832 = vmatpush1.msra.mxu0 %v2801
        %2833 = vmatprep.subr.mxu0 0.0
        %2834 = vmatpush1.msra.mxu0 %v2802
        %2835 = vmatprep.subr.mxu0 0.0
        %2836 = vmatpush1.msra.mxu0 0.0
        %2837 = vmatprep.subr.mxu0 0.0
        %2838 = vmatpush1.msra.mxu0 0.0
        %2839 = vmatprep.subr.mxu0 0.0
        %2840 = vmatpush1.msra.mxu0 0.0
        %2841 = vmatprep.subr.mxu0 0.0
        %2842 = vmatpush1.msra.mxu0 0.0
        %2843 = vmatprep.subr.mxu0 0.0
        %2844 = vmatpush1.msra.mxu0 0.0
        %2845 = vmatprep.subr.mxu0 0.0
        %2846 = vmatpush1.msra.mxu0 0.0
        %2847 = vmatprep.subr.mxu0 0.0
        %2848 = vmatpush1.msra.mxu0 0.0
        %2849 = vmatprep.subr.mxu0 0.0
        %2850 = vmatpush1.msra.mxu0 0.0
        %2851 = vmatprep.subr.mxu0 0.0
        %2852 = vmatpush1.msra.mxu0 0.0
        %2853 = vmatprep.subr.mxu0 0.0
        %2854 = vmatpush1.msra.mxu0 0.0
        %2855 = vmatprep.subr.mxu0 0.0
        %2856 = vmatpush1.msra.mxu0 0.0
        %2857 = vmatprep.subr.mxu0 0.0
        %2858 = vmatpush1.msra.mxu0 0.0
        %2859 = vmatprep.subr.mxu0 0.0
        %2860 = vmatpush1.msra.mxu0 0.0
        %2861 = vmatprep.subr.mxu0 0.0
        %2862 = vmatpush1.msra.mxu0 0.0
        %2863 = vmatprep.subr.mxu0 0.0
        %2864 = vmatpush1.msra.mxu0 0.0
        %2865 = vmatprep.subr.mxu0 0.0
        %2866 = vmatpush1.msra.mxu0 0.0
        %2867 = vmatprep.mubr.f32.mxu0 0.0
        %2868 = vmatmul.mubr.f32.gmra.mrb[0].mxu0 %v2755
        %v2869 = vpop.f32.mrb[0].mxu0
        %v2870 = vadd.f32 0.0, %v2869
        %v2871 = vpop.f32.mrb[0].mxu0
        %2872 = vmatprep.mubr.f32.mxu0 0.0
        %2873 = vmatmul.mubr.f32.gmra.mrb[0].mxu0 %v2756
        %v2874 = vpop.f32.mrb[0].mxu0
        %v2875 = vadd.f32 0.0, %v2874
        %v2876 = vpop.f32.mrb[0].mxu0
        %2877 = vmatprep.mubr.f32.mxu0 0.0
        %2878 = vmatmul.mubr.f32.gmra.mrb[0].mxu0 %v2757
        %v2879 = vpop.f32.mrb[0].mxu0
        %v2880 = vadd.f32 0.0, %v2879
        %v2881 = vpop.f32.mrb[0].mxu0
        %2882 = vmatprep.mubr.f32.mxu0 0.0
        %2883 = vmatmul.mubr.f32.gmra.mrb[0].mxu0 %v2758
        %v2884 = vpop.f32.mrb[0].mxu0
        %v2885 = vadd.f32 0.0, %v2884
        %v2886 = vpop.f32.mrb[0].mxu0
        %2887 = vmatprep.mubr.f32.mxu0 0.0
        %2888 = vmatmul.mubr.f32.gmra.mrb[0].mxu0 %v2759
        %v2889 = vpop.f32.mrb[0].mxu0
        %v2890 = vadd.f32 0.0, %v2889
        %v2891 = vpop.f32.mrb[0].mxu0
        %2892 = vmatprep.mubr.f32.mxu0 0.0
        %2893 = vmatmul.mubr.f32.gmra.mrb[0].mxu0 %v2760
        %v2894 = vpop.f32.mrb[0].mxu0
        %v2895 = vadd.f32 0.0, %v2894
        %v2896 = vpop.f32.mrb[0].mxu0
        %2897 = vmatprep.mubr.f32.mxu0 0.0
        %2898 = vmatmul.mubr.f32.gmra.mrb[0].mxu0 %v2761
        %v2899 = vpop.f32.mrb[0].mxu0
        %v2900 = vadd.f32 0.0, %v2899
        %v2901 = vpop.f32.mrb[0].mxu0
        %2902 = vmatprep.mubr.f32.mxu0 0.0
        %2903 = vmatmul.mubr.f32.gmra.mrb[0].mxu0 %v2762
        %v2904 = vpop.f32.mrb[0].mxu0
        %v2905 = vadd.f32 0.0, %v2904
        %v2906 = vpop.f32.mrb[0].mxu0
        %2907 = vmatprep.mubr.f32.mxu0 0.0
        %2908 = vmatmul.mubr.f32.gmra.mrb[0].mxu0 %v2763
        %v2909 = vpop.f32.mrb[0].mxu0
        %v2910 = vadd.f32 0.0, %v2909
        %v2911 = vpop.f32.mrb[0].mxu0
        %2912 = vmatprep.mubr.f32.mxu0 0.0
        %2913 = vmatmul.mubr.f32.gmra.mrb[0].mxu0 %v2764
        %v2914 = vpop.f32.mrb[0].mxu0
        %v2915 = vadd.f32 0.0, %v2914
        %v2916 = vpop.f32.mrb[0].mxu0
        %2917 = vmatprep.mubr.f32.mxu0 0.0
        %2918 = vmatmul.mubr.f32.gmra.mrb[0].mxu0 %v2765
        %v2919 = vpop.f32.mrb[0].mxu0
        %v2920 = vadd.f32 0.0, %v2919
        %v2921 = vpop.f32.mrb[0].mxu0
        %2922 = vmatprep.mubr.f32.mxu0 0.0
        %2923 = vmatmul.mubr.f32.gmra.mrb[0].mxu0 %v2766
        %v2924 = vpop.f32.mrb[0].mxu0
        %v2925 = vadd.f32 0.0, %v2924
        %v2926 = vpop.f32.mrb[0].mxu0
        %2927 = vmatprep.mubr.f32.mxu0 0.0
        %2928 = vmatmul.mubr.f32.gmra.mrb[0].mxu0 %v2767
        %v2929 = vpop.f32.mrb[0].mxu0
        %v2930 = vadd.f32 0.0, %v2929
        %v2931 = vpop.f32.mrb[0].mxu0
        %2932 = vmatprep.mubr.f32.mxu0 0.0
        %2933 = vmatmul.mubr.f32.gmra.mrb[0].mxu0 %v2768
        %v2934 = vpop.f32.mrb[0].mxu0
        %v2935 = vadd.f32 0.0, %v2934
        %v2936 = vpop.f32.mrb[0].mxu0
        %2937 = vmatprep.mubr.f32.mxu0 0.0
        %2938 = vmatmul.mubr.f32.gmra.mrb[0].mxu0 %v2769
        %v2939 = vpop.f32.mrb[0].mxu0
        %v2940 = vadd.f32 0.0, %v2939
        %v2941 = vpop.f32.mrb[0].mxu0
        %2942 = vmatprep.mubr.f32.mxu0 0.0
        %2943 = vmatmul.mubr.f32.gmra.mrb[0].mxu0 %v2770
        %v2944 = vpop.f32.mrb[0].mxu0
        %v2945 = vadd.f32 0.0, %v2944
        %v2946 = vpop.f32.mrb[0].mxu0
        %2947 = vmatprep.mubr.f32.mxu0 0.0
        %2948 = vmatmul.mubr.f32.gmra.mrb[0].mxu0 %v2771
        %v2949 = vpop.f32.mrb[0].mxu0
        %v2950 = vadd.f32 0.0, %v2949
        %v2951 = vpop.f32.mrb[0].mxu0
        %2952 = vmatprep.mubr.f32.mxu0 0.0
        %2953 = vmatmul.mubr.f32.gmra.mrb[0].mxu0 %v2772
        %v2954 = vpop.f32.mrb[0].mxu0
        %v2955 = vadd.f32 0.0, %v2954
        %v2956 = vpop.f32.mrb[0].mxu0
        %2957 = vmatprep.mubr.f32.mxu0 0.0
        %2958 = vmatmul.mubr.f32.gmra.mrb[0].mxu0 %v2773
        %v2959 = vpop.f32.mrb[0].mxu0
        %v2960 = vadd.f32 0.0, %v2959
        %v2961 = vpop.f32.mrb[0].mxu0
        %2962 = vmatprep.mubr.f32.mxu0 0.0
        %2963 = vmatmul.mubr.f32.gmra.mrb[0].mxu0 %v2774
        %v2964 = vpop.f32.mrb[0].mxu0
        %v2965 = vadd.f32 0.0, %v2964
        %v2966 = vpop.f32.mrb[0].mxu0
        %2967 = vmatprep.mubr.f32.mxu0 0.0
        %2968 = vmatmul.mubr.f32.gmra.mrb[0].mxu0 %v2775
        %v2969 = vpop.f32.mrb[0].mxu0
        %v2970 = vadd.f32 0.0, %v2969
        %v2971 = vpop.f32.mrb[0].mxu0
        %2972 = vmatprep.mubr.f32.mxu0 0.0
        %2973 = vmatmul.mubr.f32.gmra.mrb[0].mxu0 %v2776
        %v2974 = vpop.f32.mrb[0].mxu0
        %v2975 = vadd.f32 0.0, %v2974
        %v2976 = vpop.f32.mrb[0].mxu0
        %2977 = vmatprep.mubr.f32.mxu0 0.0
        %2978 = vmatmul.mubr.f32.gmra.mrb[0].mxu0 %v2777
        %v2979 = vpop.f32.mrb[0].mxu0
        %v2980 = vadd.f32 0.0, %v2979
        %v2981 = vpop.f32.mrb[0].mxu0
        %2982 = vmatprep.mubr.f32.mxu0 0.0
        %2983 = vmatmul.mubr.f32.gmra.mrb[0].mxu0 %v2778
        %v2984 = vpop.f32.mrb[0].mxu0
        %v2985 = vadd.f32 0.0, %v2984
        %v2986 = vpop.f32.mrb[0].mxu0
        %2987 = vmatprep.mubr.f32.mxu0 0.0
        %2988 = vmatmul.mubr.f32.gmra.mrb[0].mxu0 %v2779
        %v2989 = vpop.f32.mrb[0].mxu0
        %v2990 = vadd.f32 0.0, %v2989
        %v2991 = vpop.f32.mrb[0].mxu0
        %2992 = vmatprep.mubr.f32.mxu0 0.0
        %2993 = vmatmul.mubr.f32.gmra.mrb[0].mxu0 %v2780
        %v2994 = vpop.f32.mrb[0].mxu0
        %v2995 = vadd.f32 0.0, %v2994
        %v2996 = vpop.f32.mrb[0].mxu0
        %2997 = vmatprep.mubr.f32.mxu0 0.0
        %2998 = vmatmul.mubr.f32.gmra.mrb[0].mxu0 %v2781
        %v2999 = vpop.f32.mrb[0].mxu0
        %v3000 = vadd.f32 0.0, %v2999
        %v3001 = vpop.f32.mrb[0].mxu0
        %3002 = vmatprep.mubr.f32.mxu0 0.0
        %3003 = vmatmul.mubr.f32.gmra.mrb[0].mxu0 %v2782
        %v3004 = vpop.f32.mrb[0].mxu0
        %v3005 = vadd.f32 0.0, %v3004
        %v3006 = vpop.f32.mrb[0].mxu0
        %3007 = vmatprep.mubr.f32.mxu0 0.0
        %3008 = vmatmul.mubr.f32.gmra.mrb[0].mxu0 %v2783
        %v3009 = vpop.f32.mrb[0].mxu0
        %v3010 = vadd.f32 0.0, %v3009
        %v3011 = vpop.f32.mrb[0].mxu0
        %3012 = vmatprep.mubr.f32.mxu0 0.0
        %3013 = vmatmul.mubr.f32.gmra.mrb[0].mxu0 %v2784
        %v3014 = vpop.f32.mrb[0].mxu0
        %v3015 = vadd.f32 0.0, %v3014
        %v3016 = vpop.f32.mrb[0].mxu0
        %3017 = vmatprep.mubr.f32.mxu0 0.0
        %3018 = vmatmul.mubr.f32.gmra.mrb[0].mxu0 %v2785
        %v3019 = vpop.f32.mrb[0].mxu0
        %v3020 = vadd.f32 0.0, %v3019
        %v3021 = vpop.f32.mrb[0].mxu0
        %3022 = vmatprep.mubr.f32.mxu0 0.0
        %3023 = vmatmul.mubr.f32.gmra.mrb[0].mxu0 %v2786
        %v3024 = vpop.f32.mrb[0].mxu0
        %v3025 = vadd.f32 0.0, %v3024
        %v3026 = vpop.f32.mrb[0].mxu0
        %3027 = vdwg.mxu0
        %v3028 = vadd.f32 %v2723, %v2870
        %v3029 = vadd.f32 %v2724, %v2875
        %v3030 = vadd.f32 %v2725, %v2880
        %v3031 = vadd.f32 %v2726, %v2885
        %v3032 = vadd.f32 %v2727, %v2890
        %v3033 = vadd.f32 %v2728, %v2895
        %v3034 = vadd.f32 %v2729, %v2900
        %v3035 = vadd.f32 %v2730, %v2905
        %v3036 = vadd.f32 %v2731, %v2910
        %v3037 = vadd.f32 %v2732, %v2915
        %v3038 = vadd.f32 %v2733, %v2920
        %v3039 = vadd.f32 %v2734, %v2925
        %v3040 = vadd.f32 %v2735, %v2930
        %v3041 = vadd.f32 %v2736, %v2935
        %v3042 = vadd.f32 %v2737, %v2940
        %v3043 = vadd.f32 %v2738, %v2945
        %v3044 = vadd.f32 %v2739, %v2950
        %v3045 = vadd.f32 %v2740, %v2955
        %v3046 = vadd.f32 %v2741, %v2960
        %v3047 = vadd.f32 %v2742, %v2965
        %v3048 = vadd.f32 %v2743, %v2970
        %v3049 = vadd.f32 %v2744, %v2975
        %v3050 = vadd.f32 %v2745, %v2980
        %v3051 = vadd.f32 %v2746, %v2985
        %v3052 = vadd.f32 %v2747, %v2990
        %v3053 = vadd.f32 %v2748, %v2995
        %v3054 = vadd.f32 %v2749, %v3000
        %v3055 = vadd.f32 %v2750, %v3005
        %v3056 = vadd.f32 %v2751, %v3010
        %v3057 = vadd.f32 %v2752, %v3015
        %v3058 = vadd.f32 %v2753, %v3020
        %v3059 = vadd.f32 %v2754, %v3025
        %v3060 = vadd.f32 %v3028, %v3029
        %v3061 = vadd.f32 %v3060, %v3030
        %v3062 = vadd.f32 %v3061, %v3031
        %v3063 = vadd.f32 %v3062, %v3032
        %v3064 = vadd.f32 %v3063, %v3033
        %v3065 = vadd.f32 %v3064, %v3034
        %v3066 = vadd.f32 %v3065, %v3035
        %v3067 = vadd.f32 %v3066, %v3036
        %v3068 = vadd.f32 %v3067, %v3037
        %v3069 = vadd.f32 %v3068, %v3038
        %v3070 = vadd.f32 %v3069, %v3039
        %v3071 = vadd.f32 %v3070, %v3040
        %v3072 = vadd.f32 %v3071, %v3041
        %v3073 = vadd.f32 %v3072, %v3042
        %v3074 = vadd.f32 %v3073, %v3043
        %v3075 = vadd.f32 %v3074, %v3044
        %v3076 = vadd.f32 %v3075, %v3045
        %v3077 = vadd.f32 %v3076, %v3046
        %v3078 = vadd.f32 %v3077, %v3047
        %v3079 = vadd.f32 %v3078, %v3048
        %v3080 = vadd.f32 %v3079, %v3049
        %v3081 = vadd.f32 %v3080, %v3050
        %v3082 = vadd.f32 %v3081, %v3051
        %v3083 = vadd.f32 %v3082, %v3052
        %v3084 = vadd.f32 %v3083, %v3053
        %v3085 = vadd.f32 %v3084, %v3054
        %v3086 = vadd.f32 %v3085, %v3055
        %v3087 = vadd.f32 %v3086, %v3056
        %v3088 = vadd.f32 %v3087, %v3057
        %v3089 = vadd.f32 %v3088, %v3058
        %v3090 = vadd.f32 %v3089, %v3059
        %v3091 = vrot.slane %v3090, 4
        %v3092 = vadd.f32 %v3090, %v3091
        %v3093 = vrot.slane %v3092, 2
        %v3094 = vadd.f32 %v3092, %v3093
        %v3095 = vrot.slane %v3094, 1
        %v3096 = vadd.f32 %v3094, %v3095
        %v3097 = vld [vmem:[#allocation8] sm:$0xff]
        %v3098 = vld [vmem:[#allocation8 + $0x8] sm:$0xff]
        %v3099 = vld [vmem:[#allocation8 + $0x10] sm:$0xff]
        %v3100 = vld [vmem:[#allocation8 + $0x18] sm:$0xff]
        %v3101 = vld [vmem:[#allocation8 + $0x20] sm:$0xff]
        %v3102 = vld [vmem:[#allocation8 + $0x28] sm:$0xff]
        %v3103 = vld [vmem:[#allocation8 + $0x30] sm:$0xff]
        %v3104 = vld [vmem:[#allocation8 + $0x38] sm:$0xff]
        %v3105 = vld [vmem:[#allocation8 + $0x40] sm:$0xff]
        %v3106 = vld [vmem:[#allocation8 + $0x48] sm:$0xff]
        %v3107 = vld [vmem:[#allocation8 + $0x50] sm:$0xff]
        %v3108 = vld [vmem:[#allocation8 + $0x58] sm:$0xff]
        %v3109 = vld [vmem:[#allocation8 + $0x60] sm:$0xff]
        %v3110 = vld [vmem:[#allocation8 + $0x68] sm:$0xff]
        %v3111 = vld [vmem:[#allocation8 + $0x70] sm:$0xff]
        %v3112 = vld [vmem:[#allocation8 + $0x78] sm:$0xff]
        %3113 = vmatprep.subr.mxu0 0.0
        %3114 = vmatpush1.msra.mxu0 %v3097
        %3115 = vmatprep.subr.mxu0 0.0
        %3116 = vmatpush1.msra.mxu0 %v3098
        %3117 = vmatprep.subr.mxu0 0.0
        %3118 = vmatpush1.msra.mxu0 %v3099
        %3119 = vmatprep.subr.mxu0 0.0
        %3120 = vmatpush1.msra.mxu0 %v3100
        %3121 = vmatprep.subr.mxu0 0.0
        %3122 = vmatpush1.msra.mxu0 %v3101
        %3123 = vmatprep.subr.mxu0 0.0
        %3124 = vmatpush1.msra.mxu0 %v3102
        %3125 = vmatprep.subr.mxu0 0.0
        %3126 = vmatpush1.msra.mxu0 %v3103
        %3127 = vmatprep.subr.mxu0 0.0
        %3128 = vmatpush1.msra.mxu0 %v3104
        %3129 = vmatprep.subr.mxu0 0.0
        %3130 = vmatpush1.msra.mxu0 %v3105
        %3131 = vmatprep.subr.mxu0 0.0
        %3132 = vmatpush1.msra.mxu0 %v3106
        %3133 = vmatprep.subr.mxu0 0.0
        %3134 = vmatpush1.msra.mxu0 %v3107
        %3135 = vmatprep.subr.mxu0 0.0
        %3136 = vmatpush1.msra.mxu0 %v3108
        %3137 = vmatprep.subr.mxu0 0.0
        %3138 = vmatpush1.msra.mxu0 %v3109
        %3139 = vmatprep.subr.mxu0 0.0
        %3140 = vmatpush1.msra.mxu0 %v3110
        %3141 = vmatprep.subr.mxu0 0.0
        %3142 = vmatpush1.msra.mxu0 %v3111
        %3143 = vmatprep.subr.mxu0 0.0
        %3144 = vmatpush1.msra.mxu0 %v3112
        %3145 = vmatprep.subr.mxu0 0.0
        %3146 = vmatpush1.msra.mxu0 0.0
        %3147 = vmatprep.subr.mxu0 0.0
        %3148 = vmatpush1.msra.mxu0 0.0
        %3149 = vmatprep.subr.mxu0 0.0
        %3150 = vmatpush1.msra.mxu0 0.0
        %3151 = vmatprep.subr.mxu0 0.0
        %3152 = vmatpush1.msra.mxu0 0.0
        %3153 = vmatprep.subr.mxu0 0.0
        %3154 = vmatpush1.msra.mxu0 0.0
        %3155 = vmatprep.subr.mxu0 0.0
        %3156 = vmatpush1.msra.mxu0 0.0
        %3157 = vmatprep.subr.mxu0 0.0
        %3158 = vmatpush1.msra.mxu0 0.0
        %3159 = vmatprep.subr.mxu0 0.0
        %3160 = vmatpush1.msra.mxu0 0.0
        %3161 = vmatprep.subr.mxu0 0.0
        %3162 = vmatpush1.msra.mxu0 0.0
        %3163 = vmatprep.subr.mxu0 0.0
        %3164 = vmatpush1.msra.mxu0 0.0
        %3165 = vmatprep.subr.mxu0 0.0
        %3166 = vmatpush1.msra.mxu0 0.0
        %3167 = vmatprep.subr.mxu0 0.0
        %3168 = vmatpush1.msra.mxu0 0.0
        %3169 = vmatprep.subr.mxu0 0.0
        %3170 = vmatpush1.msra.mxu0 0.0
        %3171 = vmatprep.subr.mxu0 0.0
        %3172 = vmatpush1.msra.mxu0 0.0
        %3173 = vmatprep.subr.mxu0 0.0
        %3174 = vmatpush1.msra.mxu0 0.0
        %3175 = vmatprep.subr.mxu0 0.0
        %3176 = vmatpush1.msra.mxu0 0.0
        %3177 = vmatprep.mubr.f32.mxu0 0.0
        %3178 = vmatmul.mubr.f32.gmra.mrb[0].mxu0 %v3096
        %v3179 = vpop.f32.mrb[0].mxu0
        %v3180 = vadd.f32 0.0, %v3179
        %v3181 = vpop.f32.mrb[0].mxu0
        %3182 = vdwg.mxu0
        %v3183 = vrcp.pop 1024.0
        %v3184 = vmul.f32 %v3180, %v3183
        %v3185 = vlaneseq
        %v3186 = vshrl.u32 %v3185, 7
        %v3187 = vsub.s32 0, %v3186
        %v3188 = vrot.slane %v3184, %v3187
        %v3189 = vsub.f32 %v3028, %v3188
        %v3190 = vsub.f32 %v3029, %v3188
        %v3191 = vsub.f32 %v3030, %v3188
        %v3192 = vsub.f32 %v3031, %v3188
        %v3193 = vsub.f32 %v3032, %v3188
        %v3194 = vsub.f32 %v3033, %v3188
        %v3195 = vsub.f32 %v3034, %v3188
        %v3196 = vsub.f32 %v3035, %v3188
        %v3197 = vsub.f32 %v3036, %v3188
        %v3198 = vsub.f32 %v3037, %v3188
        %v3199 = vsub.f32 %v3038, %v3188
        %v3200 = vsub.f32 %v3039, %v3188
        %v3201 = vsub.f32 %v3040, %v3188
        %v3202 = vsub.f32 %v3041, %v3188
        %v3203 = vsub.f32 %v3042, %v3188
        %v3204 = vsub.f32 %v3043, %v3188
        %v3205 = vsub.f32 %v3044, %v3188
        %v3206 = vsub.f32 %v3045, %v3188
        %v3207 = vsub.f32 %v3046, %v3188
        %v3208 = vsub.f32 %v3047, %v3188
        %v3209 = vsub.f32 %v3048, %v3188
        %v3210 = vsub.f32 %v3049, %v3188
        %v3211 = vsub.f32 %v3050, %v3188
        %v3212 = vsub.f32 %v3051, %v3188
        %v3213 = vsub.f32 %v3052, %v3188
        %v3214 = vsub.f32 %v3053, %v3188
        %v3215 = vsub.f32 %v3054, %v3188
        %v3216 = vsub.f32 %v3055, %v3188
        %v3217 = vsub.f32 %v3056, %v3188
        %v3218 = vsub.f32 %v3057, %v3188
        %v3219 = vsub.f32 %v3058, %v3188
        %v3220 = vsub.f32 %v3059, %v3188
        %v3221 = vmul.f32 %v3189, %v3189
        %v3222 = vmul.f32 %v3190, %v3190
        %v3223 = vmul.f32 %v3191, %v3191
        %v3224 = vmul.f32 %v3192, %v3192
        %v3225 = vmul.f32 %v3193, %v3193
        %v3226 = vmul.f32 %v3194, %v3194
        %v3227 = vmul.f32 %v3195, %v3195
        %v3228 = vmul.f32 %v3196, %v3196
        %v3229 = vmul.f32 %v3197, %v3197
        %v3230 = vmul.f32 %v3198, %v3198
        %v3231 = vmul.f32 %v3199, %v3199
        %v3232 = vmul.f32 %v3200, %v3200
        %v3233 = vmul.f32 %v3201, %v3201
        %v3234 = vmul.f32 %v3202, %v3202
        %v3235 = vmul.f32 %v3203, %v3203
        %v3236 = vmul.f32 %v3204, %v3204
        %v3237 = vmul.f32 %v3205, %v3205
        %v3238 = vmul.f32 %v3206, %v3206
        %v3239 = vmul.f32 %v3207, %v3207
        %v3240 = vmul.f32 %v3208, %v3208
        %v3241 = vmul.f32 %v3209, %v3209
        %v3242 = vmul.f32 %v3210, %v3210
        %v3243 = vmul.f32 %v3211, %v3211
        %v3244 = vmul.f32 %v3212, %v3212
        %v3245 = vmul.f32 %v3213, %v3213
        %v3246 = vmul.f32 %v3214, %v3214
        %v3247 = vmul.f32 %v3215, %v3215
        %v3248 = vmul.f32 %v3216, %v3216
        %v3249 = vmul.f32 %v3217, %v3217
        %v3250 = vmul.f32 %v3218, %v3218
        %v3251 = vmul.f32 %v3219, %v3219
        %v3252 = vmul.f32 %v3220, %v3220
        %v3253 = vadd.f32 %v3221, %v3222
        %v3254 = vadd.f32 %v3253, %v3223
        %v3255 = vadd.f32 %v3254, %v3224
        %v3256 = vadd.f32 %v3255, %v3225
        %v3257 = vadd.f32 %v3256, %v3226
        %v3258 = vadd.f32 %v3257, %v3227
        %v3259 = vadd.f32 %v3258, %v3228
        %v3260 = vadd.f32 %v3259, %v3229
        %v3261 = vadd.f32 %v3260, %v3230
        %v3262 = vadd.f32 %v3261, %v3231
        %v3263 = vadd.f32 %v3262, %v3232
        %v3264 = vadd.f32 %v3263, %v3233
        %v3265 = vadd.f32 %v3264, %v3234
        %v3266 = vadd.f32 %v3265, %v3235
        %v3267 = vadd.f32 %v3266, %v3236
        %v3268 = vadd.f32 %v3267, %v3237
        %v3269 = vadd.f32 %v3268, %v3238
        %v3270 = vadd.f32 %v3269, %v3239
        %v3271 = vadd.f32 %v3270, %v3240
        %v3272 = vadd.f32 %v3271, %v3241
        %v3273 = vadd.f32 %v3272, %v3242
        %v3274 = vadd.f32 %v3273, %v3243
        %v3275 = vadd.f32 %v3274, %v3244
        %v3276 = vadd.f32 %v3275, %v3245
        %v3277 = vadd.f32 %v3276, %v3246
        %v3278 = vadd.f32 %v3277, %v3247
        %v3279 = vadd.f32 %v3278, %v3248
        %v3280 = vadd.f32 %v3279, %v3249
        %v3281 = vadd.f32 %v3280, %v3250
        %v3282 = vadd.f32 %v3281, %v3251
        %v3283 = vadd.f32 %v3282, %v3252
        %v3284 = vrot.slane %v3283, 4
        %v3285 = vadd.f32 %v3283, %v3284
        %v3286 = vrot.slane %v3285, 2
        %v3287 = vadd.f32 %v3285, %v3286
        %v3288 = vrot.slane %v3287, 1
        %v3289 = vadd.f32 %v3287, %v3288
        %3290 = vmatprep.subr.mxu0 0.0
        %3291 = vmatpush1.msra.mxu0 %v3097
        %3292 = vmatprep.subr.mxu0 0.0
        %3293 = vmatpush1.msra.mxu0 %v3098
        %3294 = vmatprep.subr.mxu0 0.0
        %3295 = vmatpush1.msra.mxu0 %v3099
        %3296 = vmatprep.subr.mxu0 0.0
        %3297 = vmatpush1.msra.mxu0 %v3100
        %3298 = vmatprep.subr.mxu0 0.0
        %3299 = vmatpush1.msra.mxu0 %v3101
        %3300 = vmatprep.subr.mxu0 0.0
        %3301 = vmatpush1.msra.mxu0 %v3102
        %3302 = vmatprep.subr.mxu0 0.0
        %3303 = vmatpush1.msra.mxu0 %v3103
        %3304 = vmatprep.subr.mxu0 0.0
        %3305 = vmatpush1.msra.mxu0 %v3104
        %3306 = vmatprep.subr.mxu0 0.0
        %3307 = vmatpush1.msra.mxu0 %v3105
        %3308 = vmatprep.subr.mxu0 0.0
        %3309 = vmatpush1.msra.mxu0 %v3106
        %3310 = vmatprep.subr.mxu0 0.0
        %3311 = vmatpush1.msra.mxu0 %v3107
        %3312 = vmatprep.subr.mxu0 0.0
        %3313 = vmatpush1.msra.mxu0 %v3108
        %3314 = vmatprep.subr.mxu0 0.0
        %3315 = vmatpush1.msra.mxu0 %v3109
        %3316 = vmatprep.subr.mxu0 0.0
        %3317 = vmatpush1.msra.mxu0 %v3110
        %3318 = vmatprep.subr.mxu0 0.0
        %3319 = vmatpush1.msra.mxu0 %v3111
        %3320 = vmatprep.subr.mxu0 0.0
        %3321 = vmatpush1.msra.mxu0 %v3112
        %3322 = vmatprep.subr.mxu0 0.0
        %3323 = vmatpush1.msra.mxu0 0.0
        %3324 = vmatprep.subr.mxu0 0.0
        %3325 = vmatpush1.msra.mxu0 0.0
        %3326 = vmatprep.subr.mxu0 0.0
        %3327 = vmatpush1.msra.mxu0 0.0
        %3328 = vmatprep.subr.mxu0 0.0
        %3329 = vmatpush1.msra.mxu0 0.0
        %3330 = vmatprep.subr.mxu0 0.0
        %3331 = vmatpush1.msra.mxu0 0.0
        %3332 = vmatprep.subr.mxu0 0.0
        %3333 = vmatpush1.msra.mxu0 0.0
        %3334 = vmatprep.subr.mxu0 0.0
        %3335 = vmatpush1.msra.mxu0 0.0
        %3336 = vmatprep.subr.mxu0 0.0
        %3337 = vmatpush1.msra.mxu0 0.0
        %3338 = vmatprep.subr.mxu0 0.0
        %3339 = vmatpush1.msra.mxu0 0.0
        %3340 = vmatprep.subr.mxu0 0.0
        %3341 = vmatpush1.msra.mxu0 0.0
        %3342 = vmatprep.subr.mxu0 0.0
        %3343 = vmatpush1.msra.mxu0 0.0
        %3344 = vmatprep.subr.mxu0 0.0
        %3345 = vmatpush1.msra.mxu0 0.0
        %3346 = vmatprep.subr.mxu0 0.0
        %3347 = vmatpush1.msra.mxu0 0.0
        %3348 = vmatprep.subr.mxu0 0.0
        %3349 = vmatpush1.msra.mxu0 0.0
        %3350 = vmatprep.subr.mxu0 0.0
        %3351 = vmatpush1.msra.mxu0 0.0
        %3352 = vmatprep.subr.mxu0 0.0
        %3353 = vmatpush1.msra.mxu0 0.0
        %3354 = vmatprep.mubr.f32.mxu0 0.0
        %3355 = vmatmul.mubr.f32.gmra.mrb[0].mxu0 %v3289
        %v3356 = vpop.f32.mrb[0].mxu0
        %v3357 = vadd.f32 0.0, %v3356
        %v3358 = vpop.f32.mrb[0].mxu0
        %3359 = vdwg.mxu0
        %v3360 = vmul.f32 %v3357, %v3183
        %v3361 = vadd.f32 %v3360, 1e-05
        %v3362 = vrsqrt.pop %v3361
        %v3363 = vlaneseq
        %v3364 = vshrl.u32 %v3363, 7
        %v3365 = vsub.s32 0, %v3364
        %v3366 = vrot.slane %v3362, %v3365
        %v3367 = vmul.f32 %v3189, %v3366
        %v3368 = vmul.f32 %v3190, %v3366
        %v3369 = vmul.f32 %v3191, %v3366
        %v3370 = vmul.f32 %v3192, %v3366
        %v3371 = vmul.f32 %v3193, %v3366
        %v3372 = vmul.f32 %v3194, %v3366
        %v3373 = vmul.f32 %v3195, %v3366
        %v3374 = vmul.f32 %v3196, %v3366
        %v3375 = vmul.f32 %v3197, %v3366
        %v3376 = vmul.f32 %v3198, %v3366
        %v3377 = vmul.f32 %v3199, %v3366
        %v3378 = vmul.f32 %v3200, %v3366
        %v3379 = vmul.f32 %v3201, %v3366
        %v3380 = vmul.f32 %v3202, %v3366
        %v3381 = vmul.f32 %v3203, %v3366
        %v3382 = vmul.f32 %v3204, %v3366
        %v3383 = vmul.f32 %v3205, %v3366
        %v3384 = vmul.f32 %v3206, %v3366
        %v3385 = vmul.f32 %v3207, %v3366
        %v3386 = vmul.f32 %v3208, %v3366
        %v3387 = vmul.f32 %v3209, %v3366
        %v3388 = vmul.f32 %v3210, %v3366
        %v3389 = vmul.f32 %v3211, %v3366
        %v3390 = vmul.f32 %v3212, %v3366
        %v3391 = vmul.f32 %v3213, %v3366
        %v3392 = vmul.f32 %v3214, %v3366
        %v3393 = vmul.f32 %v3215, %v3366
        %v3394 = vmul.f32 %v3216, %v3366
        %v3395 = vmul.f32 %v3217, %v3366
        %v3396 = vmul.f32 %v3218, %v3366
        %v3397 = vmul.f32 %v3219, %v3366
        %v3398 = vmul.f32 %v3220, %v3366
        %v3399 = vld [vmem:[%s3] sm:$0x1]
        %v3401 = vlaneseq
        %v3402 = vshrl.u32 %v3401, 7
        %v3403 = vsub.s32 0, %v3402
        %v3404 = vrot.slane %v3399, %v3403
        %v3406 = vmul.f32 %v3367, %v3404
        %v3407 = vmul.f32 %v3368, %v3404
        %v3408 = vmul.f32 %v3369, %v3404
        %v3409 = vmul.f32 %v3370, %v3404
        %v3410 = vmul.f32 %v3371, %v3404
        %v3411 = vmul.f32 %v3372, %v3404
        %v3412 = vmul.f32 %v3373, %v3404
        %v3413 = vmul.f32 %v3374, %v3404
        %v3414 = vmul.f32 %v3375, %v3404
        %v3415 = vmul.f32 %v3376, %v3404
        %v3416 = vmul.f32 %v3377, %v3404
        %v3417 = vmul.f32 %v3378, %v3404
        %v3418 = vmul.f32 %v3379, %v3404
        %v3419 = vmul.f32 %v3380, %v3404
        %v3420 = vmul.f32 %v3381, %v3404
        %v3421 = vmul.f32 %v3382, %v3404
        %v3422 = vmul.f32 %v3383, %v3404
        %v3423 = vmul.f32 %v3384, %v3404
        %v3424 = vmul.f32 %v3385, %v3404
        %v3425 = vmul.f32 %v3386, %v3404
        %v3426 = vmul.f32 %v3387, %v3404
        %v3427 = vmul.f32 %v3388, %v3404
        %v3428 = vmul.f32 %v3389, %v3404
        %v3429 = vmul.f32 %v3390, %v3404
        %v3430 = vmul.f32 %v3391, %v3404
        %v3431 = vmul.f32 %v3392, %v3404
        %v3432 = vmul.f32 %v3393, %v3404
        %v3433 = vmul.f32 %v3394, %v3404
        %v3434 = vmul.f32 %v3395, %v3404
        %v3435 = vmul.f32 %v3396, %v3404
        %v3436 = vmul.f32 %v3397, %v3404
        %v3437 = vmul.f32 %v3398, %v3404
        %v3438 = vld [vmem:[%s4] sm:$0x1]
        %v3440 = vlaneseq
        %v3441 = vshrl.u32 %v3440, 7
        %v3442 = vsub.s32 0, %v3441
        %v3443 = vrot.slane %v3438, %v3442
        %v3445 = vadd.f32 %v3406, %v3443
        %v3446 = vadd.f32 %v3407, %v3443
        %v3447 = vadd.f32 %v3408, %v3443
        %v3448 = vadd.f32 %v3409, %v3443
        %v3449 = vadd.f32 %v3410, %v3443
        %v3450 = vadd.f32 %v3411, %v3443
        %v3451 = vadd.f32 %v3412, %v3443
        %v3452 = vadd.f32 %v3413, %v3443
        %v3453 = vadd.f32 %v3414, %v3443
        %v3454 = vadd.f32 %v3415, %v3443
        %v3455 = vadd.f32 %v3416, %v3443
        %v3456 = vadd.f32 %v3417, %v3443
        %v3457 = vadd.f32 %v3418, %v3443
        %v3458 = vadd.f32 %v3419, %v3443
        %v3459 = vadd.f32 %v3420, %v3443
        %v3460 = vadd.f32 %v3421, %v3443
        %v3461 = vadd.f32 %v3422, %v3443
        %v3462 = vadd.f32 %v3423, %v3443
        %v3463 = vadd.f32 %v3424, %v3443
        %v3464 = vadd.f32 %v3425, %v3443
        %v3465 = vadd.f32 %v3426, %v3443
        %v3466 = vadd.f32 %v3427, %v3443
        %v3467 = vadd.f32 %v3428, %v3443
        %v3468 = vadd.f32 %v3429, %v3443
        %v3469 = vadd.f32 %v3430, %v3443
        %v3470 = vadd.f32 %v3431, %v3443
        %v3471 = vadd.f32 %v3432, %v3443
        %v3472 = vadd.f32 %v3433, %v3443
        %v3473 = vadd.f32 %v3434, %v3443
        %v3474 = vadd.f32 %v3435, %v3443
        %v3475 = vadd.f32 %v3436, %v3443
        %v3476 = vadd.f32 %v3437, %v3443
        %v3477 = vmax.f32 %v3445, 0.0
        %v3478 = vmax.f32 %v3446, 0.0
        %v3479 = vmax.f32 %v3447, 0.0
        %v3480 = vmax.f32 %v3448, 0.0
        %v3481 = vmax.f32 %v3449, 0.0
        %v3482 = vmax.f32 %v3450, 0.0
        %v3483 = vmax.f32 %v3451, 0.0
        %v3484 = vmax.f32 %v3452, 0.0
        %v3485 = vmax.f32 %v3453, 0.0
        %v3486 = vmax.f32 %v3454, 0.0
        %v3487 = vmax.f32 %v3455, 0.0
        %v3488 = vmax.f32 %v3456, 0.0
        %v3489 = vmax.f32 %v3457, 0.0
        %v3490 = vmax.f32 %v3458, 0.0
        %v3491 = vmax.f32 %v3459, 0.0
        %v3492 = vmax.f32 %v3460, 0.0
        %v3493 = vmax.f32 %v3461, 0.0
        %v3494 = vmax.f32 %v3462, 0.0
        %v3495 = vmax.f32 %v3463, 0.0
        %v3496 = vmax.f32 %v3464, 0.0
        %v3497 = vmax.f32 %v3465, 0.0
        %v3498 = vmax.f32 %v3466, 0.0
        %v3499 = vmax.f32 %v3467, 0.0
        %v3500 = vmax.f32 %v3468, 0.0
        %v3501 = vmax.f32 %v3469, 0.0
        %v3502 = vmax.f32 %v3470, 0.0
        %v3503 = vmax.f32 %v3471, 0.0
        %v3504 = vmax.f32 %v3472, 0.0
        %v3505 = vmax.f32 %v3473, 0.0
        %v3506 = vmax.f32 %v3474, 0.0
        %v3507 = vmax.f32 %v3475, 0.0
        %v3508 = vmax.f32 %v3476, 0.0
        %3509 = vst [vmem:[%s271] sm:$0xff] %v3477
        %3510 = vst [vmem:[%s271 + $0x8] sm:$0xff] %v3478
        %3511 = vst [vmem:[%s271 + $0x10] sm:$0xff] %v3479
        %3512 = vst [vmem:[%s271 + $0x18] sm:$0xff] %v3480
        %3513 = vst [vmem:[%s271 + $0x20] sm:$0xff] %v3481
        %3514 = vst [vmem:[%s271 + $0x28] sm:$0xff] %v3482
        %3515 = vst [vmem:[%s271 + $0x30] sm:$0xff] %v3483
        %3516 = vst [vmem:[%s271 + $0x38] sm:$0xff] %v3484
        %3517 = vst [vmem:[%s271 + $0x40] sm:$0xff] %v3485
        %3518 = vst [vmem:[%s271 + $0x48] sm:$0xff] %v3486
        %3519 = vst [vmem:[%s271 + $0x50] sm:$0xff] %v3487
        %3520 = vst [vmem:[%s271 + $0x58] sm:$0xff] %v3488
        %3521 = vst [vmem:[%s271 + $0x60] sm:$0xff] %v3489
        %3522 = vst [vmem:[%s271 + $0x68] sm:$0xff] %v3490
        %3523 = vst [vmem:[%s271 + $0x70] sm:$0xff] %v3491
        %3524 = vst [vmem:[%s271 + $0x78] sm:$0xff] %v3492
        %3525 = vst [vmem:[%s271 + $0x80] sm:$0xff] %v3493
        %3526 = vst [vmem:[%s271 + $0x88] sm:$0xff] %v3494
        %3527 = vst [vmem:[%s271 + $0x90] sm:$0xff] %v3495
        %3528 = vst [vmem:[%s271 + $0x98] sm:$0xff] %v3496
        %3529 = vst [vmem:[%s271 + $0xa0] sm:$0xff] %v3497
        %3530 = vst [vmem:[%s271 + $0xa8] sm:$0xff] %v3498
        %3531 = vst [vmem:[%s271 + $0xb0] sm:$0xff] %v3499
        %3532 = vst [vmem:[%s271 + $0xb8] sm:$0xff] %v3500
        %3533 = vst [vmem:[%s271 + $0xc0] sm:$0xff] %v3501
        %3534 = vst [vmem:[%s271 + $0xc8] sm:$0xff] %v3502
        %3535 = vst [vmem:[%s271 + $0xd0] sm:$0xff] %v3503
        %3536 = vst [vmem:[%s271 + $0xd8] sm:$0xff] %v3504
        %3537 = vst [vmem:[%s271 + $0xe0] sm:$0xff] %v3505
        %3538 = vst [vmem:[%s271 + $0xe8] sm:$0xff] %v3506
        %3539 = vst [vmem:[%s271 + $0xf0] sm:$0xff] %v3507
        %3540 = vst [vmem:[%s271 + $0xf8] sm:$0xff] %v3508
        %s3541 = sand.u32 %s141, 1
        %s3542 = scalar_lea.sflag [#allocation5], %s3541
        %s3543 = sand.u32 %s141, 1
        %s3544 = smul.addr %s3543, 256
        %s3545 = scalar_lea.vmem [#allocation9], %s3544
        // Predicated region
        $region53: #{tpu_custom_call.1} parent=39 // pred_check
          %p3546 = pneg %p151
        $region54: #{tpu_custom_call.1} parent=39 // pred_check_branch
          %3548 = sbr.rel (%p3546) target = $region56
        $region55: #{tpu_custom_call.1} parent=39 // pred_region
          %s3550 = ssub.s32 4096, 4096
          %3551 = vsyncadd %s3542, %s3550
          %s3552 = smul.addr %s23, 32
          %s3553 = smul.addr %s3552, 128
          %s3554 = scalar_lea.hbm %s5, %s3553
          %s3555 = sshll.u32 %s3545, 4
          %s3556 = int_to_ptr.vmem [resolvable:$true] %s3555
          %3561 = dma.vmem_to_hbm [thread:$0]  %s3556, 4096, %s3554, %s3542, 128, 128, 8
        $region56: #{tpu_custom_call.1} parent=39 // pred_fallthru
          _
      $region40: #{tpu_custom_call.1} parent=5 // pred_fallthru
        _
      %p3562 = scmp.le.s32.totalorder 2, %s18
      // Predicated region
      $region57: #{tpu_custom_call.1} parent=5 // pred_check
        %p3563 = pneg %p3562
      $region58: #{tpu_custom_call.1} parent=5 // pred_check_branch
        %3565 = sbr.rel (%p3563) target = $region60
      $region59: #{tpu_custom_call.1} parent=5 // pred_region
        %s3566 = ssub.s32 %s18, 2
        // Predicated region
        $region61: #{tpu_custom_call.1} parent=59 // pred_check
          %p3567 = pneg %p157
        $region62: #{tpu_custom_call.1} parent=59 // pred_check_branch
          %3569 = sbr.rel (%p3567) target = $region64
        $region63: #{tpu_custom_call.1} parent=59 // pred_region
          %s3570 = sand.u32 %s142, 1
          %s3571 = scalar_lea.sflag [#allocation5], %s3570
          %s3572 = sand.u32 %s142, 1
          %s3573 = smul.addr %s3572, 256
          %s3574 = scalar_lea.vmem [#allocation9], %s3573
          %3575 = dma.done %s3571, 4096
        $region64: #{tpu_custom_call.1} parent=59 // pred_fallthru
          _
      $region60: #{tpu_custom_call.1} parent=5 // pred_fallthru
        _
    $region6: #{tpu_custom_call.1} parent=1 // loop_footer
      %s22 = sadd.s32 1, %s18
    $region7: #{tpu_custom_call.1} parent=1 // loop_footer_branch
      %17 = sbr.rel target = $region3
    $region8: #{tpu_custom_call.1} parent=1 // loop_exit
      _
    %3576 = vsyncpa [#allocation4], 1
    %s3577 = scalar_lea.sflag [#allocation4], 1
    %3578 = vsyncpa %s3577, 1
    %3579 = vsyncpa [#allocation7], 1
    %3580 = vsyncpa [#allocation5], 1
    %s3581 = scalar_lea.sflag [#allocation5], 1
    %3582 = vsyncpa %s3581, 1

</llo_original>
